<compile_context>
chip_gen: v5e
topology: v5e:2x2
jax: 0.10.0
libtpu: 0.0.40
codegen_flags: <defaults>
</compile_context>

<pallas_src>
import functools
import math

import jax
import jax.numpy as jnp
from jax import lax
from jax.experimental import pallas as pl
from jax.experimental.pallas import tpu as pltpu

_MIB = 1024 * 1024


@functools.lru_cache(maxsize=None)
def _vmem_limit_bytes():
    # 32 MiB is safe on every generation (v5e scoped default is 16 MiB, v7x has
    # 64 MiB physical); on 128-MiB parts (v5e/v6e) allow 64 MiB so the big
    # vocab-projection tiles keep double-buffering.
    try:
        cap = int(pltpu.get_tpu_info().vmem_capacity_bytes)
        return int(max(32 * _MIB, min(cap // 2, 64 * _MIB)))
    except Exception:
        return 32 * _MIB


def _tile(dim, cap):
    """Largest power-of-two-ish tile <= cap that evenly divides dim.

    Dims reaching here are either small (taken whole) or padded to multiples of
    128 at param-prep time, so this never degrades to sub-(8,128) tiles.
    """
    if dim <= cap:
        return dim
    t = 1 << (int(cap).bit_length() - 1)  # round cap down to a power of two
    while dim % t:
        t //= 2
    return max(t, 1)


# ----------------------------- matmul kernels -----------------------------

def _mm_bias_kernel(x_ref, w_ref, b_ref, o_ref, acc_ref, *, activation, grouped):
    # Tiled matmul: bf16 MXU operands, f32 VMEM accumulator, f32 epilogue.
    @pl.when(pl.program_id(2) == 0)
    def _():
        acc_ref[...] = jnp.zeros_like(acc_ref)

    acc_ref[...] += jnp.dot(x_ref[...].astype(jnp.bfloat16),
                            w_ref[...].astype(jnp.bfloat16),
                            preferred_element_type=jnp.float32)

    @pl.when(pl.program_id(2) == pl.num_programs(2) - 1)
    def _():
        y = acc_ref[...] + b_ref[...]
        if activation == "relu":
            y = jnp.maximum(y, 0.0)
        y = y.astype(o_ref.dtype)
        if grouped:
            o_ref[0] = y
        else:
            o_ref[...] = y


def linear(x2d, wt, b, activation=None, *, tm_cap=512, tn_cap=512, tk_cap=1024):
    """y = x @ wt + b (wt pre-transposed to (in, out), stored bf16); fused relu."""
    M, K = x2d.shape
    Kw, N = wt.shape
    assert K == Kw
    tm, tn, tk = _tile(M, tm_cap), _tile(N, tn_cap), _tile(K, tk_cap)
    grid = (M // tm, N // tn, K // tk)
    kern = functools.partial(_mm_bias_kernel, activation=activation, grouped=False)
    wb = wt.dtype.itemsize
    return pl.pallas_call(
        kern,
        out_shape=jax.ShapeDtypeStruct((M, N), jnp.float32),
        grid=grid,
        in_specs=[pl.BlockSpec((tm, tk), lambda i, j, k: (i, k)),
                  pl.BlockSpec((tk, tn), lambda i, j, k: (k, j)),
                  pl.BlockSpec((1, tn), lambda i, j, k: (0, j))],
        out_specs=pl.BlockSpec((tm, tn), lambda i, j, k: (i, j)),
        scratch_shapes=[pltpu.VMEM((tm, tn), jnp.float32)],
        compiler_params=pltpu.CompilerParams(
            dimension_semantics=("parallel", "parallel", "arbitrary"),
            vmem_limit_bytes=_vmem_limit_bytes()),
        cost_estimate=pl.CostEstimate(
            flops=2 * M * N * K, transcendentals=0,
            bytes_accessed=(4 * M * K * (N // tn) + wb * K * N * (M // tm)
                            + 4 * M * N + 4 * N)),
    )(x2d, wt, b.reshape(1, N))


def linear_grouped(x2d, wt, b, groups, *, activation=None,
                   tm_cap=512, tn_cap=512, tk_cap=1024):
    """Fused QKV / KV projection.

    wt packs `groups` output slabs of width d_out = N // groups; the result is
    (groups, M, d_out) written directly by the out BlockSpec, so q/k/v become
    separate slabs with no XLA column-slice / transpose round trips.
    """
    M, K = x2d.shape
    N = wt.shape[1]
    d_out = N // groups
    if groups == 1:
        return linear(x2d, wt, b, activation=activation).reshape(1, M, d_out)
    if d_out % 128 != 0:
        # TODO(synk): packed out_spec needs lane-aligned d_out; tiny configs take
        # the XLA split path (one extra activation copy, negligible at this size).
        y = linear(x2d, wt, b, activation=activation)
        return y.reshape(M, groups, d_out).transpose(1, 0, 2)
    tm, tk = _tile(M, tm_cap), _tile(K, tk_cap)
    tn = _tile(d_out, tn_cap)
    n_per = d_out // tn
    grid = (M // tm, N // tn, K // tk)
    kern = functools.partial(_mm_bias_kernel, activation=activation, grouped=True)
    wb = wt.dtype.itemsize
    return pl.pallas_call(
        kern,
        out_shape=jax.ShapeDtypeStruct((groups, M, d_out), jnp.float32),
        grid=grid,
        in_specs=[pl.BlockSpec((tm, tk), lambda i, j, k: (i, k)),
                  pl.BlockSpec((tk, tn), lambda i, j, k: (k, j)),
                  pl.BlockSpec((1, tn), lambda i, j, k: (0, j))],
        out_specs=pl.BlockSpec((1, tm, tn),
                               lambda i, j, k: (j // n_per, i, j % n_per)),
        scratch_shapes=[pltpu.VMEM((tm, tn), jnp.float32)],
        compiler_params=pltpu.CompilerParams(
            dimension_semantics=("parallel", "parallel", "arbitrary"),
            vmem_limit_bytes=_vmem_limit_bytes()),
        cost_estimate=pl.CostEstimate(
            flops=2 * M * N * K, transcendentals=0,
            bytes_accessed=(4 * M * K * (N // tn) + wb * K * N * (M // tm)
                            + 4 * M * N + 4 * N)),
    )(x2d, wt, b.reshape(1, N))


def _mm_bias_res_ln_kernel(x_ref, w_ref, b_ref, r_ref, g_ref, bb_ref,
                           o_ref, acc_ref, *, eps):
    # Matmul + fused epilogue: +bias, +residual, LayerNorm(gamma, beta), f32.
    # N (= d_model) is untiled so the full row is available for the norm.
    @pl.when(pl.program_id(1) == 0)
    def _():
        acc_ref[...] = jnp.zeros_like(acc_ref)

    acc_ref[...] += jnp.dot(x_ref[...].astype(jnp.bfloat16),
                            w_ref[...].astype(jnp.bfloat16),
                            preferred_element_type=jnp.float32)

    @pl.when(pl.program_id(1) == pl.num_programs(1) - 1)
    def _():
        y = acc_ref[...] + b_ref[...] + r_ref[...]
        mean = jnp.mean(y, axis=-1, keepdims=True)
        var = jnp.mean((y - mean) ** 2, axis=-1, keepdims=True)
        yn = (y - mean) * lax.rsqrt(var + eps)
        o_ref[...] = (yn * g_ref[...] + bb_ref[...]).astype(o_ref.dtype)


def linear_residual_layernorm(x2d, wt, b, res2d, gamma, beta, *, eps=1e-5,
                              tm_cap=512, tk_cap=1024):
    """LayerNorm((x @ wt + b) + res) * gamma + beta, single fused kernel."""
    M, K = x2d.shape
    _, N = wt.shape
    # Cap block bytes (~4 MiB each) so the untiled-N pipeline still
    # double-buffers inside v7x's 64 MiB VMEM at large d_model.
    tm = _tile(M, min(tm_cap, max(8, (4 * _MIB) // (4 * N))))
    tk = _tile(K, min(tk_cap, max(128, (4 * _MIB) // (wt.dtype.itemsize * N))))
    grid = (M // tm, K // tk)
    kern = functools.partial(_mm_bias_res_ln_kernel, eps=eps)
    wb = wt.dtype.itemsize
    return pl.pallas_call(
        kern,
        out_shape=jax.ShapeDtypeStruct((M, N), jnp.float32),
        grid=grid,
        in_specs=[pl.BlockSpec((tm, tk), lambda i, k: (i, k)),
                  pl.BlockSpec((tk, N), lambda i, k: (k, 0)),
                  pl.BlockSpec((1, N), lambda i, k: (0, 0)),
                  pl.BlockSpec((tm, N), lambda i, k: (i, 0)),
                  pl.BlockSpec((1, N), lambda i, k: (0, 0)),
                  pl.BlockSpec((1, N), lambda i, k: (0, 0))],
        out_specs=pl.BlockSpec((tm, N), lambda i, k: (i, 0)),
        scratch_shapes=[pltpu.VMEM((tm, N), jnp.float32)],
        compiler_params=pltpu.CompilerParams(
            dimension_semantics=("parallel", "arbitrary"),
            vmem_limit_bytes=_vmem_limit_bytes()),
        cost_estimate=pl.CostEstimate(
            flops=2 * M * N * K + 10 * M * N, transcendentals=M,
            bytes_accessed=(4 * M * K + wb * K * N * (M // tm)
                            + 4 * 3 * M * N + 4 * 3 * N)),
    )(x2d, wt, b.reshape(1, N), res2d, gamma.reshape(1, N), beta.reshape(1, N))


# --------------------------- flash attention --------------------------------

def _flash_attn_kernel(q_ref, k_ref, v_ref, o_ref, m_ref, l_ref, acc_ref, *, nhead):
    # q_ref (1, tq, D), k_ref/v_ref (1, tk, D), o_ref (1, tq, D).
    # Online softmax per head; scratch m/l (H, tq, 1), acc (H, tq, Dh), all f32.
    kv_step = pl.program_id(2)

    @pl.when(kv_step == 0)
    def _():
        m_ref[...] = jnp.full(m_ref.shape, -jnp.inf, dtype=m_ref.dtype)
        l_ref[...] = jnp.zeros_like(l_ref)
        acc_ref[...] = jnp.zeros_like(acc_ref)

    D = q_ref.shape[-1]
    Dh = D // nhead
    q = q_ref[0]          # (tq, D) f32; 1/sqrt(Dh) pre-folded into W_q
    k = k_ref[0]          # (tk, D) f32
    v = v_ref[0]          # (tk, D) f32

    for h in range(nhead):                       # static head loop, lane slices
        sl = slice(h * Dh, (h + 1) * Dh)
        q_h = q[:, sl].astype(jnp.bfloat16)
        k_h = k[:, sl].astype(jnp.bfloat16)
        v_h = v[:, sl].astype(jnp.bfloat16)
        s = lax.dot_general(q_h, k_h, (((1,), (1,)), ((), ())),
                            preferred_element_type=jnp.float32)      # (tq, tk)
        m_prev = m_ref[h]
        m_new = jnp.maximum(m_prev, jnp.max(s, axis=-1, keepdims=True))
        alpha = jnp.exp(m_prev - m_new)
        p = jnp.exp(s - m_new)                                        # f32
        l_ref[h] = alpha * l_ref[h] + jnp.sum(p, axis=-1, keepdims=True)
        acc_ref[h] = alpha * acc_ref[h] + jnp.dot(
            p.astype(jnp.bfloat16), v_h, preferred_element_type=jnp.float32)
        m_ref[h] = m_new

    @pl.when(kv_step == pl.num_programs(2) - 1)
    def _():
        pieces = []
        for h in range(nhead):
            inv = pl.reciprocal(l_ref[h], approx=True)   # EUP slot
            pieces.append(acc_ref[h] * inv)
        # single lane-dense (tq, D) store
        o_ref[0] = jnp.concatenate(pieces, axis=-1).astype(o_ref.dtype)


def flash_attention(q_src, q_slab, k_src, k_slab, v_src, v_slab, *,
                    nhead, batch, tq_cap=256, tk_cap=512):
    """q/k/v sources are (n_slabs*B, S, D) arrays; *_slab picks the slab
    (0 for a plain (B, S, D) tensor; the g-th slab of a fused QKV/KV output).
    Heads live in the lane (D) axis and are looped in-kernel, so all I/O stays
    lane-dense and no head split/merge transposes touch HBM."""
    B = batch
    _, Sq, D = q_src.shape
    Sk = k_src.shape[1]
    Dh = D // nhead
    row_cap = max(8, (2 * _MIB) // (4 * D))       # each f32 (rows, D) block <= ~2 MiB
    tq = _tile(Sq, min(tq_cap, row_cap))
    tk = _tile(Sk, min(tk_cap, row_cap))
    grid = (B, Sq // tq, Sk // tk)
    kern = functools.partial(_flash_attn_kernel, nhead=nhead)

    def q_map(b, i, j):
        return (q_slab * B + b, i, 0)

    def k_map(b, i, j):
        return (k_slab * B + b, j, 0)

    def v_map(b, i, j):
        return (v_slab * B + b, j, 0)

    return pl.pallas_call(
        kern,
        out_shape=jax.ShapeDtypeStruct((B, Sq, D), jnp.float32),
        grid=grid,
        in_specs=[pl.BlockSpec((1, tq, D), q_map),
                  pl.BlockSpec((1, tk, D), k_map),
                  pl.BlockSpec((1, tk, D), v_map)],
        out_specs=pl.BlockSpec((1, tq, D), lambda b, i, j: (b, i, 0)),
        scratch_shapes=[pltpu.VMEM((nhead, tq, 1), jnp.float32),
                        pltpu.VMEM((nhead, tq, 1), jnp.float32),
                        pltpu.VMEM((nhead, tq, Dh), jnp.float32)],
        compiler_params=pltpu.CompilerParams(
            dimension_semantics=("parallel", "parallel", "arbitrary"),
            vmem_limit_bytes=_vmem_limit_bytes()),
        cost_estimate=pl.CostEstimate(
            flops=4 * B * Sq * Sk * D,
            transcendentals=B * nhead * Sq * Sk,
            bytes_accessed=4 * (B * Sq * D * (Sk // tk)
                                + 2 * B * Sk * D * (Sq // tq) + B * Sq * D)),
    )(q_src, k_src, v_src)


# --------------------------------- RoPE --------------------------------------

def _rope_kernel(x_ref, cos_ref, sin_ref, o_ref, *, use_roll):
    # out = x*cos + rotate_half(x)*sin; the rotate_half sign is folded into the
    # sin table, so the kernel only needs the half-rotation of x.
    x = x_ref[0]                              # (ts, D)
    d = x.shape[-1]
    half = d // 2
    if use_roll:
        rot = pltpu.roll(x, shift=half, axis=1)          # XLU (lane-aligned D)
    else:
        rot = jnp.concatenate([x[:, half:], x[:, :half]], axis=-1)
    o_ref[0] = x * cos_ref[...] + rot * sin_ref[...]


def rope(x, cos, sin_signed, *, ts_cap=256):
    B, S, D = x.shape
    ts = _tile(S, ts_cap)
    kern = functools.partial(_rope_kernel, use_roll=(D % 256 == 0))
    return pl.pallas_call(
        kern,
        out_shape=jax.ShapeDtypeStruct((B, S, D), jnp.float32),
        grid=(B, S // ts),
        in_specs=[pl.BlockSpec((1, ts, D), lambda b, s: (b, s, 0)),
                  pl.BlockSpec((ts, D), lambda b, s: (s, 0)),
                  pl.BlockSpec((ts, D), lambda b, s: (s, 0))],
        out_specs=pl.BlockSpec((1, ts, D), lambda b, s: (b, s, 0)),
        compiler_params=pltpu.CompilerParams(
            dimension_semantics=("parallel", "parallel"),
            vmem_limit_bytes=_vmem_limit_bytes()),
    )(x, cos, sin_signed)


# --------------------------- model (JAX glue) ---------------------------------

def decoder_layer(x, memory, p, nhead):
    # post-norm; dropout identity (eval-mode)
    B, S, D = x.shape
    Sk = memory.shape[1]
    x2d = x.reshape(B * S, D)

    # self-attention: fused QKV -> flash attention -> fused out_proj + res + LN
    qkv = linear_grouped(x2d, p["sa_qkv_wt"], p["sa_qkv_b"], 3)   # (3, B*S, D)
    qkv = qkv.reshape(3 * B, S, D)
    sa = flash_attention(qkv, 0, qkv, 1, qkv, 2, nhead=nhead, batch=B)
    x2d = linear_residual_layernorm(sa.reshape(B * S, D),
                                    p["sa_out_wt"], p["sa_out_b"],
                                    x2d, p["norm1_g"], p["norm1_b"])

    # cross-attention against memory (= rope(embed(ids)); transformer(x, x))
    q = linear(x2d, p["ca_q_wt"], p["ca_q_b"]).reshape(B, S, D)
    kv = linear_grouped(memory.reshape(B * Sk, D), p["ca_kv_wt"], p["ca_kv_b"], 2)
    kv = kv.reshape(2 * B, Sk, D)
    ca = flash_attention(q, 0, kv, 0, kv, 1, nhead=nhead, batch=B)
    x2d = linear_residual_layernorm(ca.reshape(B * S, D),
                                    p["ca_out_wt"], p["ca_out_b"],
                                    x2d, p["norm2_g"], p["norm2_b"])

    # FFN: lin1 fused bias+relu, lin2 fused bias+residual+LN
    h = linear(x2d, p["lin1_wt"], p["lin1_b"], activation="relu")
    x2d = linear_residual_layernorm(h, p["lin2_wt"], p["lin2_b"],
                                    x2d, p["norm3_g"], p["norm3_b"])
    return x2d.reshape(B, S, D)


def decoder_only_transformer(params, ids, *, nhead, vocab_size):
    B, S = ids.shape
    D = params["embedding"].shape[1]
    # embedding gather: wrapper glue (irregular gather; not the matmul hot path)
    x = jnp.take(params["embedding"], ids, axis=0)                    # (B, S, D)

    # rotary tables (tiny, trace-time constants); rotate_half sign folded into sin
    inv_freq = 1.0 / (10000.0 ** (jnp.arange(0, D, 2, dtype=jnp.float32) / D))
    t = jnp.arange(S, dtype=jnp.float32)
    freqs = jnp.einsum("i,j->ij", t, inv_freq)                        # (S, D/2)
    emb = jnp.concatenate([freqs, freqs], axis=-1)                    # (S, D)
    sign = jnp.where(jnp.arange(D) < D // 2, -1.0, 1.0)
    x = rope(x, jnp.cos(emb), jnp.sin(emb) * sign)

    memory = x                                                        # transformer(x, x)
    for lp in params["layers"]:
        x = decoder_layer(x, memory, lp, nhead)

    logits = linear(x.reshape(B * S, D), params["fc_out_wt"], params["fc_out_b"])
    return logits.reshape(B, S, -1)[..., :vocab_size]                 # drop vocab padding


def init_params(key, vocab, d_model, nhead, num_layers, ffn=2048):
    """Weights generated in PyTorch layout, then prepped ONCE:
       - transposed to (in, out) and cast to bf16 (MXU-native, halves weight DMA)
       - 1/sqrt(Dh) attention scale folded into the Q projection weight/bias
       - fc_out vocab dim padded to a multiple of 128 (lane-dense output tiles)
       Biases / LayerNorm params stay f32 (epilogues run in f32 on the VPU)."""
    kiter = iter(jax.random.split(key, 8 + 12 * num_layers))
    scale_q = 1.0 / math.sqrt(d_model // nhead)

    def w(shape, scale=0.02):
        return scale * jax.random.normal(next(kiter), shape, dtype=jnp.float32)

    def as_wt(torch_w):   # (out, in) -> (in, out) bf16
        return torch_w.T.astype(jnp.bfloat16)

    def self_attn_params():
        in_w = w((3 * d_model, d_model))       # PyTorch in_proj_weight (3D, D)
        in_b = w((3 * d_model,))
        qfold = jnp.concatenate([jnp.full((d_model,), scale_q, jnp.float32),
                                 jnp.ones((2 * d_model,), jnp.float32)])
        in_w = in_w * qfold[:, None]
        in_b = in_b * qfold
        out_w = w((d_model, d_model))
        out_b = w((d_model,))
        return {"sa_qkv_wt": as_wt(in_w), "sa_qkv_b": in_b,
                "sa_out_wt": as_wt(out_w), "sa_out_b": out_b}

    def cross_attn_params():
        in_w = w((3 * d_model, d_model))
        in_b = w((3 * d_model,))
        out_w = w((d_model, d_model))
        out_b = w((d_model,))
        return {"ca_q_wt": as_wt(in_w[:d_model] * scale_q),
                "ca_q_b": in_b[:d_model] * scale_q,
                "ca_kv_wt": as_wt(in_w[d_model:]), "ca_kv_b": in_b[d_model:],
                "ca_out_wt": as_wt(out_w), "ca_out_b": out_b}

    layers = []
    for _ in range(num_layers):
        lp = {}
        lp.update(self_attn_params())
        lp.update(cross_attn_params())
        lp.update({
            "lin1_wt": as_wt(w((ffn, d_model))), "lin1_b": w((ffn,)),
            "lin2_wt": as_wt(w((d_model, ffn))), "lin2_b": w((d_model,)),
            "norm1_g": jnp.ones((d_model,), jnp.float32),
            "norm1_b": jnp.zeros((d_model,), jnp.float32),
            "norm2_g": jnp.ones((d_model,), jnp.float32),
            "norm2_b": jnp.zeros((d_model,), jnp.float32),
            "norm3_g": jnp.ones((d_model,), jnp.float32),
            "norm3_b": jnp.zeros((d_model,), jnp.float32),
        })
        layers.append(lp)

    vocab_pad = ((vocab + 127) // 128) * 128
    fc_w = jnp.pad(w((vocab, d_model)), ((0, vocab_pad - vocab), (0, 0)))
    fc_b = jnp.pad(w((vocab,)), (0, vocab_pad - vocab))

    return {"embedding": w((vocab, d_model), scale=1.0),
            "layers": layers,
            "fc_out_wt": as_wt(fc_w), "fc_out_b": fc_b}


if __name__ == "__main__":
    vocab_size, d_model, nhead, num_layers, max_seq_len = 64, 32, 4, 2, 16
    B, S = 2, 8

    key = jax.random.PRNGKey(0)
    pkey, ikey = jax.random.split(key)
    params = init_params(pkey, vocab_size, d_model, nhead, num_layers)
    ids = jax.random.randint(ikey, (B, S), 0, vocab_size, dtype=jnp.int32)

    fwd = jax.jit(functools.partial(decoder_only_transformer,
                                    nhead=nhead, vocab_size=vocab_size))
    out = jax.block_until_ready(fwd(params, ids))

    assert out.shape == (B, S, vocab_size)
    assert bool(jnp.all(jnp.isfinite(out)))
    print("KERNEL_OK")
</pallas_src>

<mosaic_0001>
module attributes {stable_mosaic.version = 11 : i64} {
  func.func @_rope_kernel(%arg0: i32, %arg1: i32, %arg2: memref<1x8x32xf32, #tpu.memory_space<vmem>>, %arg3: memref<8x32xf32, #tpu.memory_space<vmem>>, %arg4: memref<8x32xf32, #tpu.memory_space<vmem>>, %arg5: memref<1x8x32xf32, #tpu.memory_space<vmem>>) attributes {dimension_semantics = [#tpu.dimension_semantics<parallel>, #tpu.dimension_semantics<parallel>], iteration_bounds = array<i64: 2, 1>, scalar_prefetch = 0 : i64, scratch_operands = 0 : i64, tpu.core_type = #tpu.core_type<tc>, window_params = [{transform_indices = @transform_0, window_bounds = array<i64: 1, 8, 32>}, {transform_indices = @transform_1, window_bounds = array<i64: 8, 32>}, {transform_indices = @transform_2, window_bounds = array<i64: 8, 32>}, {transform_indices = @transform_3, window_bounds = array<i64: 1, 8, 32>}]} {
    %c0 = arith.constant 0 : index
    %c0_0 = arith.constant 0 : index
    %c0_1 = arith.constant 0 : index
    %0 = vector.load %arg2[%c0, %c0_0, %c0_1] : memref<1x8x32xf32, #tpu.memory_space<vmem>>, vector<1x8x32xf32>
    %1 = vector.shape_cast %0 : vector<1x8x32xf32> to vector<8x32xf32>
    %2 = vector.extract_strided_slice %1 {offsets = [0, 16], sizes = [8, 16], strides = [1, 1]} : vector<8x32xf32> to vector<8x16xf32>
    %3 = vector.extract_strided_slice %1 {offsets = [0, 0], sizes = [8, 16], strides = [1, 1]} : vector<8x32xf32> to vector<8x16xf32>
    %4 = tpu.concatenate %2, %3 in 1 : vector<8x16xf32>, vector<8x16xf32> -> vector<8x32xf32>
    %c0_2 = arith.constant 0 : index
    %c0_3 = arith.constant 0 : index
    %5 = vector.load %arg3[%c0_2, %c0_3] : memref<8x32xf32, #tpu.memory_space<vmem>>, vector<8x32xf32>
    %6 = arith.mulf %1, %5 : vector<8x32xf32>
    %c0_4 = arith.constant 0 : index
    %c0_5 = arith.constant 0 : index
    %7 = vector.load %arg4[%c0_4, %c0_5] : memref<8x32xf32, #tpu.memory_space<vmem>>, vector<8x32xf32>
    %8 = arith.mulf %4, %7 : vector<8x32xf32>
    %9 = arith.addf %6, %8 : vector<8x32xf32>
    %c0_6 = arith.constant 0 : index
    %c0_7 = arith.constant 0 : index
    %c0_8 = arith.constant 0 : index
    %10 = vector.load %arg5[%c0_6, %c0_7, %c0_8] : memref<1x8x32xf32, #tpu.memory_space<vmem>>, vector<1x8x32xf32>
    %11 = vector.shape_cast %10 : vector<1x8x32xf32> to vector<8x32xf32>
    %12 = vector.shape_cast %9 : vector<8x32xf32> to vector<1x8x32xf32>
    tpu.vector_store %arg5[%c0_6, %c0_7, %c0_8], %12 {strides = array<i32>} : memref<1x8x32xf32, #tpu.memory_space<vmem>>, vector<1x8x32xf32>,
    return
  }
  func.func @transform_0(%arg0: i32, %arg1: i32) -> (i32, i32, i32) {
    %c0_i32 = arith.constant 0 : i32
    %c0_i32_0 = arith.constant 0 : i32
    return %arg0, %arg1, %c0_i32 : i32, i32, i32
  }
  func.func @transform_1(%arg0: i32, %arg1: i32) -> (i32, i32) {
    %c0_i32 = arith.constant 0 : i32
    %c0_i32_0 = arith.constant 0 : i32
    return %arg1, %c0_i32 : i32, i32
  }
  func.func @transform_2(%arg0: i32, %arg1: i32) -> (i32, i32) {
    %c0_i32 = arith.constant 0 : i32
    %c0_i32_0 = arith.constant 0 : i32
    return %arg1, %c0_i32 : i32, i32
  }
  func.func @transform_3(%arg0: i32, %arg1: i32) -> (i32, i32, i32) {
    %c0_i32 = arith.constant 0 : i32
    %c0_i32_0 = arith.constant 0 : i32
    return %arg0, %arg1, %c0_i32 : i32, i32, i32
  }
}

module attributes {stable_mosaic.version = 11 : i64} {
  func.func @_mm_bias_kernel(%arg0: i32, %arg1: i32, %arg2: i32, %arg3: memref<16x32xf32, #tpu.memory_space<vmem>>, %arg4: memref<32x96xbf16, #tpu.memory_space<vmem>>, %arg5: memref<1x96xf32, #tpu.memory_space<vmem>>, %arg6: memref<16x96xf32, #tpu.memory_space<vmem>>, %arg7: memref<16x96xf32, #tpu.memory_space<vmem>>) attributes {dimension_semantics = [#tpu.dimension_semantics<parallel>, #tpu.dimension_semantics<parallel>, #tpu.dimension_semantics<arbitrary>], iteration_bounds = array<i64: 1, 1, 1>, scalar_prefetch = 0 : i64, scratch_operands = 1 : i64, tpu.core_type = #tpu.core_type<tc>, window_params = [{transform_indices = @transform_0, window_bounds = array<i64: 16, 32>}, {transform_indices = @transform_1, window_bounds = array<i64: 32, 96>}, {transform_indices = @transform_2, window_bounds = array<i64: 1, 96>}, {transform_indices = @transform_3, window_bounds = array<i64: 16, 96>}]} {
    %c0_i32 = arith.constant 0 : i32
    %0 = arith.cmpi eq, %arg2, %c0_i32 : i32
    %1 = arith.extui %0 : i1 to i32
    %c0_i32_0 = arith.constant 0 : i32
    %2 = arith.cmpi ne, %1, %c0_i32_0 : i32
    scf.if %2 {
      %cst_10 = arith.constant 0.000000e+00 : f32
      %13 = vector.broadcast %cst_10 : f32 to vector<16x96xf32>
      %c0_11 = arith.constant 0 : index
      %c0_12 = arith.constant 0 : index
      %14 = vector.load %arg7[%c0_11, %c0_12] : memref<16x96xf32, #tpu.memory_space<vmem>>, vector<16x96xf32>
      tpu.vector_store %arg7[%c0_11, %c0_12], %13 {strides = array<i32>} : memref<16x96xf32, #tpu.memory_space<vmem>>, vector<16x96xf32>,
    } else {
    }
    %c0 = arith.constant 0 : index
    %c0_1 = arith.constant 0 : index
    %3 = vector.load %arg7[%c0, %c0_1] : memref<16x96xf32, #tpu.memory_space<vmem>>, vector<16x96xf32>
    %c0_2 = arith.constant 0 : index
    %c0_3 = arith.constant 0 : index
    %4 = vector.load %arg3[%c0_2, %c0_3] : memref<16x32xf32, #tpu.memory_space<vmem>>, vector<16x32xf32>
    %5 = arith.truncf %4 : vector<16x32xf32> to vector<16x32xbf16>
    %c0_4 = arith.constant 0 : index
    %c0_5 = arith.constant 0 : index
    %6 = vector.load %arg4[%c0_4, %c0_5] : memref<32x96xbf16, #tpu.memory_space<vmem>>, vector<32x96xbf16>
    %cst = arith.constant dense<0.000000e+00> : vector<16x96xf32>
    %7 = tpu.matmul %5, %6, %cst {dimension_numbers = #tpu.dot_dimension_numbers<[1], [0], [0], [1], [0, 0, 1, 1], [], []>} : vector<16x32xbf16>, vector<32x96xbf16>, vector<16x96xf32> -> vector<16x96xf32>
    %8 = arith.addf %3, %7 : vector<16x96xf32>
    %c0_6 = arith.constant 0 : index
    %c0_7 = arith.constant 0 : index
    %9 = vector.load %arg7[%c0_6, %c0_7] : memref<16x96xf32, #tpu.memory_space<vmem>>, vector<16x96xf32>
    tpu.vector_store %arg7[%c0_6, %c0_7], %8 {strides = array<i32>} : memref<16x96xf32, #tpu.memory_space<vmem>>, vector<16x96xf32>,
    %c0_i32_8 = arith.constant 0 : i32
    %10 = arith.cmpi eq, %arg2, %c0_i32_8 : i32
    %11 = arith.extui %10 : i1 to i32
    %c0_i32_9 = arith.constant 0 : i32
    %12 = arith.cmpi ne, %11, %c0_i32_9 : i32
    scf.if %12 {
      %c0_10 = arith.constant 0 : index
      %c0_11 = arith.constant 0 : index
      %13 = vector.load %arg7[%c0_10, %c0_11] : memref<16x96xf32, #tpu.memory_space<vmem>>, vector<16x96xf32>
      %c0_12 = arith.constant 0 : index
      %c0_13 = arith.constant 0 : index
      %14 = vector.load %arg5[%c0_12, %c0_13] : memref<1x96xf32, #tpu.memory_space<vmem>>, vector<1x96xf32>
      %15 = vector.broadcast %14 : vector<1x96xf32> to vector<16x96xf32>
      %16 = arith.addf %13, %15 : vector<16x96xf32>
      %c0_14 = arith.constant 0 : index
      %c0_15 = arith.constant 0 : index
      %17 = vector.load %arg6[%c0_14, %c0_15] : memref<16x96xf32, #tpu.memory_space<vmem>>, vector<16x96xf32>
      tpu.vector_store %arg6[%c0_14, %c0_15], %16 {strides = array<i32>} : memref<16x96xf32, #tpu.memory_space<vmem>>, vector<16x96xf32>,
    } else {
    }
    return
  }
  func.func @transform_0(%arg0: i32, %arg1: i32, %arg2: i32) -> (i32, i32) {
    %c0_i32 = arith.constant 0 : i32
    return %arg0, %arg2 : i32, i32
  }
  func.func @transform_1(%arg0: i32, %arg1: i32, %arg2: i32) -> (i32, i32) {
    %c0_i32 = arith.constant 0 : i32
    return %arg2, %arg1 : i32, i32
  }
  func.func @transform_2(%arg0: i32, %arg1: i32, %arg2: i32) -> (i32, i32) {
    %c0_i32 = arith.constant 0 : i32
    %c0_i32_0 = arith.constant 0 : i32
    return %c0_i32, %arg1 : i32, i32
  }
  func.func @transform_3(%arg0: i32, %arg1: i32, %arg2: i32) -> (i32, i32) {
    %c0_i32 = arith.constant 0 : i32
    return %arg0, %arg1 : i32, i32
  }
}

module attributes {stable_mosaic.version = 11 : i64} {
  func.func @_flash_attn_kernel(%arg0: i32, %arg1: i32, %arg2: i32, %arg3: memref<1x8x32xf32, #tpu.memory_space<vmem>>, %arg4: memref<1x8x32xf32, #tpu.memory_space<vmem>>, %arg5: memref<1x8x32xf32, #tpu.memory_space<vmem>>, %arg6: memref<1x8x32xf32, #tpu.memory_space<vmem>>, %arg7: memref<4x8x1xf32, #tpu.memory_space<vmem>>, %arg8: memref<4x8x1xf32, #tpu.memory_space<vmem>>, %arg9: memref<4x8x8xf32, #tpu.memory_space<vmem>>) attributes {dimension_semantics = [#tpu.dimension_semantics<parallel>, #tpu.dimension_semantics<parallel>, #tpu.dimension_semantics<arbitrary>], iteration_bounds = array<i64: 2, 1, 1>, scalar_prefetch = 0 : i64, scratch_operands = 3 : i64, tpu.core_type = #tpu.core_type<tc>, window_params = [{transform_indices = @transform_0, window_bounds = array<i64: 1, 8, 32>}, {transform_indices = @transform_1, window_bounds = array<i64: 1, 8, 32>}, {transform_indices = @transform_2, window_bounds = array<i64: 1, 8, 32>}, {transform_indices = @transform_3, window_bounds = array<i64: 1, 8, 32>}]} {
    %c0_i32 = arith.constant 0 : i32
    %0 = arith.cmpi eq, %arg2, %c0_i32 : i32
    %1 = arith.extui %0 : i1 to i32
    %c0_i32_0 = arith.constant 0 : i32
    %2 = arith.cmpi ne, %1, %c0_i32_0 : i32
    scf.if %2 {
      %cst_95 = arith.constant 0xFF800000 : f32
      %168 = vector.broadcast %cst_95 : f32 to vector<4x8x1xf32>
      %c0_96 = arith.constant 0 : index
      %c0_97 = arith.constant 0 : index
      %c0_98 = arith.constant 0 : index
      %169 = vector.load %arg7[%c0_96, %c0_97, %c0_98] : memref<4x8x1xf32, #tpu.memory_space<vmem>>, vector<4x8x1xf32>
      tpu.vector_store %arg7[%c0_96, %c0_97, %c0_98], %168 {strides = array<i32>} : memref<4x8x1xf32, #tpu.memory_space<vmem>>, vector<4x8x1xf32>,
      %cst_99 = arith.constant 0.000000e+00 : f32
      %170 = vector.broadcast %cst_99 : f32 to vector<4x8x1xf32>
      %c0_100 = arith.constant 0 : index
      %c0_101 = arith.constant 0 : index
      %c0_102 = arith.constant 0 : index
      %171 = vector.load %arg8[%c0_100, %c0_101, %c0_102] : memref<4x8x1xf32, #tpu.memory_space<vmem>>, vector<4x8x1xf32>
      tpu.vector_store %arg8[%c0_100, %c0_101, %c0_102], %170 {strides = array<i32>} : memref<4x8x1xf32, #tpu.memory_space<vmem>>, vector<4x8x1xf32>,
      %cst_103 = arith.constant 0.000000e+00 : f32
      %172 = vector.broadcast %cst_103 : f32 to vector<4x8x8xf32>
      %c0_104 = arith.constant 0 : index
      %c0_105 = arith.constant 0 : index
      %c0_106 = arith.constant 0 : index
      %173 = vector.load %arg9[%c0_104, %c0_105, %c0_106] : memref<4x8x8xf32, #tpu.memory_space<vmem>>, vector<4x8x8xf32>
      tpu.vector_store %arg9[%c0_104, %c0_105, %c0_106], %172 {strides = array<i32>} : memref<4x8x8xf32, #tpu.memory_space<vmem>>, vector<4x8x8xf32>,
    } else {
    }
    %c0 = arith.constant 0 : index
    %c0_1 = arith.constant 0 : index
    %c0_2 = arith.constant 0 : index
    %3 = vector.load %arg3[%c0, %c0_1, %c0_2] : memref<1x8x32xf32, #tpu.memory_space<vmem>>, vector<1x8x32xf32>
    %4 = vector.shape_cast %3 : vector<1x8x32xf32> to vector<8x32xf32>
    %c0_3 = arith.constant 0 : index
    %c0_4 = arith.constant 0 : index
    %c0_5 = arith.constant 0 : index
    %5 = vector.load %arg4[%c0_3, %c0_4, %c0_5] : memref<1x8x32xf32, #tpu.memory_space<vmem>>, vector<1x8x32xf32>
    %6 = vector.shape_cast %5 : vector<1x8x32xf32> to vector<8x32xf32>
    %c0_6 = arith.constant 0 : index
    %c0_7 = arith.constant 0 : index
    %c0_8 = arith.constant 0 : index
    %7 = vector.load %arg5[%c0_6, %c0_7, %c0_8] : memref<1x8x32xf32, #tpu.memory_space<vmem>>, vector<1x8x32xf32>
    %8 = vector.shape_cast %7 : vector<1x8x32xf32> to vector<8x32xf32>
    %9 = vector.extract_strided_slice %4 {offsets = [0, 0], sizes = [8, 8], strides = [1, 1]} : vector<8x32xf32> to vector<8x8xf32>
    %10 = arith.truncf %9 : vector<8x8xf32> to vector<8x8xbf16>
    %11 = vector.extract_strided_slice %6 {offsets = [0, 0], sizes = [8, 8], strides = [1, 1]} : vector<8x32xf32> to vector<8x8xf32>
    %12 = arith.truncf %11 : vector<8x8xf32> to vector<8x8xbf16>
    %13 = vector.extract_strided_slice %8 {offsets = [0, 0], sizes = [8, 8], strides = [1, 1]} : vector<8x32xf32> to vector<8x8xf32>
    %14 = arith.truncf %13 : vector<8x8xf32> to vector<8x8xbf16>
    %cst = arith.constant dense<0.000000e+00> : vector<8x8xf32>
    %15 = tpu.matmul %10, %12, %cst {dimension_numbers = #tpu.dot_dimension_numbers<[1], [1], [0], [0], [0, 0, 1, 0], [], []>} : vector<8x8xbf16>, vector<8x8xbf16>, vector<8x8xf32> -> vector<8x8xf32>
    %c0_9 = arith.constant 0 : index
    %c0_10 = arith.constant 0 : index
    %c0_11 = arith.constant 0 : index
    %16 = vector.load %arg7[%c0_9, %c0_10, %c0_11] : memref<4x8x1xf32, #tpu.memory_space<vmem>>, vector<1x8x1xf32>
    %17 = vector.shape_cast %16 : vector<1x8x1xf32> to vector<8x1xf32>
    %cst_12 = arith.constant dense<0xFF800000> : vector<8xf32>
    %18 = vector.multi_reduction <maximumf>, %15, %cst_12 [1] : vector<8x8xf32> to vector<8xf32>
    %19 = vector.shape_cast %18 : vector<8xf32> to vector<8x1xf32>
    %20 = arith.maximumf %17, %19 : vector<8x1xf32>
    %21 = arith.subf %17, %20 : vector<8x1xf32>
    %22 = math.exp %21 : vector<8x1xf32>
    %23 = vector.broadcast %20 : vector<8x1xf32> to vector<8x8xf32>
    %24 = arith.subf %15, %23 : vector<8x8xf32>
    %25 = math.exp %24 : vector<8x8xf32>
    %c0_13 = arith.constant 0 : index
    %c0_14 = arith.constant 0 : index
    %c0_15 = arith.constant 0 : index
    %26 = vector.load %arg8[%c0_13, %c0_14, %c0_15] : memref<4x8x1xf32, #tpu.memory_space<vmem>>, vector<1x8x1xf32>
    %27 = vector.shape_cast %26 : vector<1x8x1xf32> to vector<8x1xf32>
    %28 = arith.mulf %22, %27 : vector<8x1xf32>
    %cst_16 = arith.constant dense<0.000000e+00> : vector<8xf32>
    %29 = vector.multi_reduction <add>, %25, %cst_16 [1] : vector<8x8xf32> to vector<8xf32>
    %30 = vector.shape_cast %29 : vector<8xf32> to vector<8x1xf32>
    %31 = arith.addf %28, %30 : vector<8x1xf32>
    %c0_17 = arith.constant 0 : index
    %c0_18 = arith.constant 0 : index
    %c0_19 = arith.constant 0 : index
    %32 = vector.load %arg8[%c0_17, %c0_18, %c0_19] : memref<4x8x1xf32, #tpu.memory_space<vmem>>, vector<1x8x1xf32>
    %33 = vector.shape_cast %32 : vector<1x8x1xf32> to vector<8x1xf32>
    %34 = vector.shape_cast %31 : vector<8x1xf32> to vector<1x8x1xf32>
    tpu.vector_store %arg8[%c0_17, %c0_18, %c0_19], %34 {strides = array<i32>} : memref<4x8x1xf32, #tpu.memory_space<vmem>>, vector<1x8x1xf32>,
    %c0_20 = arith.constant 0 : index
    %c0_21 = arith.constant 0 : index
    %c0_22 = arith.constant 0 : index
    %35 = vector.load %arg9[%c0_20, %c0_21, %c0_22] : memref<4x8x8xf32, #tpu.memory_space<vmem>>, vector<1x8x8xf32>
    %36 = vector.shape_cast %35 : vector<1x8x8xf32> to vector<8x8xf32>
    %37 = vector.broadcast %22 : vector<8x1xf32> to vector<8x8xf32>
    %38 = arith.mulf %37, %36 : vector<8x8xf32>
    %39 = arith.truncf %25 : vector<8x8xf32> to vector<8x8xbf16>
    %cst_23 = arith.constant dense<0.000000e+00> : vector<8x8xf32>
    %40 = tpu.matmul %39, %14, %cst_23 {dimension_numbers = #tpu.dot_dimension_numbers<[1], [0], [0], [1], [0, 0, 1, 1], [], []>} : vector<8x8xbf16>, vector<8x8xbf16>, vector<8x8xf32> -> vector<8x8xf32>
    %41 = arith.addf %38, %40 : vector<8x8xf32>
    %c0_24 = arith.constant 0 : index
    %c0_25 = arith.constant 0 : index
    %c0_26 = arith.constant 0 : index
    %42 = vector.load %arg9[%c0_24, %c0_25, %c0_26] : memref<4x8x8xf32, #tpu.memory_space<vmem>>, vector<1x8x8xf32>
    %43 = vector.shape_cast %42 : vector<1x8x8xf32> to vector<8x8xf32>
    %44 = vector.shape_cast %41 : vector<8x8xf32> to vector<1x8x8xf32>
    tpu.vector_store %arg9[%c0_24, %c0_25, %c0_26], %44 {strides = array<i32>} : memref<4x8x8xf32, #tpu.memory_space<vmem>>, vector<1x8x8xf32>,
    %c0_27 = arith.constant 0 : index
    %c0_28 = arith.constant 0 : index
    %c0_29 = arith.constant 0 : index
    %45 = vector.load %arg7[%c0_27, %c0_28, %c0_29] : memref<4x8x1xf32, #tpu.memory_space<vmem>>, vector<1x8x1xf32>
    %46 = vector.shape_cast %45 : vector<1x8x1xf32> to vector<8x1xf32>
    %47 = vector.shape_cast %20 : vector<8x1xf32> to vector<1x8x1xf32>
    tpu.vector_store %arg7[%c0_27, %c0_28, %c0_29], %47 {strides = array<i32>} : memref<4x8x1xf32, #tpu.memory_space<vmem>>, vector<1x8x1xf32>,
    %48 = vector.extract_strided_slice %4 {offsets = [0, 8], sizes = [8, 8], strides = [1, 1]} : vector<8x32xf32> to vector<8x8xf32>
    %49 = arith.truncf %48 : vector<8x8xf32> to vector<8x8xbf16>
    %50 = vector.extract_strided_slice %6 {offsets = [0, 8], sizes = [8, 8], strides = [1, 1]} : vector<8x32xf32> to vector<8x8xf32>
    %51 = arith.truncf %50 : vector<8x8xf32> to vector<8x8xbf16>
    %52 = vector.extract_strided_slice %8 {offsets = [0, 8], sizes = [8, 8], strides = [1, 1]} : vector<8x32xf32> to vector<8x8xf32>
    %53 = arith.truncf %52 : vector<8x8xf32> to vector<8x8xbf16>
    %cst_30 = arith.constant dense<0.000000e+00> : vector<8x8xf32>
    %54 = tpu.matmul %49, %51, %cst_30 {dimension_numbers = #tpu.dot_dimension_numbers<[1], [1], [0], [0], [0, 0, 1, 0], [], []>} : vector<8x8xbf16>, vector<8x8xbf16>, vector<8x8xf32> -> vector<8x8xf32>
    %c1 = arith.constant 1 : index
    %c0_31 = arith.constant 0 : index
    %c0_32 = arith.constant 0 : index
    %55 = vector.load %arg7[%c1, %c0_31, %c0_32] : memref<4x8x1xf32, #tpu.memory_space<vmem>>, vector<1x8x1xf32>
    %56 = vector.shape_cast %55 : vector<1x8x1xf32> to vector<8x1xf32>
    %cst_33 = arith.constant dense<0xFF800000> : vector<8xf32>
    %57 = vector.multi_reduction <maximumf>, %54, %cst_33 [1] : vector<8x8xf32> to vector<8xf32>
    %58 = vector.shape_cast %57 : vector<8xf32> to vector<8x1xf32>
    %59 = arith.maximumf %56, %58 : vector<8x1xf32>
    %60 = arith.subf %56, %59 : vector<8x1xf32>
    %61 = math.exp %60 : vector<8x1xf32>
    %62 = vector.broadcast %59 : vector<8x1xf32> to vector<8x8xf32>
    %63 = arith.subf %54, %62 : vector<8x8xf32>
    %64 = math.exp %63 : vector<8x8xf32>
    %c1_34 = arith.constant 1 : index
    %c0_35 = arith.constant 0 : index
    %c0_36 = arith.constant 0 : index
    %65 = vector.load %arg8[%c1_34, %c0_35, %c0_36] : memref<4x8x1xf32, #tpu.memory_space<vmem>>, vector<1x8x1xf32>
    %66 = vector.shape_cast %65 : vector<1x8x1xf32> to vector<8x1xf32>
    %67 = arith.mulf %61, %66 : vector<8x1xf32>
    %cst_37 = arith.constant dense<0.000000e+00> : vector<8xf32>
    %68 = vector.multi_reduction <add>, %64, %cst_37 [1] : vector<8x8xf32> to vector<8xf32>
    %69 = vector.shape_cast %68 : vector<8xf32> to vector<8x1xf32>
    %70 = arith.addf %67, %69 : vector<8x1xf32>
    %c1_38 = arith.constant 1 : index
    %c0_39 = arith.constant 0 : index
    %c0_40 = arith.constant 0 : index
    %71 = vector.load %arg8[%c1_38, %c0_39, %c0_40] : memref<4x8x1xf32, #tpu.memory_space<vmem>>, vector<1x8x1xf32>
    %72 = vector.shape_cast %71 : vector<1x8x1xf32> to vector<8x1xf32>
    %73 = vector.shape_cast %70 : vector<8x1xf32> to vector<1x8x1xf32>
    tpu.vector_store %arg8[%c1_38, %c0_39, %c0_40], %73 {strides = array<i32>} : memref<4x8x1xf32, #tpu.memory_space<vmem>>, vector<1x8x1xf32>,
    %c1_41 = arith.constant 1 : index
    %c0_42 = arith.constant 0 : index
    %c0_43 = arith.constant 0 : index
    %74 = vector.load %arg9[%c1_41, %c0_42, %c0_43] : memref<4x8x8xf32, #tpu.memory_space<vmem>>, vector<1x8x8xf32>
    %75 = vector.shape_cast %74 : vector<1x8x8xf32> to vector<8x8xf32>
    %76 = vector.broadcast %61 : vector<8x1xf32> to vector<8x8xf32>
    %77 = arith.mulf %76, %75 : vector<8x8xf32>
    %78 = arith.truncf %64 : vector<8x8xf32> to vector<8x8xbf16>
    %cst_44 = arith.constant dense<0.000000e+00> : vector<8x8xf32>
    %79 = tpu.matmul %78, %53, %cst_44 {dimension_numbers = #tpu.dot_dimension_numbers<[1], [0], [0], [1], [0, 0, 1, 1], [], []>} : vector<8x8xbf16>, vector<8x8xbf16>, vector<8x8xf32> -> vector<8x8xf32>
    %80 = arith.addf %77, %79 : vector<8x8xf32>
    %c1_45 = arith.constant 1 : index
    %c0_46 = arith.constant 0 : index
    %c0_47 = arith.constant 0 : index
    %81 = vector.load %arg9[%c1_45, %c0_46, %c0_47] : memref<4x8x8xf32, #tpu.memory_space<vmem>>, vector<1x8x8xf32>
    %82 = vector.shape_cast %81 : vector<1x8x8xf32> to vector<8x8xf32>
    %83 = vector.shape_cast %80 : vector<8x8xf32> to vector<1x8x8xf32>
    tpu.vector_store %arg9[%c1_45, %c0_46, %c0_47], %83 {strides = array<i32>} : memref<4x8x8xf32, #tpu.memory_space<vmem>>, vector<1x8x8xf32>,
    %c1_48 = arith.constant 1 : index
    %c0_49 = arith.constant 0 : index
    %c0_50 = arith.constant 0 : index
    %84 = vector.load %arg7[%c1_48, %c0_49, %c0_50] : memref<4x8x1xf32, #tpu.memory_space<vmem>>, vector<1x8x1xf32>
    %85 = vector.shape_cast %84 : vector<1x8x1xf32> to vector<8x1xf32>
    %86 = vector.shape_cast %59 : vector<8x1xf32> to vector<1x8x1xf32>
    tpu.vector_store %arg7[%c1_48, %c0_49, %c0_50], %86 {strides = array<i32>} : memref<4x8x1xf32, #tpu.memory_space<vmem>>, vector<1x8x1xf32>,
    %87 = vector.extract_strided_slice %4 {offsets = [0, 16], sizes = [8, 8], strides = [1, 1]} : vector<8x32xf32> to vector<8x8xf32>
    %88 = arith.truncf %87 : vector<8x8xf32> to vector<8x8xbf16>
    %89 = vector.extract_strided_slice %6 {offsets = [0, 16], sizes = [8, 8], strides = [1, 1]} : vector<8x32xf32> to vector<8x8xf32>
    %90 = arith.truncf %89 : vector<8x8xf32> to vector<8x8xbf16>
    %91 = vector.extract_strided_slice %8 {offsets = [0, 16], sizes = [8, 8], strides = [1, 1]} : vector<8x32xf32> to vector<8x8xf32>
    %92 = arith.truncf %91 : vector<8x8xf32> to vector<8x8xbf16>
    %cst_51 = arith.constant dense<0.000000e+00> : vector<8x8xf32>
    %93 = tpu.matmul %88, %90, %cst_51 {dimension_numbers = #tpu.dot_dimension_numbers<[1], [1], [0], [0], [0, 0, 1, 0], [], []>} : vector<8x8xbf16>, vector<8x8xbf16>, vector<8x8xf32> -> vector<8x8xf32>
    %c2 = arith.constant 2 : index
    %c0_52 = arith.constant 0 : index
    %c0_53 = arith.constant 0 : index
    %94 = vector.load %arg7[%c2, %c0_52, %c0_53] : memref<4x8x1xf32, #tpu.memory_space<vmem>>, vector<1x8x1xf32>
    %95 = vector.shape_cast %94 : vector<1x8x1xf32> to vector<8x1xf32>
    %cst_54 = arith.constant dense<0xFF800000> : vector<8xf32>
    %96 = vector.multi_reduction <maximumf>, %93, %cst_54 [1] : vector<8x8xf32> to vector<8xf32>
    %97 = vector.shape_cast %96 : vector<8xf32> to vector<8x1xf32>
    %98 = arith.maximumf %95, %97 : vector<8x1xf32>
    %99 = arith.subf %95, %98 : vector<8x1xf32>
    %100 = math.exp %99 : vector<8x1xf32>
    %101 = vector.broadcast %98 : vector<8x1xf32> to vector<8x8xf32>
    %102 = arith.subf %93, %101 : vector<8x8xf32>
    %103 = math.exp %102 : vector<8x8xf32>
    %c2_55 = arith.constant 2 : index
    %c0_56 = arith.constant 0 : index
    %c0_57 = arith.constant 0 : index
    %104 = vector.load %arg8[%c2_55, %c0_56, %c0_57] : memref<4x8x1xf32, #tpu.memory_space<vmem>>, vector<1x8x1xf32>
    %105 = vector.shape_cast %104 : vector<1x8x1xf32> to vector<8x1xf32>
    %106 = arith.mulf %100, %105 : vector<8x1xf32>
    %cst_58 = arith.constant dense<0.000000e+00> : vector<8xf32>
    %107 = vector.multi_reduction <add>, %103, %cst_58 [1] : vector<8x8xf32> to vector<8xf32>
    %108 = vector.shape_cast %107 : vector<8xf32> to vector<8x1xf32>
    %109 = arith.addf %106, %108 : vector<8x1xf32>
    %c2_59 = arith.constant 2 : index
    %c0_60 = arith.constant 0 : index
    %c0_61 = arith.constant 0 : index
    %110 = vector.load %arg8[%c2_59, %c0_60, %c0_61] : memref<4x8x1xf32, #tpu.memory_space<vmem>>, vector<1x8x1xf32>
    %111 = vector.shape_cast %110 : vector<1x8x1xf32> to vector<8x1xf32>
    %112 = vector.shape_cast %109 : vector<8x1xf32> to vector<1x8x1xf32>
    tpu.vector_store %arg8[%c2_59, %c0_60, %c0_61], %112 {strides = array<i32>} : memref<4x8x1xf32, #tpu.memory_space<vmem>>, vector<1x8x1xf32>,
    %c2_62 = arith.constant 2 : index
    %c0_63 = arith.constant 0 : index
    %c0_64 = arith.constant 0 : index
    %113 = vector.load %arg9[%c2_62, %c0_63, %c0_64] : memref<4x8x8xf32, #tpu.memory_space<vmem>>, vector<1x8x8xf32>
    %114 = vector.shape_cast %113 : vector<1x8x8xf32> to vector<8x8xf32>
    %115 = vector.broadcast %100 : vector<8x1xf32> to vector<8x8xf32>
    %116 = arith.mulf %115, %114 : vector<8x8xf32>
    %117 = arith.truncf %103 : vector<8x8xf32> to vector<8x8xbf16>
    %cst_65 = arith.constant dense<0.000000e+00> : vector<8x8xf32>
    %118 = tpu.matmul %117, %92, %cst_65 {dimension_numbers = #tpu.dot_dimension_numbers<[1], [0], [0], [1], [0, 0, 1, 1], [], []>} : vector<8x8xbf16>, vector<8x8xbf16>, vector<8x8xf32> -> vector<8x8xf32>
    %119 = arith.addf %116, %118 : vector<8x8xf32>
    %c2_66 = arith.constant 2 : index
    %c0_67 = arith.constant 0 : index
    %c0_68 = arith.constant 0 : index
    %120 = vector.load %arg9[%c2_66, %c0_67, %c0_68] : memref<4x8x8xf32, #tpu.memory_space<vmem>>, vector<1x8x8xf32>
    %121 = vector.shape_cast %120 : vector<1x8x8xf32> to vector<8x8xf32>
    %122 = vector.shape_cast %119 : vector<8x8xf32> to vector<1x8x8xf32>
    tpu.vector_store %arg9[%c2_66, %c0_67, %c0_68], %122 {strides = array<i32>} : memref<4x8x8xf32, #tpu.memory_space<vmem>>, vector<1x8x8xf32>,
    %c2_69 = arith.constant 2 : index
    %c0_70 = arith.constant 0 : index
    %c0_71 = arith.constant 0 : index
    %123 = vector.load %arg7[%c2_69, %c0_70, %c0_71] : memref<4x8x1xf32, #tpu.memory_space<vmem>>, vector<1x8x1xf32>
    %124 = vector.shape_cast %123 : vector<1x8x1xf32> to vector<8x1xf32>
    %125 = vector.shape_cast %98 : vector<8x1xf32> to vector<1x8x1xf32>
    tpu.vector_store %arg7[%c2_69, %c0_70, %c0_71], %125 {strides = array<i32>} : memref<4x8x1xf32, #tpu.memory_space<vmem>>, vector<1x8x1xf32>,
    %126 = vector.extract_strided_slice %4 {offsets = [0, 24], sizes = [8, 8], strides = [1, 1]} : vector<8x32xf32> to vector<8x8xf32>
    %127 = arith.truncf %126 : vector<8x8xf32> to vector<8x8xbf16>
    %128 = vector.extract_strided_slice %6 {offsets = [0, 24], sizes = [8, 8], strides = [1, 1]} : vector<8x32xf32> to vector<8x8xf32>
    %129 = arith.truncf %128 : vector<8x8xf32> to vector<8x8xbf16>
    %130 = vector.extract_strided_slice %8 {offsets = [0, 24], sizes = [8, 8], strides = [1, 1]} : vector<8x32xf32> to vector<8x8xf32>
    %131 = arith.truncf %130 : vector<8x8xf32> to vector<8x8xbf16>
    %cst_72 = arith.constant dense<0.000000e+00> : vector<8x8xf32>
    %132 = tpu.matmul %127, %129, %cst_72 {dimension_numbers = #tpu.dot_dimension_numbers<[1], [1], [0], [0], [0, 0, 1, 0], [], []>} : vector<8x8xbf16>, vector<8x8xbf16>, vector<8x8xf32> -> vector<8x8xf32>
    %c3 = arith.constant 3 : index
    %c0_73 = arith.constant 0 : index
    %c0_74 = arith.constant 0 : index
    %133 = vector.load %arg7[%c3, %c0_73, %c0_74] : memref<4x8x1xf32, #tpu.memory_space<vmem>>, vector<1x8x1xf32>
    %134 = vector.shape_cast %133 : vector<1x8x1xf32> to vector<8x1xf32>
    %cst_75 = arith.constant dense<0xFF800000> : vector<8xf32>
    %135 = vector.multi_reduction <maximumf>, %132, %cst_75 [1] : vector<8x8xf32> to vector<8xf32>
    %136 = vector.shape_cast %135 : vector<8xf32> to vector<8x1xf32>
    %137 = arith.maximumf %134, %136 : vector<8x1xf32>
    %138 = arith.subf %134, %137 : vector<8x1xf32>
    %139 = math.exp %138 : vector<8x1xf32>
    %140 = vector.broadcast %137 : vector<8x1xf32> to vector<8x8xf32>
    %141 = arith.subf %132, %140 : vector<8x8xf32>
    %142 = math.exp %141 : vector<8x8xf32>
    %c3_76 = arith.constant 3 : index
    %c0_77 = arith.constant 0 : index
    %c0_78 = arith.constant 0 : index
    %143 = vector.load %arg8[%c3_76, %c0_77, %c0_78] : memref<4x8x1xf32, #tpu.memory_space<vmem>>, vector<1x8x1xf32>
    %144 = vector.shape_cast %143 : vector<1x8x1xf32> to vector<8x1xf32>
    %145 = arith.mulf %139, %144 : vector<8x1xf32>
    %cst_79 = arith.constant dense<0.000000e+00> : vector<8xf32>
    %146 = vector.multi_reduction <add>, %142, %cst_79 [1] : vector<8x8xf32> to vector<8xf32>
    %147 = vector.shape_cast %146 : vector<8xf32> to vector<8x1xf32>
    %148 = arith.addf %145, %147 : vector<8x1xf32>
    %c3_80 = arith.constant 3 : index
    %c0_81 = arith.constant 0 : index
    %c0_82 = arith.constant 0 : index
    %149 = vector.load %arg8[%c3_80, %c0_81, %c0_82] : memref<4x8x1xf32, #tpu.memory_space<vmem>>, vector<1x8x1xf32>
    %150 = vector.shape_cast %149 : vector<1x8x1xf32> to vector<8x1xf32>
    %151 = vector.shape_cast %148 : vector<8x1xf32> to vector<1x8x1xf32>
    tpu.vector_store %arg8[%c3_80, %c0_81, %c0_82], %151 {strides = array<i32>} : memref<4x8x1xf32, #tpu.memory_space<vmem>>, vector<1x8x1xf32>,
    %c3_83 = arith.constant 3 : index
    %c0_84 = arith.constant 0 : index
    %c0_85 = arith.constant 0 : index
    %152 = vector.load %arg9[%c3_83, %c0_84, %c0_85] : memref<4x8x8xf32, #tpu.memory_space<vmem>>, vector<1x8x8xf32>
    %153 = vector.shape_cast %152 : vector<1x8x8xf32> to vector<8x8xf32>
    %154 = vector.broadcast %139 : vector<8x1xf32> to vector<8x8xf32>
    %155 = arith.mulf %154, %153 : vector<8x8xf32>
    %156 = arith.truncf %142 : vector<8x8xf32> to vector<8x8xbf16>
    %cst_86 = arith.constant dense<0.000000e+00> : vector<8x8xf32>
    %157 = tpu.matmul %156, %131, %cst_86 {dimension_numbers = #tpu.dot_dimension_numbers<[1], [0], [0], [1], [0, 0, 1, 1], [], []>} : vector<8x8xbf16>, vector<8x8xbf16>, vector<8x8xf32> -> vector<8x8xf32>
    %158 = arith.addf %155, %157 : vector<8x8xf32>
    %c3_87 = arith.constant 3 : index
    %c0_88 = arith.constant 0 : index
    %c0_89 = arith.constant 0 : index
    %159 = vector.load %arg9[%c3_87, %c0_88, %c0_89] : memref<4x8x8xf32, #tpu.memory_space<vmem>>, vector<1x8x8xf32>
    %160 = vector.shape_cast %159 : vector<1x8x8xf32> to vector<8x8xf32>
    %161 = vector.shape_cast %158 : vector<8x8xf32> to vector<1x8x8xf32>
    tpu.vector_store %arg9[%c3_87, %c0_88, %c0_89], %161 {strides = array<i32>} : memref<4x8x8xf32, #tpu.memory_space<vmem>>, vector<1x8x8xf32>,
    %c3_90 = arith.constant 3 : index
    %c0_91 = arith.constant 0 : index
    %c0_92 = arith.constant 0 : index
    %162 = vector.load %arg7[%c3_90, %c0_91, %c0_92] : memref<4x8x1xf32, #tpu.memory_space<vmem>>, vector<1x8x1xf32>
    %163 = vector.shape_cast %162 : vector<1x8x1xf32> to vector<8x1xf32>
    %164 = vector.shape_cast %137 : vector<8x1xf32> to vector<1x8x1xf32>
    tpu.vector_store %arg7[%c3_90, %c0_91, %c0_92], %164 {strides = array<i32>} : memref<4x8x1xf32, #tpu.memory_space<vmem>>, vector<1x8x1xf32>,
    %c0_i32_93 = arith.constant 0 : i32
    %165 = arith.cmpi eq, %arg2, %c0_i32_93 : i32
    %166 = arith.extui %165 : i1 to i32
    %c0_i32_94 = arith.constant 0 : i32
    %167 = arith.cmpi ne, %166, %c0_i32_94 : i32
    scf.if %167 {
      %c0_95 = arith.constant 0 : index
      %c0_96 = arith.constant 0 : index
      %c0_97 = arith.constant 0 : index
      %168 = vector.load %arg8[%c0_95, %c0_96, %c0_97] : memref<4x8x1xf32, #tpu.memory_space<vmem>>, vector<1x8x1xf32>
      %169 = vector.shape_cast %168 : vector<1x8x1xf32> to vector<8x1xf32>
      %170 = tpu.reciprocal %169 {approx = true} : vector<8x1xf32> -> vector<8x1xf32>
      %c0_98 = arith.constant 0 : index
      %c0_99 = arith.constant 0 : index
      %c0_100 = arith.constant 0 : index
      %171 = vector.load %arg9[%c0_98, %c0_99, %c0_100] : memref<4x8x8xf32, #tpu.memory_space<vmem>>, vector<1x8x8xf32>
      %172 = vector.shape_cast %171 : vector<1x8x8xf32> to vector<8x8xf32>
      %173 = vector.broadcast %170 : vector<8x1xf32> to vector<8x8xf32>
      %174 = arith.mulf %172, %173 : vector<8x8xf32>
      %c1_101 = arith.constant 1 : index
      %c0_102 = arith.constant 0 : index
      %c0_103 = arith.constant 0 : index
      %175 = vector.load %arg8[%c1_101, %c0_102, %c0_103] : memref<4x8x1xf32, #tpu.memory_space<vmem>>, vector<1x8x1xf32>
      %176 = vector.shape_cast %175 : vector<1x8x1xf32> to vector<8x1xf32>
      %177 = tpu.reciprocal %176 {approx = true} : vector<8x1xf32> -> vector<8x1xf32>
      %c1_104 = arith.constant 1 : index
      %c0_105 = arith.constant 0 : index
      %c0_106 = arith.constant 0 : index
      %178 = vector.load %arg9[%c1_104, %c0_105, %c0_106] : memref<4x8x8xf32, #tpu.memory_space<vmem>>, vector<1x8x8xf32>
      %179 = vector.shape_cast %178 : vector<1x8x8xf32> to vector<8x8xf32>
      %180 = vector.broadcast %177 : vector<8x1xf32> to vector<8x8xf32>
      %181 = arith.mulf %179, %180 : vector<8x8xf32>
      %c2_107 = arith.constant 2 : index
      %c0_108 = arith.constant 0 : index
      %c0_109 = arith.constant 0 : index
      %182 = vector.load %arg8[%c2_107, %c0_108, %c0_109] : memref<4x8x1xf32, #tpu.memory_space<vmem>>, vector<1x8x1xf32>
      %183 = vector.shape_cast %182 : vector<1x8x1xf32> to vector<8x1xf32>
      %184 = tpu.reciprocal %183 {approx = true} : vector<8x1xf32> -> vector<8x1xf32>
      %c2_110 = arith.constant 2 : index
      %c0_111 = arith.constant 0 : index
      %c0_112 = arith.constant 0 : index
      %185 = vector.load %arg9[%c2_110, %c0_111, %c0_112] : memref<4x8x8xf32, #tpu.memory_space<vmem>>, vector<1x8x8xf32>
      %186 = vector.shape_cast %185 : vector<1x8x8xf32> to vector<8x8xf32>
      %187 = vector.broadcast %184 : vector<8x1xf32> to vector<8x8xf32>
      %188 = arith.mulf %186, %187 : vector<8x8xf32>
      %c3_113 = arith.constant 3 : index
      %c0_114 = arith.constant 0 : index
      %c0_115 = arith.constant 0 : index
      %189 = vector.load %arg8[%c3_113, %c0_114, %c0_115] : memref<4x8x1xf32, #tpu.memory_space<vmem>>, vector<1x8x1xf32>
      %190 = vector.shape_cast %189 : vector<1x8x1xf32> to vector<8x1xf32>
      %191 = tpu.reciprocal %190 {approx = true} : vector<8x1xf32> -> vector<8x1xf32>
      %c3_116 = arith.constant 3 : index
      %c0_117 = arith.constant 0 : index
      %c0_118 = arith.constant 0 : index
      %192 = vector.load %arg9[%c3_116, %c0_117, %c0_118] : memref<4x8x8xf32, #tpu.memory_space<vmem>>, vector<1x8x8xf32>
      %193 = vector.shape_cast %192 : vector<1x8x8xf32> to vector<8x8xf32>
      %194 = vector.broadcast %191 : vector<8x1xf32> to vector<8x8xf32>
      %195 = arith.mulf %193, %194 : vector<8x8xf32>
      %196 = tpu.concatenate %174, %181, %188, %195 in 1 : vector<8x8xf32>, vector<8x8xf32>, vector<8x8xf32>, vector<8x8xf32> -> vector<8x32xf32>
      %c0_119 = arith.constant 0 : index
      %c0_120 = arith.constant 0 : index
      %c0_121 = arith.constant 0 : index
      %197 = vector.load %arg6[%c0_119, %c0_120, %c0_121] : memref<1x8x32xf32, #tpu.memory_space<vmem>>, vector<1x8x32xf32>
      %198 = vector.shape_cast %197 : vector<1x8x32xf32> to vector<8x32xf32>
      %199 = vector.shape_cast %196 : vector<8x32xf32> to vector<1x8x32xf32>
      tpu.vector_store %arg6[%c0_119, %c0_120, %c0_121], %199 {strides = array<i32>} : memref<1x8x32xf32, #tpu.memory_space<vmem>>, vector<1x8x32xf32>,
    } else {
    }
    return
  }
  func.func @transform_0(%arg0: i32, %arg1: i32, %arg2: i32) -> (i32, i32, i32) {
    %c0_i32 = arith.constant 0 : i32
    %0 = arith.addi %c0_i32, %arg0 : i32
    %c0_i32_0 = arith.constant 0 : i32
    %c0_i32_1 = arith.constant 0 : i32
    return %0, %arg1, %c0_i32_0 : i32, i32, i32
  }
  func.func @transform_1(%arg0: i32, %arg1: i32, %arg2: i32) -> (i32, i32, i32) {
    %c2_i32 = arith.constant 2 : i32
    %0 = arith.addi %c2_i32, %arg0 : i32
    %c0_i32 = arith.constant 0 : i32
    %c0_i32_0 = arith.constant 0 : i32
    return %0, %arg2, %c0_i32 : i32, i32, i32
  }
  func.func @transform_2(%arg0: i32, %arg1: i32, %arg2: i32) -> (i32, i32, i32) {
    %c4_i32 = arith.constant 4 : i32
    %0 = arith.addi %c4_i32, %arg0 : i32
    %c0_i32 = arith.constant 0 : i32
    %c0_i32_0 = arith.constant 0 : i32
    return %0, %arg2, %c0_i32 : i32, i32, i32
  }
  func.func @transform_3(%arg0: i32, %arg1: i32, %arg2: i32) -> (i32, i32, i32) {
    %c0_i32 = arith.constant 0 : i32
    %c0_i32_0 = arith.constant 0 : i32
    return %arg0, %arg1, %c0_i32 : i32, i32, i32
  }
}

module attributes {stable_mosaic.version = 11 : i64} {
  func.func @_mm_bias_res_ln_kernel(%arg0: i32, %arg1: i32, %arg2: memref<16x32xf32, #tpu.memory_space<vmem>>, %arg3: memref<32x32xbf16, #tpu.memory_space<vmem>>, %arg4: memref<1x32xf32, #tpu.memory_space<vmem>>, %arg5: memref<16x32xf32, #tpu.memory_space<vmem>>, %arg6: memref<1x32xf32, #tpu.memory_space<vmem>>, %arg7: memref<1x32xf32, #tpu.memory_space<vmem>>, %arg8: memref<16x32xf32, #tpu.memory_space<vmem>>, %arg9: memref<16x32xf32, #tpu.memory_space<vmem>>) attributes {dimension_semantics = [#tpu.dimension_semantics<parallel>, #tpu.dimension_semantics<arbitrary>], iteration_bounds = array<i64: 1, 1>, scalar_prefetch = 0 : i64, scratch_operands = 1 : i64, tpu.core_type = #tpu.core_type<tc>, window_params = [{transform_indices = @transform_0, window_bounds = array<i64: 16, 32>}, {transform_indices = @transform_1, window_bounds = array<i64: 32, 32>}, {pipeline_mode = #tpu.pipeline_mode<synchronous>, transform_indices = @transform_2, window_bounds = array<i64: 1, 32>}, {transform_indices = @transform_3, window_bounds = array<i64: 16, 32>}, {pipeline_mode = #tpu.pipeline_mode<synchronous>, transform_indices = @transform_4, window_bounds = array<i64: 1, 32>}, {pipeline_mode = #tpu.pipeline_mode<synchronous>, transform_indices = @transform_5, window_bounds = array<i64: 1, 32>}, {transform_indices = @transform_6, window_bounds = array<i64: 16, 32>}]} {
    %c0_i32 = arith.constant 0 : i32
    %0 = arith.cmpi eq, %arg1, %c0_i32 : i32
    %1 = arith.extui %0 : i1 to i32
    %c0_i32_0 = arith.constant 0 : i32
    %2 = arith.cmpi ne, %1, %c0_i32_0 : i32
    scf.if %2 {
      %cst_10 = arith.constant 0.000000e+00 : f32
      %13 = vector.broadcast %cst_10 : f32 to vector<16x32xf32>
      %c0_11 = arith.constant 0 : index
      %c0_12 = arith.constant 0 : index
      %14 = vector.load %arg9[%c0_11, %c0_12] : memref<16x32xf32, #tpu.memory_space<vmem>>, vector<16x32xf32>
      tpu.vector_store %arg9[%c0_11, %c0_12], %13 {strides = array<i32>} : memref<16x32xf32, #tpu.memory_space<vmem>>, vector<16x32xf32>,
    } else {
    }
    %c0 = arith.constant 0 : index
    %c0_1 = arith.constant 0 : index
    %3 = vector.load %arg9[%c0, %c0_1] : memref<16x32xf32, #tpu.memory_space<vmem>>, vector<16x32xf32>
    %c0_2 = arith.constant 0 : index
    %c0_3 = arith.constant 0 : index
    %4 = vector.load %arg2[%c0_2, %c0_3] : memref<16x32xf32, #tpu.memory_space<vmem>>, vector<16x32xf32>
    %5 = arith.truncf %4 : vector<16x32xf32> to vector<16x32xbf16>
    %c0_4 = arith.constant 0 : index
    %c0_5 = arith.constant 0 : index
    %6 = vector.load %arg3[%c0_4, %c0_5] : memref<32x32xbf16, #tpu.memory_space<vmem>>, vector<32x32xbf16>
    %cst = arith.constant dense<0.000000e+00> : vector<16x32xf32>
    %7 = tpu.matmul %5, %6, %cst {dimension_numbers = #tpu.dot_dimension_numbers<[1], [0], [0], [1], [0, 0, 1, 1], [], []>} : vector<16x32xbf16>, vector<32x32xbf16>, vector<16x32xf32> -> vector<16x32xf32>
    %8 = arith.addf %3, %7 : vector<16x32xf32>
    %c0_6 = arith.constant 0 : index
    %c0_7 = arith.constant 0 : index
    %9 = vector.load %arg9[%c0_6, %c0_7] : memref<16x32xf32, #tpu.memory_space<vmem>>, vector<16x32xf32>
    tpu.vector_store %arg9[%c0_6, %c0_7], %8 {strides = array<i32>} : memref<16x32xf32, #tpu.memory_space<vmem>>, vector<16x32xf32>,
    %c0_i32_8 = arith.constant 0 : i32
    %10 = arith.cmpi eq, %arg1, %c0_i32_8 : i32
    %11 = arith.extui %10 : i1 to i32
    %c0_i32_9 = arith.constant 0 : i32
    %12 = arith.cmpi ne, %11, %c0_i32_9 : i32
    scf.if %12 {
      %c0_10 = arith.constant 0 : index
      %c0_11 = arith.constant 0 : index
      %13 = vector.load %arg9[%c0_10, %c0_11] : memref<16x32xf32, #tpu.memory_space<vmem>>, vector<16x32xf32>
      %c0_12 = arith.constant 0 : index
      %c0_13 = arith.constant 0 : index
      %14 = vector.load %arg4[%c0_12, %c0_13] : memref<1x32xf32, #tpu.memory_space<vmem>>, vector<1x32xf32>
      %15 = vector.broadcast %14 : vector<1x32xf32> to vector<16x32xf32>
      %16 = arith.addf %13, %15 : vector<16x32xf32>
      %c0_14 = arith.constant 0 : index
      %c0_15 = arith.constant 0 : index
      %17 = vector.load %arg5[%c0_14, %c0_15] : memref<16x32xf32, #tpu.memory_space<vmem>>, vector<16x32xf32>
      %18 = arith.addf %16, %17 : vector<16x32xf32>
      %cst_16 = arith.constant dense<0.000000e+00> : vector<16xf32>
      %19 = vector.multi_reduction <add>, %18, %cst_16 [1] : vector<16x32xf32> to vector<16xf32>
      %20 = vector.shape_cast %19 : vector<16xf32> to vector<16x1xf32>
      %cst_17 = arith.constant 3.200000e+01 : f32
      %21 = vector.broadcast %cst_17 : f32 to vector<16x1xf32>
      %22 = arith.divf %20, %21 : vector<16x1xf32>
      %23 = vector.broadcast %22 : vector<16x1xf32> to vector<16x32xf32>
      %24 = arith.subf %18, %23 : vector<16x32xf32>
      %25 = arith.mulf %24, %24 : vector<16x32xf32>
      %cst_18 = arith.constant dense<0.000000e+00> : vector<16xf32>
      %26 = vector.multi_reduction <add>, %25, %cst_18 [1] : vector<16x32xf32> to vector<16xf32>
      %27 = vector.shape_cast %26 : vector<16xf32> to vector<16x1xf32>
      %cst_19 = arith.constant 3.200000e+01 : f32
      %28 = vector.broadcast %cst_19 : f32 to vector<16x1xf32>
      %29 = arith.divf %27, %28 : vector<16x1xf32>
      %30 = vector.broadcast %22 : vector<16x1xf32> to vector<16x32xf32>
      %31 = arith.subf %18, %30 : vector<16x32xf32>
      %cst_20 = arith.constant 9.99999974E-6 : f32
      %32 = vector.broadcast %cst_20 : f32 to vector<16x1xf32>
      %33 = arith.addf %29, %32 : vector<16x1xf32>
      %34 = math.rsqrt %33 : vector<16x1xf32>
      %35 = vector.broadcast %34 : vector<16x1xf32> to vector<16x32xf32>
      %36 = arith.mulf %31, %35 : vector<16x32xf32>
      %c0_21 = arith.constant 0 : index
      %c0_22 = arith.constant 0 : index
      %37 = vector.load %arg6[%c0_21, %c0_22] : memref<1x32xf32, #tpu.memory_space<vmem>>, vector<1x32xf32>
      %38 = vector.broadcast %37 : vector<1x32xf32> to vector<16x32xf32>
      %39 = arith.mulf %36, %38 : vector<16x32xf32>
      %c0_23 = arith.constant 0 : index
      %c0_24 = arith.constant 0 : index
      %40 = vector.load %arg7[%c0_23, %c0_24] : memref<1x32xf32, #tpu.memory_space<vmem>>, vector<1x32xf32>
      %41 = vector.broadcast %40 : vector<1x32xf32> to vector<16x32xf32>
      %42 = arith.addf %39, %41 : vector<16x32xf32>
      %c0_25 = arith.constant 0 : index
      %c0_26 = arith.constant 0 : index
      %43 = vector.load %arg8[%c0_25, %c0_26] : memref<16x32xf32, #tpu.memory_space<vmem>>, vector<16x32xf32>
      tpu.vector_store %arg8[%c0_25, %c0_26], %42 {strides = array<i32>} : memref<16x32xf32, #tpu.memory_space<vmem>>, vector<16x32xf32>,
    } else {
    }
    return
  }
  func.func @transform_0(%arg0: i32, %arg1: i32) -> (i32, i32) {
    %c0_i32 = arith.constant 0 : i32
    return %arg0, %arg1 : i32, i32
  }
  func.func @transform_1(%arg0: i32, %arg1: i32) -> (i32, i32) {
    %c0_i32 = arith.constant 0 : i32
    %c0_i32_0 = arith.constant 0 : i32
    return %arg1, %c0_i32 : i32, i32
  }
  func.func @transform_2(%arg0: i32, %arg1: i32) -> (i32, i32) {
    %c0_i32 = arith.constant 0 : i32
    %c0_i32_0 = arith.constant 0 : i32
    %c0_i32_1 = arith.constant 0 : i32
    return %c0_i32, %c0_i32_0 : i32, i32
  }
  func.func @transform_3(%arg0: i32, %arg1: i32) -> (i32, i32) {
    %c0_i32 = arith.constant 0 : i32
    %c0_i32_0 = arith.constant 0 : i32
    return %arg0, %c0_i32 : i32, i32
  }
  func.func @transform_4(%arg0: i32, %arg1: i32) -> (i32, i32) {
    %c0_i32 = arith.constant 0 : i32
    %c0_i32_0 = arith.constant 0 : i32
    %c0_i32_1 = arith.constant 0 : i32
    return %c0_i32, %c0_i32_0 : i32, i32
  }
  func.func @transform_5(%arg0: i32, %arg1: i32) -> (i32, i32) {
    %c0_i32 = arith.constant 0 : i32
    %c0_i32_0 = arith.constant 0 : i32
    %c0_i32_1 = arith.constant 0 : i32
    return %c0_i32, %c0_i32_0 : i32, i32
  }
  func.func @transform_6(%arg0: i32, %arg1: i32) -> (i32, i32) {
    %c0_i32 = arith.constant 0 : i32
    %c0_i32_0 = arith.constant 0 : i32
    return %arg0, %c0_i32 : i32, i32
  }
}

module attributes {stable_mosaic.version = 11 : i64} {
  func.func @_mm_bias_kernel(%arg0: i32, %arg1: i32, %arg2: i32, %arg3: memref<16x32xf32, #tpu.memory_space<vmem>>, %arg4: memref<32x32xbf16, #tpu.memory_space<vmem>>, %arg5: memref<1x32xf32, #tpu.memory_space<vmem>>, %arg6: memref<16x32xf32, #tpu.memory_space<vmem>>, %arg7: memref<16x32xf32, #tpu.memory_space<vmem>>) attributes {dimension_semantics = [#tpu.dimension_semantics<parallel>, #tpu.dimension_semantics<parallel>, #tpu.dimension_semantics<arbitrary>], iteration_bounds = array<i64: 1, 1, 1>, scalar_prefetch = 0 : i64, scratch_operands = 1 : i64, tpu.core_type = #tpu.core_type<tc>, window_params = [{transform_indices = @transform_0, window_bounds = array<i64: 16, 32>}, {transform_indices = @transform_1, window_bounds = array<i64: 32, 32>}, {transform_indices = @transform_2, window_bounds = array<i64: 1, 32>}, {transform_indices = @transform_3, window_bounds = array<i64: 16, 32>}]} {
    %c0_i32 = arith.constant 0 : i32
    %0 = arith.cmpi eq, %arg2, %c0_i32 : i32
    %1 = arith.extui %0 : i1 to i32
    %c0_i32_0 = arith.constant 0 : i32
    %2 = arith.cmpi ne, %1, %c0_i32_0 : i32
    scf.if %2 {
      %cst_10 = arith.constant 0.000000e+00 : f32
      %13 = vector.broadcast %cst_10 : f32 to vector<16x32xf32>
      %c0_11 = arith.constant 0 : index
      %c0_12 = arith.constant 0 : index
      %14 = vector.load %arg7[%c0_11, %c0_12] : memref<16x32xf32, #tpu.memory_space<vmem>>, vector<16x32xf32>
      tpu.vector_store %arg7[%c0_11, %c0_12], %13 {strides = array<i32>} : memref<16x32xf32, #tpu.memory_space<vmem>>, vector<16x32xf32>,
    } else {
    }
    %c0 = arith.constant 0 : index
    %c0_1 = arith.constant 0 : index
    %3 = vector.load %arg7[%c0, %c0_1] : memref<16x32xf32, #tpu.memory_space<vmem>>, vector<16x32xf32>
    %c0_2 = arith.constant 0 : index
    %c0_3 = arith.constant 0 : index
    %4 = vector.load %arg3[%c0_2, %c0_3] : memref<16x32xf32, #tpu.memory_space<vmem>>, vector<16x32xf32>
    %5 = arith.truncf %4 : vector<16x32xf32> to vector<16x32xbf16>
    %c0_4 = arith.constant 0 : index
    %c0_5 = arith.constant 0 : index
    %6 = vector.load %arg4[%c0_4, %c0_5] : memref<32x32xbf16, #tpu.memory_space<vmem>>, vector<32x32xbf16>
    %cst = arith.constant dense<0.000000e+00> : vector<16x32xf32>
    %7 = tpu.matmul %5, %6, %cst {dimension_numbers = #tpu.dot_dimension_numbers<[1], [0], [0], [1], [0, 0, 1, 1], [], []>} : vector<16x32xbf16>, vector<32x32xbf16>, vector<16x32xf32> -> vector<16x32xf32>
    %8 = arith.addf %3, %7 : vector<16x32xf32>
    %c0_6 = arith.constant 0 : index
    %c0_7 = arith.constant 0 : index
    %9 = vector.load %arg7[%c0_6, %c0_7] : memref<16x32xf32, #tpu.memory_space<vmem>>, vector<16x32xf32>
    tpu.vector_store %arg7[%c0_6, %c0_7], %8 {strides = array<i32>} : memref<16x32xf32, #tpu.memory_space<vmem>>, vector<16x32xf32>,
    %c0_i32_8 = arith.constant 0 : i32
    %10 = arith.cmpi eq, %arg2, %c0_i32_8 : i32
    %11 = arith.extui %10 : i1 to i32
    %c0_i32_9 = arith.constant 0 : i32
    %12 = arith.cmpi ne, %11, %c0_i32_9 : i32
    scf.if %12 {
      %c0_10 = arith.constant 0 : index
      %c0_11 = arith.constant 0 : index
      %13 = vector.load %arg7[%c0_10, %c0_11] : memref<16x32xf32, #tpu.memory_space<vmem>>, vector<16x32xf32>
      %c0_12 = arith.constant 0 : index
      %c0_13 = arith.constant 0 : index
      %14 = vector.load %arg5[%c0_12, %c0_13] : memref<1x32xf32, #tpu.memory_space<vmem>>, vector<1x32xf32>
      %15 = vector.broadcast %14 : vector<1x32xf32> to vector<16x32xf32>
      %16 = arith.addf %13, %15 : vector<16x32xf32>
      %c0_14 = arith.constant 0 : index
      %c0_15 = arith.constant 0 : index
      %17 = vector.load %arg6[%c0_14, %c0_15] : memref<16x32xf32, #tpu.memory_space<vmem>>, vector<16x32xf32>
      tpu.vector_store %arg6[%c0_14, %c0_15], %16 {strides = array<i32>} : memref<16x32xf32, #tpu.memory_space<vmem>>, vector<16x32xf32>,
    } else {
    }
    return
  }
  func.func @transform_0(%arg0: i32, %arg1: i32, %arg2: i32) -> (i32, i32) {
    %c0_i32 = arith.constant 0 : i32
    return %arg0, %arg2 : i32, i32
  }
  func.func @transform_1(%arg0: i32, %arg1: i32, %arg2: i32) -> (i32, i32) {
    %c0_i32 = arith.constant 0 : i32
    return %arg2, %arg1 : i32, i32
  }
  func.func @transform_2(%arg0: i32, %arg1: i32, %arg2: i32) -> (i32, i32) {
    %c0_i32 = arith.constant 0 : i32
    %c0_i32_0 = arith.constant 0 : i32
    return %c0_i32, %arg1 : i32, i32
  }
  func.func @transform_3(%arg0: i32, %arg1: i32, %arg2: i32) -> (i32, i32) {
    %c0_i32 = arith.constant 0 : i32
    return %arg0, %arg1 : i32, i32
  }
}

module attributes {stable_mosaic.version = 11 : i64} {
  func.func @_mm_bias_kernel(%arg0: i32, %arg1: i32, %arg2: i32, %arg3: memref<16x32xf32, #tpu.memory_space<vmem>>, %arg4: memref<32x64xbf16, #tpu.memory_space<vmem>>, %arg5: memref<1x64xf32, #tpu.memory_space<vmem>>, %arg6: memref<16x64xf32, #tpu.memory_space<vmem>>, %arg7: memref<16x64xf32, #tpu.memory_space<vmem>>) attributes {dimension_semantics = [#tpu.dimension_semantics<parallel>, #tpu.dimension_semantics<parallel>, #tpu.dimension_semantics<arbitrary>], iteration_bounds = array<i64: 1, 1, 1>, scalar_prefetch = 0 : i64, scratch_operands = 1 : i64, tpu.core_type = #tpu.core_type<tc>, window_params = [{transform_indices = @transform_0, window_bounds = array<i64: 16, 32>}, {transform_indices = @transform_1, window_bounds = array<i64: 32, 64>}, {transform_indices = @transform_2, window_bounds = array<i64: 1, 64>}, {transform_indices = @transform_3, window_bounds = array<i64: 16, 64>}]} {
    %c0_i32 = arith.constant 0 : i32
    %0 = arith.cmpi eq, %arg2, %c0_i32 : i32
    %1 = arith.extui %0 : i1 to i32
    %c0_i32_0 = arith.constant 0 : i32
    %2 = arith.cmpi ne, %1, %c0_i32_0 : i32
    scf.if %2 {
      %cst_10 = arith.constant 0.000000e+00 : f32
      %13 = vector.broadcast %cst_10 : f32 to vector<16x64xf32>
      %c0_11 = arith.constant 0 : index
      %c0_12 = arith.constant 0 : index
      %14 = vector.load %arg7[%c0_11, %c0_12] : memref<16x64xf32, #tpu.memory_space<vmem>>, vector<16x64xf32>
      tpu.vector_store %arg7[%c0_11, %c0_12], %13 {strides = array<i32>} : memref<16x64xf32, #tpu.memory_space<vmem>>, vector<16x64xf32>,
    } else {
    }
    %c0 = arith.constant 0 : index
    %c0_1 = arith.constant 0 : index
    %3 = vector.load %arg7[%c0, %c0_1] : memref<16x64xf32, #tpu.memory_space<vmem>>, vector<16x64xf32>
    %c0_2 = arith.constant 0 : index
    %c0_3 = arith.constant 0 : index
    %4 = vector.load %arg3[%c0_2, %c0_3] : memref<16x32xf32, #tpu.memory_space<vmem>>, vector<16x32xf32>
    %5 = arith.truncf %4 : vector<16x32xf32> to vector<16x32xbf16>
    %c0_4 = arith.constant 0 : index
    %c0_5 = arith.constant 0 : index
    %6 = vector.load %arg4[%c0_4, %c0_5] : memref<32x64xbf16, #tpu.memory_space<vmem>>, vector<32x64xbf16>
    %cst = arith.constant dense<0.000000e+00> : vector<16x64xf32>
    %7 = tpu.matmul %5, %6, %cst {dimension_numbers = #tpu.dot_dimension_numbers<[1], [0], [0], [1], [0, 0, 1, 1], [], []>} : vector<16x32xbf16>, vector<32x64xbf16>, vector<16x64xf32> -> vector<16x64xf32>
    %8 = arith.addf %3, %7 : vector<16x64xf32>
    %c0_6 = arith.constant 0 : index
    %c0_7 = arith.constant 0 : index
    %9 = vector.load %arg7[%c0_6, %c0_7] : memref<16x64xf32, #tpu.memory_space<vmem>>, vector<16x64xf32>
    tpu.vector_store %arg7[%c0_6, %c0_7], %8 {strides = array<i32>} : memref<16x64xf32, #tpu.memory_space<vmem>>, vector<16x64xf32>,
    %c0_i32_8 = arith.constant 0 : i32
    %10 = arith.cmpi eq, %arg2, %c0_i32_8 : i32
    %11 = arith.extui %10 : i1 to i32
    %c0_i32_9 = arith.constant 0 : i32
    %12 = arith.cmpi ne, %11, %c0_i32_9 : i32
    scf.if %12 {
      %c0_10 = arith.constant 0 : index
      %c0_11 = arith.constant 0 : index
      %13 = vector.load %arg7[%c0_10, %c0_11] : memref<16x64xf32, #tpu.memory_space<vmem>>, vector<16x64xf32>
      %c0_12 = arith.constant 0 : index
      %c0_13 = arith.constant 0 : index
      %14 = vector.load %arg5[%c0_12, %c0_13] : memref<1x64xf32, #tpu.memory_space<vmem>>, vector<1x64xf32>
      %15 = vector.broadcast %14 : vector<1x64xf32> to vector<16x64xf32>
      %16 = arith.addf %13, %15 : vector<16x64xf32>
      %c0_14 = arith.constant 0 : index
      %c0_15 = arith.constant 0 : index
      %17 = vector.load %arg6[%c0_14, %c0_15] : memref<16x64xf32, #tpu.memory_space<vmem>>, vector<16x64xf32>
      tpu.vector_store %arg6[%c0_14, %c0_15], %16 {strides = array<i32>} : memref<16x64xf32, #tpu.memory_space<vmem>>, vector<16x64xf32>,
    } else {
    }
    return
  }
  func.func @transform_0(%arg0: i32, %arg1: i32, %arg2: i32) -> (i32, i32) {
    %c0_i32 = arith.constant 0 : i32
    return %arg0, %arg2 : i32, i32
  }
  func.func @transform_1(%arg0: i32, %arg1: i32, %arg2: i32) -> (i32, i32) {
    %c0_i32 = arith.constant 0 : i32
    return %arg2, %arg1 : i32, i32
  }
  func.func @transform_2(%arg0: i32, %arg1: i32, %arg2: i32) -> (i32, i32) {
    %c0_i32 = arith.constant 0 : i32
    %c0_i32_0 = arith.constant 0 : i32
    return %c0_i32, %arg1 : i32, i32
  }
  func.func @transform_3(%arg0: i32, %arg1: i32, %arg2: i32) -> (i32, i32) {
    %c0_i32 = arith.constant 0 : i32
    return %arg0, %arg1 : i32, i32
  }
}

module attributes {stable_mosaic.version = 11 : i64} {
  func.func @_flash_attn_kernel(%arg0: i32, %arg1: i32, %arg2: i32, %arg3: memref<1x8x32xf32, #tpu.memory_space<vmem>>, %arg4: memref<1x8x32xf32, #tpu.memory_space<vmem>>, %arg5: memref<1x8x32xf32, #tpu.memory_space<vmem>>, %arg6: memref<1x8x32xf32, #tpu.memory_space<vmem>>, %arg7: memref<4x8x1xf32, #tpu.memory_space<vmem>>, %arg8: memref<4x8x1xf32, #tpu.memory_space<vmem>>, %arg9: memref<4x8x8xf32, #tpu.memory_space<vmem>>) attributes {dimension_semantics = [#tpu.dimension_semantics<parallel>, #tpu.dimension_semantics<parallel>, #tpu.dimension_semantics<arbitrary>], iteration_bounds = array<i64: 2, 1, 1>, scalar_prefetch = 0 : i64, scratch_operands = 3 : i64, tpu.core_type = #tpu.core_type<tc>, window_params = [{transform_indices = @transform_0, window_bounds = array<i64: 1, 8, 32>}, {transform_indices = @transform_1, window_bounds = array<i64: 1, 8, 32>}, {transform_indices = @transform_2, window_bounds = array<i64: 1, 8, 32>}, {transform_indices = @transform_3, window_bounds = array<i64: 1, 8, 32>}]} {
    %c0_i32 = arith.constant 0 : i32
    %0 = arith.cmpi eq, %arg2, %c0_i32 : i32
    %1 = arith.extui %0 : i1 to i32
    %c0_i32_0 = arith.constant 0 : i32
    %2 = arith.cmpi ne, %1, %c0_i32_0 : i32
    scf.if %2 {
      %cst_95 = arith.constant 0xFF800000 : f32
      %168 = vector.broadcast %cst_95 : f32 to vector<4x8x1xf32>
      %c0_96 = arith.constant 0 : index
      %c0_97 = arith.constant 0 : index
      %c0_98 = arith.constant 0 : index
      %169 = vector.load %arg7[%c0_96, %c0_97, %c0_98] : memref<4x8x1xf32, #tpu.memory_space<vmem>>, vector<4x8x1xf32>
      tpu.vector_store %arg7[%c0_96, %c0_97, %c0_98], %168 {strides = array<i32>} : memref<4x8x1xf32, #tpu.memory_space<vmem>>, vector<4x8x1xf32>,
      %cst_99 = arith.constant 0.000000e+00 : f32
      %170 = vector.broadcast %cst_99 : f32 to vector<4x8x1xf32>
      %c0_100 = arith.constant 0 : index
      %c0_101 = arith.constant 0 : index
      %c0_102 = arith.constant 0 : index
      %171 = vector.load %arg8[%c0_100, %c0_101, %c0_102] : memref<4x8x1xf32, #tpu.memory_space<vmem>>, vector<4x8x1xf32>
      tpu.vector_store %arg8[%c0_100, %c0_101, %c0_102], %170 {strides = array<i32>} : memref<4x8x1xf32, #tpu.memory_space<vmem>>, vector<4x8x1xf32>,
      %cst_103 = arith.constant 0.000000e+00 : f32
      %172 = vector.broadcast %cst_103 : f32 to vector<4x8x8xf32>
      %c0_104 = arith.constant 0 : index
      %c0_105 = arith.constant 0 : index
      %c0_106 = arith.constant 0 : index
      %173 = vector.load %arg9[%c0_104, %c0_105, %c0_106] : memref<4x8x8xf32, #tpu.memory_space<vmem>>, vector<4x8x8xf32>
      tpu.vector_store %arg9[%c0_104, %c0_105, %c0_106], %172 {strides = array<i32>} : memref<4x8x8xf32, #tpu.memory_space<vmem>>, vector<4x8x8xf32>,
    } else {
    }
    %c0 = arith.constant 0 : index
    %c0_1 = arith.constant 0 : index
    %c0_2 = arith.constant 0 : index
    %3 = vector.load %arg3[%c0, %c0_1, %c0_2] : memref<1x8x32xf32, #tpu.memory_space<vmem>>, vector<1x8x32xf32>
    %4 = vector.shape_cast %3 : vector<1x8x32xf32> to vector<8x32xf32>
    %c0_3 = arith.constant 0 : index
    %c0_4 = arith.constant 0 : index
    %c0_5 = arith.constant 0 : index
    %5 = vector.load %arg4[%c0_3, %c0_4, %c0_5] : memref<1x8x32xf32, #tpu.memory_space<vmem>>, vector<1x8x32xf32>
    %6 = vector.shape_cast %5 : vector<1x8x32xf32> to vector<8x32xf32>
    %c0_6 = arith.constant 0 : index
    %c0_7 = arith.constant 0 : index
    %c0_8 = arith.constant 0 : index
    %7 = vector.load %arg5[%c0_6, %c0_7, %c0_8] : memref<1x8x32xf32, #tpu.memory_space<vmem>>, vector<1x8x32xf32>
    %8 = vector.shape_cast %7 : vector<1x8x32xf32> to vector<8x32xf32>
    %9 = vector.extract_strided_slice %4 {offsets = [0, 0], sizes = [8, 8], strides = [1, 1]} : vector<8x32xf32> to vector<8x8xf32>
    %10 = arith.truncf %9 : vector<8x8xf32> to vector<8x8xbf16>
    %11 = vector.extract_strided_slice %6 {offsets = [0, 0], sizes = [8, 8], strides = [1, 1]} : vector<8x32xf32> to vector<8x8xf32>
    %12 = arith.truncf %11 : vector<8x8xf32> to vector<8x8xbf16>
    %13 = vector.extract_strided_slice %8 {offsets = [0, 0], sizes = [8, 8], strides = [1, 1]} : vector<8x32xf32> to vector<8x8xf32>
    %14 = arith.truncf %13 : vector<8x8xf32> to vector<8x8xbf16>
    %cst = arith.constant dense<0.000000e+00> : vector<8x8xf32>
    %15 = tpu.matmul %10, %12, %cst {dimension_numbers = #tpu.dot_dimension_numbers<[1], [1], [0], [0], [0, 0, 1, 0], [], []>} : vector<8x8xbf16>, vector<8x8xbf16>, vector<8x8xf32> -> vector<8x8xf32>
    %c0_9 = arith.constant 0 : index
    %c0_10 = arith.constant 0 : index
    %c0_11 = arith.constant 0 : index
    %16 = vector.load %arg7[%c0_9, %c0_10, %c0_11] : memref<4x8x1xf32, #tpu.memory_space<vmem>>, vector<1x8x1xf32>
    %17 = vector.shape_cast %16 : vector<1x8x1xf32> to vector<8x1xf32>
    %cst_12 = arith.constant dense<0xFF800000> : vector<8xf32>
    %18 = vector.multi_reduction <maximumf>, %15, %cst_12 [1] : vector<8x8xf32> to vector<8xf32>
    %19 = vector.shape_cast %18 : vector<8xf32> to vector<8x1xf32>
    %20 = arith.maximumf %17, %19 : vector<8x1xf32>
    %21 = arith.subf %17, %20 : vector<8x1xf32>
    %22 = math.exp %21 : vector<8x1xf32>
    %23 = vector.broadcast %20 : vector<8x1xf32> to vector<8x8xf32>
    %24 = arith.subf %15, %23 : vector<8x8xf32>
    %25 = math.exp %24 : vector<8x8xf32>
    %c0_13 = arith.constant 0 : index
    %c0_14 = arith.constant 0 : index
    %c0_15 = arith.constant 0 : index
    %26 = vector.load %arg8[%c0_13, %c0_14, %c0_15] : memref<4x8x1xf32, #tpu.memory_space<vmem>>, vector<1x8x1xf32>
    %27 = vector.shape_cast %26 : vector<1x8x1xf32> to vector<8x1xf32>
    %28 = arith.mulf %22, %27 : vector<8x1xf32>
    %cst_16 = arith.constant dense<0.000000e+00> : vector<8xf32>
    %29 = vector.multi_reduction <add>, %25, %cst_16 [1] : vector<8x8xf32> to vector<8xf32>
    %30 = vector.shape_cast %29 : vector<8xf32> to vector<8x1xf32>
    %31 = arith.addf %28, %30 : vector<8x1xf32>
    %c0_17 = arith.constant 0 : index
    %c0_18 = arith.constant 0 : index
    %c0_19 = arith.constant 0 : index
    %32 = vector.load %arg8[%c0_17, %c0_18, %c0_19] : memref<4x8x1xf32, #tpu.memory_space<vmem>>, vector<1x8x1xf32>
    %33 = vector.shape_cast %32 : vector<1x8x1xf32> to vector<8x1xf32>
    %34 = vector.shape_cast %31 : vector<8x1xf32> to vector<1x8x1xf32>
    tpu.vector_store %arg8[%c0_17, %c0_18, %c0_19], %34 {strides = array<i32>} : memref<4x8x1xf32, #tpu.memory_space<vmem>>, vector<1x8x1xf32>,
    %c0_20 = arith.constant 0 : index
    %c0_21 = arith.constant 0 : index
    %c0_22 = arith.constant 0 : index
    %35 = vector.load %arg9[%c0_20, %c0_21, %c0_22] : memref<4x8x8xf32, #tpu.memory_space<vmem>>, vector<1x8x8xf32>
    %36 = vector.shape_cast %35 : vector<1x8x8xf32> to vector<8x8xf32>
    %37 = vector.broadcast %22 : vector<8x1xf32> to vector<8x8xf32>
    %38 = arith.mulf %37, %36 : vector<8x8xf32>
    %39 = arith.truncf %25 : vector<8x8xf32> to vector<8x8xbf16>
    %cst_23 = arith.constant dense<0.000000e+00> : vector<8x8xf32>
    %40 = tpu.matmul %39, %14, %cst_23 {dimension_numbers = #tpu.dot_dimension_numbers<[1], [0], [0], [1], [0, 0, 1, 1], [], []>} : vector<8x8xbf16>, vector<8x8xbf16>, vector<8x8xf32> -> vector<8x8xf32>
    %41 = arith.addf %38, %40 : vector<8x8xf32>
    %c0_24 = arith.constant 0 : index
    %c0_25 = arith.constant 0 : index
    %c0_26 = arith.constant 0 : index
    %42 = vector.load %arg9[%c0_24, %c0_25, %c0_26] : memref<4x8x8xf32, #tpu.memory_space<vmem>>, vector<1x8x8xf32>
    %43 = vector.shape_cast %42 : vector<1x8x8xf32> to vector<8x8xf32>
    %44 = vector.shape_cast %41 : vector<8x8xf32> to vector<1x8x8xf32>
    tpu.vector_store %arg9[%c0_24, %c0_25, %c0_26], %44 {strides = array<i32>} : memref<4x8x8xf32, #tpu.memory_space<vmem>>, vector<1x8x8xf32>,
    %c0_27 = arith.constant 0 : index
    %c0_28 = arith.constant 0 : index
    %c0_29 = arith.constant 0 : index
    %45 = vector.load %arg7[%c0_27, %c0_28, %c0_29] : memref<4x8x1xf32, #tpu.memory_space<vmem>>, vector<1x8x1xf32>
    %46 = vector.shape_cast %45 : vector<1x8x1xf32> to vector<8x1xf32>
    %47 = vector.shape_cast %20 : vector<8x1xf32> to vector<1x8x1xf32>
    tpu.vector_store %arg7[%c0_27, %c0_28, %c0_29], %47 {strides = array<i32>} : memref<4x8x1xf32, #tpu.memory_space<vmem>>, vector<1x8x1xf32>,
    %48 = vector.extract_strided_slice %4 {offsets = [0, 8], sizes = [8, 8], strides = [1, 1]} : vector<8x32xf32> to vector<8x8xf32>
    %49 = arith.truncf %48 : vector<8x8xf32> to vector<8x8xbf16>
    %50 = vector.extract_strided_slice %6 {offsets = [0, 8], sizes = [8, 8], strides = [1, 1]} : vector<8x32xf32> to vector<8x8xf32>
    %51 = arith.truncf %50 : vector<8x8xf32> to vector<8x8xbf16>
    %52 = vector.extract_strided_slice %8 {offsets = [0, 8], sizes = [8, 8], strides = [1, 1]} : vector<8x32xf32> to vector<8x8xf32>
    %53 = arith.truncf %52 : vector<8x8xf32> to vector<8x8xbf16>
    %cst_30 = arith.constant dense<0.000000e+00> : vector<8x8xf32>
    %54 = tpu.matmul %49, %51, %cst_30 {dimension_numbers = #tpu.dot_dimension_numbers<[1], [1], [0], [0], [0, 0, 1, 0], [], []>} : vector<8x8xbf16>, vector<8x8xbf16>, vector<8x8xf32> -> vector<8x8xf32>
    %c1 = arith.constant 1 : index
    %c0_31 = arith.constant 0 : index
    %c0_32 = arith.constant 0 : index
    %55 = vector.load %arg7[%c1, %c0_31, %c0_32] : memref<4x8x1xf32, #tpu.memory_space<vmem>>, vector<1x8x1xf32>
    %56 = vector.shape_cast %55 : vector<1x8x1xf32> to vector<8x1xf32>
    %cst_33 = arith.constant dense<0xFF800000> : vector<8xf32>
    %57 = vector.multi_reduction <maximumf>, %54, %cst_33 [1] : vector<8x8xf32> to vector<8xf32>
    %58 = vector.shape_cast %57 : vector<8xf32> to vector<8x1xf32>
    %59 = arith.maximumf %56, %58 : vector<8x1xf32>
    %60 = arith.subf %56, %59 : vector<8x1xf32>
    %61 = math.exp %60 : vector<8x1xf32>
    %62 = vector.broadcast %59 : vector<8x1xf32> to vector<8x8xf32>
    %63 = arith.subf %54, %62 : vector<8x8xf32>
    %64 = math.exp %63 : vector<8x8xf32>
    %c1_34 = arith.constant 1 : index
    %c0_35 = arith.constant 0 : index
    %c0_36 = arith.constant 0 : index
    %65 = vector.load %arg8[%c1_34, %c0_35, %c0_36] : memref<4x8x1xf32, #tpu.memory_space<vmem>>, vector<1x8x1xf32>
    %66 = vector.shape_cast %65 : vector<1x8x1xf32> to vector<8x1xf32>
    %67 = arith.mulf %61, %66 : vector<8x1xf32>
    %cst_37 = arith.constant dense<0.000000e+00> : vector<8xf32>
    %68 = vector.multi_reduction <add>, %64, %cst_37 [1] : vector<8x8xf32> to vector<8xf32>
    %69 = vector.shape_cast %68 : vector<8xf32> to vector<8x1xf32>
    %70 = arith.addf %67, %69 : vector<8x1xf32>
    %c1_38 = arith.constant 1 : index
    %c0_39 = arith.constant 0 : index
    %c0_40 = arith.constant 0 : index
    %71 = vector.load %arg8[%c1_38, %c0_39, %c0_40] : memref<4x8x1xf32, #tpu.memory_space<vmem>>, vector<1x8x1xf32>
    %72 = vector.shape_cast %71 : vector<1x8x1xf32> to vector<8x1xf32>
    %73 = vector.shape_cast %70 : vector<8x1xf32> to vector<1x8x1xf32>
    tpu.vector_store %arg8[%c1_38, %c0_39, %c0_40], %73 {strides = array<i32>} : memref<4x8x1xf32, #tpu.memory_space<vmem>>, vector<1x8x1xf32>,
    %c1_41 = arith.constant 1 : index
    %c0_42 = arith.constant 0 : index
    %c0_43 = arith.constant 0 : index
    %74 = vector.load %arg9[%c1_41, %c0_42, %c0_43] : memref<4x8x8xf32, #tpu.memory_space<vmem>>, vector<1x8x8xf32>
    %75 = vector.shape_cast %74 : vector<1x8x8xf32> to vector<8x8xf32>
    %76 = vector.broadcast %61 : vector<8x1xf32> to vector<8x8xf32>
    %77 = arith.mulf %76, %75 : vector<8x8xf32>
    %78 = arith.truncf %64 : vector<8x8xf32> to vector<8x8xbf16>
    %cst_44 = arith.constant dense<0.000000e+00> : vector<8x8xf32>
    %79 = tpu.matmul %78, %53, %cst_44 {dimension_numbers = #tpu.dot_dimension_numbers<[1], [0], [0], [1], [0, 0, 1, 1], [], []>} : vector<8x8xbf16>, vector<8x8xbf16>, vector<8x8xf32> -> vector<8x8xf32>
    %80 = arith.addf %77, %79 : vector<8x8xf32>
    %c1_45 = arith.constant 1 : index
    %c0_46 = arith.constant 0 : index
    %c0_47 = arith.constant 0 : index
    %81 = vector.load %arg9[%c1_45, %c0_46, %c0_47] : memref<4x8x8xf32, #tpu.memory_space<vmem>>, vector<1x8x8xf32>
    %82 = vector.shape_cast %81 : vector<1x8x8xf32> to vector<8x8xf32>
    %83 = vector.shape_cast %80 : vector<8x8xf32> to vector<1x8x8xf32>
    tpu.vector_store %arg9[%c1_45, %c0_46, %c0_47], %83 {strides = array<i32>} : memref<4x8x8xf32, #tpu.memory_space<vmem>>, vector<1x8x8xf32>,
    %c1_48 = arith.constant 1 : index
    %c0_49 = arith.constant 0 : index
    %c0_50 = arith.constant 0 : index
    %84 = vector.load %arg7[%c1_48, %c0_49, %c0_50] : memref<4x8x1xf32, #tpu.memory_space<vmem>>, vector<1x8x1xf32>
    %85 = vector.shape_cast %84 : vector<1x8x1xf32> to vector<8x1xf32>
    %86 = vector.shape_cast %59 : vector<8x1xf32> to vector<1x8x1xf32>
    tpu.vector_store %arg7[%c1_48, %c0_49, %c0_50], %86 {strides = array<i32>} : memref<4x8x1xf32, #tpu.memory_space<vmem>>, vector<1x8x1xf32>,
    %87 = vector.extract_strided_slice %4 {offsets = [0, 16], sizes = [8, 8], strides = [1, 1]} : vector<8x32xf32> to vector<8x8xf32>
    %88 = arith.truncf %87 : vector<8x8xf32> to vector<8x8xbf16>
    %89 = vector.extract_strided_slice %6 {offsets = [0, 16], sizes = [8, 8], strides = [1, 1]} : vector<8x32xf32> to vector<8x8xf32>
    %90 = arith.truncf %89 : vector<8x8xf32> to vector<8x8xbf16>
    %91 = vector.extract_strided_slice %8 {offsets = [0, 16], sizes = [8, 8], strides = [1, 1]} : vector<8x32xf32> to vector<8x8xf32>
    %92 = arith.truncf %91 : vector<8x8xf32> to vector<8x8xbf16>
    %cst_51 = arith.constant dense<0.000000e+00> : vector<8x8xf32>
    %93 = tpu.matmul %88, %90, %cst_51 {dimension_numbers = #tpu.dot_dimension_numbers<[1], [1], [0], [0], [0, 0, 1, 0], [], []>} : vector<8x8xbf16>, vector<8x8xbf16>, vector<8x8xf32> -> vector<8x8xf32>
    %c2 = arith.constant 2 : index
    %c0_52 = arith.constant 0 : index
    %c0_53 = arith.constant 0 : index
    %94 = vector.load %arg7[%c2, %c0_52, %c0_53] : memref<4x8x1xf32, #tpu.memory_space<vmem>>, vector<1x8x1xf32>
    %95 = vector.shape_cast %94 : vector<1x8x1xf32> to vector<8x1xf32>
    %cst_54 = arith.constant dense<0xFF800000> : vector<8xf32>
    %96 = vector.multi_reduction <maximumf>, %93, %cst_54 [1] : vector<8x8xf32> to vector<8xf32>
    %97 = vector.shape_cast %96 : vector<8xf32> to vector<8x1xf32>
    %98 = arith.maximumf %95, %97 : vector<8x1xf32>
    %99 = arith.subf %95, %98 : vector<8x1xf32>
    %100 = math.exp %99 : vector<8x1xf32>
    %101 = vector.broadcast %98 : vector<8x1xf32> to vector<8x8xf32>
    %102 = arith.subf %93, %101 : vector<8x8xf32>
    %103 = math.exp %102 : vector<8x8xf32>
    %c2_55 = arith.constant 2 : index
    %c0_56 = arith.constant 0 : index
    %c0_57 = arith.constant 0 : index
    %104 = vector.load %arg8[%c2_55, %c0_56, %c0_57] : memref<4x8x1xf32, #tpu.memory_space<vmem>>, vector<1x8x1xf32>
    %105 = vector.shape_cast %104 : vector<1x8x1xf32> to vector<8x1xf32>
    %106 = arith.mulf %100, %105 : vector<8x1xf32>
    %cst_58 = arith.constant dense<0.000000e+00> : vector<8xf32>
    %107 = vector.multi_reduction <add>, %103, %cst_58 [1] : vector<8x8xf32> to vector<8xf32>
    %108 = vector.shape_cast %107 : vector<8xf32> to vector<8x1xf32>
    %109 = arith.addf %106, %108 : vector<8x1xf32>
    %c2_59 = arith.constant 2 : index
    %c0_60 = arith.constant 0 : index
    %c0_61 = arith.constant 0 : index
    %110 = vector.load %arg8[%c2_59, %c0_60, %c0_61] : memref<4x8x1xf32, #tpu.memory_space<vmem>>, vector<1x8x1xf32>
    %111 = vector.shape_cast %110 : vector<1x8x1xf32> to vector<8x1xf32>
    %112 = vector.shape_cast %109 : vector<8x1xf32> to vector<1x8x1xf32>
    tpu.vector_store %arg8[%c2_59, %c0_60, %c0_61], %112 {strides = array<i32>} : memref<4x8x1xf32, #tpu.memory_space<vmem>>, vector<1x8x1xf32>,
    %c2_62 = arith.constant 2 : index
    %c0_63 = arith.constant 0 : index
    %c0_64 = arith.constant 0 : index
    %113 = vector.load %arg9[%c2_62, %c0_63, %c0_64] : memref<4x8x8xf32, #tpu.memory_space<vmem>>, vector<1x8x8xf32>
    %114 = vector.shape_cast %113 : vector<1x8x8xf32> to vector<8x8xf32>
    %115 = vector.broadcast %100 : vector<8x1xf32> to vector<8x8xf32>
    %116 = arith.mulf %115, %114 : vector<8x8xf32>
    %117 = arith.truncf %103 : vector<8x8xf32> to vector<8x8xbf16>
    %cst_65 = arith.constant dense<0.000000e+00> : vector<8x8xf32>
    %118 = tpu.matmul %117, %92, %cst_65 {dimension_numbers = #tpu.dot_dimension_numbers<[1], [0], [0], [1], [0, 0, 1, 1], [], []>} : vector<8x8xbf16>, vector<8x8xbf16>, vector<8x8xf32> -> vector<8x8xf32>
    %119 = arith.addf %116, %118 : vector<8x8xf32>
    %c2_66 = arith.constant 2 : index
    %c0_67 = arith.constant 0 : index
    %c0_68 = arith.constant 0 : index
    %120 = vector.load %arg9[%c2_66, %c0_67, %c0_68] : memref<4x8x8xf32, #tpu.memory_space<vmem>>, vector<1x8x8xf32>
    %121 = vector.shape_cast %120 : vector<1x8x8xf32> to vector<8x8xf32>
    %122 = vector.shape_cast %119 : vector<8x8xf32> to vector<1x8x8xf32>
    tpu.vector_store %arg9[%c2_66, %c0_67, %c0_68], %122 {strides = array<i32>} : memref<4x8x8xf32, #tpu.memory_space<vmem>>, vector<1x8x8xf32>,
    %c2_69 = arith.constant 2 : index
    %c0_70 = arith.constant 0 : index
    %c0_71 = arith.constant 0 : index
    %123 = vector.load %arg7[%c2_69, %c0_70, %c0_71] : memref<4x8x1xf32, #tpu.memory_space<vmem>>, vector<1x8x1xf32>
    %124 = vector.shape_cast %123 : vector<1x8x1xf32> to vector<8x1xf32>
    %125 = vector.shape_cast %98 : vector<8x1xf32> to vector<1x8x1xf32>
    tpu.vector_store %arg7[%c2_69, %c0_70, %c0_71], %125 {strides = array<i32>} : memref<4x8x1xf32, #tpu.memory_space<vmem>>, vector<1x8x1xf32>,
    %126 = vector.extract_strided_slice %4 {offsets = [0, 24], sizes = [8, 8], strides = [1, 1]} : vector<8x32xf32> to vector<8x8xf32>
    %127 = arith.truncf %126 : vector<8x8xf32> to vector<8x8xbf16>
    %128 = vector.extract_strided_slice %6 {offsets = [0, 24], sizes = [8, 8], strides = [1, 1]} : vector<8x32xf32> to vector<8x8xf32>
    %129 = arith.truncf %128 : vector<8x8xf32> to vector<8x8xbf16>
    %130 = vector.extract_strided_slice %8 {offsets = [0, 24], sizes = [8, 8], strides = [1, 1]} : vector<8x32xf32> to vector<8x8xf32>
    %131 = arith.truncf %130 : vector<8x8xf32> to vector<8x8xbf16>
    %cst_72 = arith.constant dense<0.000000e+00> : vector<8x8xf32>
    %132 = tpu.matmul %127, %129, %cst_72 {dimension_numbers = #tpu.dot_dimension_numbers<[1], [1], [0], [0], [0, 0, 1, 0], [], []>} : vector<8x8xbf16>, vector<8x8xbf16>, vector<8x8xf32> -> vector<8x8xf32>
    %c3 = arith.constant 3 : index
    %c0_73 = arith.constant 0 : index
    %c0_74 = arith.constant 0 : index
    %133 = vector.load %arg7[%c3, %c0_73, %c0_74] : memref<4x8x1xf32, #tpu.memory_space<vmem>>, vector<1x8x1xf32>
    %134 = vector.shape_cast %133 : vector<1x8x1xf32> to vector<8x1xf32>
    %cst_75 = arith.constant dense<0xFF800000> : vector<8xf32>
    %135 = vector.multi_reduction <maximumf>, %132, %cst_75 [1] : vector<8x8xf32> to vector<8xf32>
    %136 = vector.shape_cast %135 : vector<8xf32> to vector<8x1xf32>
    %137 = arith.maximumf %134, %136 : vector<8x1xf32>
    %138 = arith.subf %134, %137 : vector<8x1xf32>
    %139 = math.exp %138 : vector<8x1xf32>
    %140 = vector.broadcast %137 : vector<8x1xf32> to vector<8x8xf32>
    %141 = arith.subf %132, %140 : vector<8x8xf32>
    %142 = math.exp %141 : vector<8x8xf32>
    %c3_76 = arith.constant 3 : index
    %c0_77 = arith.constant 0 : index
    %c0_78 = arith.constant 0 : index
    %143 = vector.load %arg8[%c3_76, %c0_77, %c0_78] : memref<4x8x1xf32, #tpu.memory_space<vmem>>, vector<1x8x1xf32>
    %144 = vector.shape_cast %143 : vector<1x8x1xf32> to vector<8x1xf32>
    %145 = arith.mulf %139, %144 : vector<8x1xf32>
    %cst_79 = arith.constant dense<0.000000e+00> : vector<8xf32>
    %146 = vector.multi_reduction <add>, %142, %cst_79 [1] : vector<8x8xf32> to vector<8xf32>
    %147 = vector.shape_cast %146 : vector<8xf32> to vector<8x1xf32>
    %148 = arith.addf %145, %147 : vector<8x1xf32>
    %c3_80 = arith.constant 3 : index
    %c0_81 = arith.constant 0 : index
    %c0_82 = arith.constant 0 : index
    %149 = vector.load %arg8[%c3_80, %c0_81, %c0_82] : memref<4x8x1xf32, #tpu.memory_space<vmem>>, vector<1x8x1xf32>
    %150 = vector.shape_cast %149 : vector<1x8x1xf32> to vector<8x1xf32>
    %151 = vector.shape_cast %148 : vector<8x1xf32> to vector<1x8x1xf32>
    tpu.vector_store %arg8[%c3_80, %c0_81, %c0_82], %151 {strides = array<i32>} : memref<4x8x1xf32, #tpu.memory_space<vmem>>, vector<1x8x1xf32>,
    %c3_83 = arith.constant 3 : index
    %c0_84 = arith.constant 0 : index
    %c0_85 = arith.constant 0 : index
    %152 = vector.load %arg9[%c3_83, %c0_84, %c0_85] : memref<4x8x8xf32, #tpu.memory_space<vmem>>, vector<1x8x8xf32>
    %153 = vector.shape_cast %152 : vector<1x8x8xf32> to vector<8x8xf32>
    %154 = vector.broadcast %139 : vector<8x1xf32> to vector<8x8xf32>
    %155 = arith.mulf %154, %153 : vector<8x8xf32>
    %156 = arith.truncf %142 : vector<8x8xf32> to vector<8x8xbf16>
    %cst_86 = arith.constant dense<0.000000e+00> : vector<8x8xf32>
    %157 = tpu.matmul %156, %131, %cst_86 {dimension_numbers = #tpu.dot_dimension_numbers<[1], [0], [0], [1], [0, 0, 1, 1], [], []>} : vector<8x8xbf16>, vector<8x8xbf16>, vector<8x8xf32> -> vector<8x8xf32>
    %158 = arith.addf %155, %157 : vector<8x8xf32>
    %c3_87 = arith.constant 3 : index
    %c0_88 = arith.constant 0 : index
    %c0_89 = arith.constant 0 : index
    %159 = vector.load %arg9[%c3_87, %c0_88, %c0_89] : memref<4x8x8xf32, #tpu.memory_space<vmem>>, vector<1x8x8xf32>
    %160 = vector.shape_cast %159 : vector<1x8x8xf32> to vector<8x8xf32>
    %161 = vector.shape_cast %158 : vector<8x8xf32> to vector<1x8x8xf32>
    tpu.vector_store %arg9[%c3_87, %c0_88, %c0_89], %161 {strides = array<i32>} : memref<4x8x8xf32, #tpu.memory_space<vmem>>, vector<1x8x8xf32>,
    %c3_90 = arith.constant 3 : index
    %c0_91 = arith.constant 0 : index
    %c0_92 = arith.constant 0 : index
    %162 = vector.load %arg7[%c3_90, %c0_91, %c0_92] : memref<4x8x1xf32, #tpu.memory_space<vmem>>, vector<1x8x1xf32>
    %163 = vector.shape_cast %162 : vector<1x8x1xf32> to vector<8x1xf32>
    %164 = vector.shape_cast %137 : vector<8x1xf32> to vector<1x8x1xf32>
    tpu.vector_store %arg7[%c3_90, %c0_91, %c0_92], %164 {strides = array<i32>} : memref<4x8x1xf32, #tpu.memory_space<vmem>>, vector<1x8x1xf32>,
    %c0_i32_93 = arith.constant 0 : i32
    %165 = arith.cmpi eq, %arg2, %c0_i32_93 : i32
    %166 = arith.extui %165 : i1 to i32
    %c0_i32_94 = arith.constant 0 : i32
    %167 = arith.cmpi ne, %166, %c0_i32_94 : i32
    scf.if %167 {
      %c0_95 = arith.constant 0 : index
      %c0_96 = arith.constant 0 : index
      %c0_97 = arith.constant 0 : index
      %168 = vector.load %arg8[%c0_95, %c0_96, %c0_97] : memref<4x8x1xf32, #tpu.memory_space<vmem>>, vector<1x8x1xf32>
      %169 = vector.shape_cast %168 : vector<1x8x1xf32> to vector<8x1xf32>
      %170 = tpu.reciprocal %169 {approx = true} : vector<8x1xf32> -> vector<8x1xf32>
      %c0_98 = arith.constant 0 : index
      %c0_99 = arith.constant 0 : index
      %c0_100 = arith.constant 0 : index
      %171 = vector.load %arg9[%c0_98, %c0_99, %c0_100] : memref<4x8x8xf32, #tpu.memory_space<vmem>>, vector<1x8x8xf32>
      %172 = vector.shape_cast %171 : vector<1x8x8xf32> to vector<8x8xf32>
      %173 = vector.broadcast %170 : vector<8x1xf32> to vector<8x8xf32>
      %174 = arith.mulf %172, %173 : vector<8x8xf32>
      %c1_101 = arith.constant 1 : index
      %c0_102 = arith.constant 0 : index
      %c0_103 = arith.constant 0 : index
      %175 = vector.load %arg8[%c1_101, %c0_102, %c0_103] : memref<4x8x1xf32, #tpu.memory_space<vmem>>, vector<1x8x1xf32>
      %176 = vector.shape_cast %175 : vector<1x8x1xf32> to vector<8x1xf32>
      %177 = tpu.reciprocal %176 {approx = true} : vector<8x1xf32> -> vector<8x1xf32>
      %c1_104 = arith.constant 1 : index
      %c0_105 = arith.constant 0 : index
      %c0_106 = arith.constant 0 : index
      %178 = vector.load %arg9[%c1_104, %c0_105, %c0_106] : memref<4x8x8xf32, #tpu.memory_space<vmem>>, vector<1x8x8xf32>
      %179 = vector.shape_cast %178 : vector<1x8x8xf32> to vector<8x8xf32>
      %180 = vector.broadcast %177 : vector<8x1xf32> to vector<8x8xf32>
      %181 = arith.mulf %179, %180 : vector<8x8xf32>
      %c2_107 = arith.constant 2 : index
      %c0_108 = arith.constant 0 : index
      %c0_109 = arith.constant 0 : index
      %182 = vector.load %arg8[%c2_107, %c0_108, %c0_109] : memref<4x8x1xf32, #tpu.memory_space<vmem>>, vector<1x8x1xf32>
      %183 = vector.shape_cast %182 : vector<1x8x1xf32> to vector<8x1xf32>
      %184 = tpu.reciprocal %183 {approx = true} : vector<8x1xf32> -> vector<8x1xf32>
      %c2_110 = arith.constant 2 : index
      %c0_111 = arith.constant 0 : index
      %c0_112 = arith.constant 0 : index
      %185 = vector.load %arg9[%c2_110, %c0_111, %c0_112] : memref<4x8x8xf32, #tpu.memory_space<vmem>>, vector<1x8x8xf32>
      %186 = vector.shape_cast %185 : vector<1x8x8xf32> to vector<8x8xf32>
      %187 = vector.broadcast %184 : vector<8x1xf32> to vector<8x8xf32>
      %188 = arith.mulf %186, %187 : vector<8x8xf32>
      %c3_113 = arith.constant 3 : index
      %c0_114 = arith.constant 0 : index
      %c0_115 = arith.constant 0 : index
      %189 = vector.load %arg8[%c3_113, %c0_114, %c0_115] : memref<4x8x1xf32, #tpu.memory_space<vmem>>, vector<1x8x1xf32>
      %190 = vector.shape_cast %189 : vector<1x8x1xf32> to vector<8x1xf32>
      %191 = tpu.reciprocal %190 {approx = true} : vector<8x1xf32> -> vector<8x1xf32>
      %c3_116 = arith.constant 3 : index
      %c0_117 = arith.constant 0 : index
      %c0_118 = arith.constant 0 : index
      %192 = vector.load %arg9[%c3_116, %c0_117, %c0_118] : memref<4x8x8xf32, #tpu.memory_space<vmem>>, vector<1x8x8xf32>
      %193 = vector.shape_cast %192 : vector<1x8x8xf32> to vector<8x8xf32>
      %194 = vector.broadcast %191 : vector<8x1xf32> to vector<8x8xf32>
      %195 = arith.mulf %193, %194 : vector<8x8xf32>
      %196 = tpu.concatenate %174, %181, %188, %195 in 1 : vector<8x8xf32>, vector<8x8xf32>, vector<8x8xf32>, vector<8x8xf32> -> vector<8x32xf32>
      %c0_119 = arith.constant 0 : index
      %c0_120 = arith.constant 0 : index
      %c0_121 = arith.constant 0 : index
      %197 = vector.load %arg6[%c0_119, %c0_120, %c0_121] : memref<1x8x32xf32, #tpu.memory_space<vmem>>, vector<1x8x32xf32>
      %198 = vector.shape_cast %197 : vector<1x8x32xf32> to vector<8x32xf32>
      %199 = vector.shape_cast %196 : vector<8x32xf32> to vector<1x8x32xf32>
      tpu.vector_store %arg6[%c0_119, %c0_120, %c0_121], %199 {strides = array<i32>} : memref<1x8x32xf32, #tpu.memory_space<vmem>>, vector<1x8x32xf32>,
    } else {
    }
    return
  }
  func.func @transform_0(%arg0: i32, %arg1: i32, %arg2: i32) -> (i32, i32, i32) {
    %c0_i32 = arith.constant 0 : i32
    %0 = arith.addi %c0_i32, %arg0 : i32
    %c0_i32_0 = arith.constant 0 : i32
    %c0_i32_1 = arith.constant 0 : i32
    return %0, %arg1, %c0_i32_0 : i32, i32, i32
  }
  func.func @transform_1(%arg0: i32, %arg1: i32, %arg2: i32) -> (i32, i32, i32) {
    %c0_i32 = arith.constant 0 : i32
    %0 = arith.addi %c0_i32, %arg0 : i32
    %c0_i32_0 = arith.constant 0 : i32
    %c0_i32_1 = arith.constant 0 : i32
    return %0, %arg2, %c0_i32_0 : i32, i32, i32
  }
  func.func @transform_2(%arg0: i32, %arg1: i32, %arg2: i32) -> (i32, i32, i32) {
    %c2_i32 = arith.constant 2 : i32
    %0 = arith.addi %c2_i32, %arg0 : i32
    %c0_i32 = arith.constant 0 : i32
    %c0_i32_0 = arith.constant 0 : i32
    return %0, %arg2, %c0_i32 : i32, i32, i32
  }
  func.func @transform_3(%arg0: i32, %arg1: i32, %arg2: i32) -> (i32, i32, i32) {
    %c0_i32 = arith.constant 0 : i32
    %c0_i32_0 = arith.constant 0 : i32
    return %arg0, %arg1, %c0_i32 : i32, i32, i32
  }
}

module attributes {stable_mosaic.version = 11 : i64} {
  func.func @_mm_bias_kernel(%arg0: i32, %arg1: i32, %arg2: i32, %arg3: memref<16x32xf32, #tpu.memory_space<vmem>>, %arg4: memref<32x512xbf16, #tpu.memory_space<vmem>>, %arg5: memref<1x512xf32, #tpu.memory_space<vmem>>, %arg6: memref<16x512xf32, #tpu.memory_space<vmem>>, %arg7: memref<16x512xf32, #tpu.memory_space<vmem>>) attributes {dimension_semantics = [#tpu.dimension_semantics<parallel>, #tpu.dimension_semantics<parallel>, #tpu.dimension_semantics<arbitrary>], iteration_bounds = array<i64: 1, 4, 1>, scalar_prefetch = 0 : i64, scratch_operands = 1 : i64, tpu.core_type = #tpu.core_type<tc>, window_params = [{transform_indices = @transform_0, window_bounds = array<i64: 16, 32>}, {transform_indices = @transform_1, window_bounds = array<i64: 32, 512>}, {transform_indices = @transform_2, window_bounds = array<i64: 1, 512>}, {transform_indices = @transform_3, window_bounds = array<i64: 16, 512>}]} {
    %c0_i32 = arith.constant 0 : i32
    %0 = arith.cmpi eq, %arg2, %c0_i32 : i32
    %1 = arith.extui %0 : i1 to i32
    %c0_i32_0 = arith.constant 0 : i32
    %2 = arith.cmpi ne, %1, %c0_i32_0 : i32
    scf.if %2 {
      %cst_10 = arith.constant 0.000000e+00 : f32
      %13 = vector.broadcast %cst_10 : f32 to vector<16x512xf32>
      %c0_11 = arith.constant 0 : index
      %c0_12 = arith.constant 0 : index
      %14 = vector.load %arg7[%c0_11, %c0_12] : memref<16x512xf32, #tpu.memory_space<vmem>>, vector<16x512xf32>
      tpu.vector_store %arg7[%c0_11, %c0_12], %13 {strides = array<i32>} : memref<16x512xf32, #tpu.memory_space<vmem>>, vector<16x512xf32>,
    } else {
    }
    %c0 = arith.constant 0 : index
    %c0_1 = arith.constant 0 : index
    %3 = vector.load %arg7[%c0, %c0_1] : memref<16x512xf32, #tpu.memory_space<vmem>>, vector<16x512xf32>
    %c0_2 = arith.constant 0 : index
    %c0_3 = arith.constant 0 : index
    %4 = vector.load %arg3[%c0_2, %c0_3] : memref<16x32xf32, #tpu.memory_space<vmem>>, vector<16x32xf32>
    %5 = arith.truncf %4 : vector<16x32xf32> to vector<16x32xbf16>
    %c0_4 = arith.constant 0 : index
    %c0_5 = arith.constant 0 : index
    %6 = vector.load %arg4[%c0_4, %c0_5] : memref<32x512xbf16, #tpu.memory_space<vmem>>, vector<32x512xbf16>
    %cst = arith.constant dense<0.000000e+00> : vector<16x512xf32>
    %7 = tpu.matmul %5, %6, %cst {dimension_numbers = #tpu.dot_dimension_numbers<[1], [0], [0], [1], [0, 0, 1, 1], [], []>} : vector<16x32xbf16>, vector<32x512xbf16>, vector<16x512xf32> -> vector<16x512xf32>
    %8 = arith.addf %3, %7 : vector<16x512xf32>
    %c0_6 = arith.constant 0 : index
    %c0_7 = arith.constant 0 : index
    %9 = vector.load %arg7[%c0_6, %c0_7] : memref<16x512xf32, #tpu.memory_space<vmem>>, vector<16x512xf32>
    tpu.vector_store %arg7[%c0_6, %c0_7], %8 {strides = array<i32>} : memref<16x512xf32, #tpu.memory_space<vmem>>, vector<16x512xf32>,
    %c0_i32_8 = arith.constant 0 : i32
    %10 = arith.cmpi eq, %arg2, %c0_i32_8 : i32
    %11 = arith.extui %10 : i1 to i32
    %c0_i32_9 = arith.constant 0 : i32
    %12 = arith.cmpi ne, %11, %c0_i32_9 : i32
    scf.if %12 {
      %c0_10 = arith.constant 0 : index
      %c0_11 = arith.constant 0 : index
      %13 = vector.load %arg7[%c0_10, %c0_11] : memref<16x512xf32, #tpu.memory_space<vmem>>, vector<16x512xf32>
      %c0_12 = arith.constant 0 : index
      %c0_13 = arith.constant 0 : index
      %14 = vector.load %arg5[%c0_12, %c0_13] : memref<1x512xf32, #tpu.memory_space<vmem>>, vector<1x512xf32>
      %15 = vector.broadcast %14 : vector<1x512xf32> to vector<16x512xf32>
      %16 = arith.addf %13, %15 : vector<16x512xf32>
      %cst_14 = arith.constant 0.000000e+00 : f32
      %17 = vector.broadcast %cst_14 : f32 to vector<16x512xf32>
      %18 = arith.maximumf %16, %17 : vector<16x512xf32>
      %c0_15 = arith.constant 0 : index
      %c0_16 = arith.constant 0 : index
      %19 = vector.load %arg6[%c0_15, %c0_16] : memref<16x512xf32, #tpu.memory_space<vmem>>, vector<16x512xf32>
      tpu.vector_store %arg6[%c0_15, %c0_16], %18 {strides = array<i32>} : memref<16x512xf32, #tpu.memory_space<vmem>>, vector<16x512xf32>,
    } else {
    }
    return
  }
  func.func @transform_0(%arg0: i32, %arg1: i32, %arg2: i32) -> (i32, i32) {
    %c0_i32 = arith.constant 0 : i32
    return %arg0, %arg2 : i32, i32
  }
  func.func @transform_1(%arg0: i32, %arg1: i32, %arg2: i32) -> (i32, i32) {
    %c0_i32 = arith.constant 0 : i32
    return %arg2, %arg1 : i32, i32
  }
  func.func @transform_2(%arg0: i32, %arg1: i32, %arg2: i32) -> (i32, i32) {
    %c0_i32 = arith.constant 0 : i32
    %c0_i32_0 = arith.constant 0 : i32
    return %c0_i32, %arg1 : i32, i32
  }
  func.func @transform_3(%arg0: i32, %arg1: i32, %arg2: i32) -> (i32, i32) {
    %c0_i32 = arith.constant 0 : i32
    return %arg0, %arg1 : i32, i32
  }
}

module attributes {stable_mosaic.version = 11 : i64} {
  func.func @_mm_bias_res_ln_kernel(%arg0: i32, %arg1: i32, %arg2: memref<16x1024xf32, #tpu.memory_space<vmem>>, %arg3: memref<1024x32xbf16, #tpu.memory_space<vmem>>, %arg4: memref<1x32xf32, #tpu.memory_space<vmem>>, %arg5: memref<16x32xf32, #tpu.memory_space<vmem>>, %arg6: memref<1x32xf32, #tpu.memory_space<vmem>>, %arg7: memref<1x32xf32, #tpu.memory_space<vmem>>, %arg8: memref<16x32xf32, #tpu.memory_space<vmem>>, %arg9: memref<16x32xf32, #tpu.memory_space<vmem>>) attributes {dimension_semantics = [#tpu.dimension_semantics<parallel>, #tpu.dimension_semantics<arbitrary>], iteration_bounds = array<i64: 1, 2>, scalar_prefetch = 0 : i64, scratch_operands = 1 : i64, tpu.core_type = #tpu.core_type<tc>, window_params = [{transform_indices = @transform_0, window_bounds = array<i64: 16, 1024>}, {transform_indices = @transform_1, window_bounds = array<i64: 1024, 32>}, {pipeline_mode = #tpu.pipeline_mode<synchronous>, transform_indices = @transform_2, window_bounds = array<i64: 1, 32>}, {transform_indices = @transform_3, window_bounds = array<i64: 16, 32>}, {pipeline_mode = #tpu.pipeline_mode<synchronous>, transform_indices = @transform_4, window_bounds = array<i64: 1, 32>}, {pipeline_mode = #tpu.pipeline_mode<synchronous>, transform_indices = @transform_5, window_bounds = array<i64: 1, 32>}, {transform_indices = @transform_6, window_bounds = array<i64: 16, 32>}]} {
    %c0_i32 = arith.constant 0 : i32
    %0 = arith.cmpi eq, %arg1, %c0_i32 : i32
    %1 = arith.extui %0 : i1 to i32
    %c0_i32_0 = arith.constant 0 : i32
    %2 = arith.cmpi ne, %1, %c0_i32_0 : i32
    scf.if %2 {
      %cst_9 = arith.constant 0.000000e+00 : f32
      %13 = vector.broadcast %cst_9 : f32 to vector<16x32xf32>
      %c0_10 = arith.constant 0 : index
      %c0_11 = arith.constant 0 : index
      %14 = vector.load %arg9[%c0_10, %c0_11] : memref<16x32xf32, #tpu.memory_space<vmem>>, vector<16x32xf32>
      tpu.vector_store %arg9[%c0_10, %c0_11], %13 {strides = array<i32>} : memref<16x32xf32, #tpu.memory_space<vmem>>, vector<16x32xf32>,
    } else {
    }
    %c0 = arith.constant 0 : index
    %c0_1 = arith.constant 0 : index
    %3 = vector.load %arg9[%c0, %c0_1] : memref<16x32xf32, #tpu.memory_space<vmem>>, vector<16x32xf32>
    %c0_2 = arith.constant 0 : index
    %c0_3 = arith.constant 0 : index
    %4 = vector.load %arg2[%c0_2, %c0_3] : memref<16x1024xf32, #tpu.memory_space<vmem>>, vector<16x1024xf32>
    %5 = arith.truncf %4 : vector<16x1024xf32> to vector<16x1024xbf16>
    %c0_4 = arith.constant 0 : index
    %c0_5 = arith.constant 0 : index
    %6 = vector.load %arg3[%c0_4, %c0_5] : memref<1024x32xbf16, #tpu.memory_space<vmem>>, vector<1024x32xbf16>
    %cst = arith.constant dense<0.000000e+00> : vector<16x32xf32>
    %7 = tpu.matmul %5, %6, %cst {dimension_numbers = #tpu.dot_dimension_numbers<[1], [0], [0], [1], [0, 0, 1, 1], [], []>} : vector<16x1024xbf16>, vector<1024x32xbf16>, vector<16x32xf32> -> vector<16x32xf32>
    %8 = arith.addf %3, %7 : vector<16x32xf32>
    %c0_6 = arith.constant 0 : index
    %c0_7 = arith.constant 0 : index
    %9 = vector.load %arg9[%c0_6, %c0_7] : memref<16x32xf32, #tpu.memory_space<vmem>>, vector<16x32xf32>
    tpu.vector_store %arg9[%c0_6, %c0_7], %8 {strides = array<i32>} : memref<16x32xf32, #tpu.memory_space<vmem>>, vector<16x32xf32>,
    %c1_i32 = arith.constant 1 : i32
    %10 = arith.cmpi eq, %arg1, %c1_i32 : i32
    %11 = arith.extui %10 : i1 to i32
    %c0_i32_8 = arith.constant 0 : i32
    %12 = arith.cmpi ne, %11, %c0_i32_8 : i32
    scf.if %12 {
      %c0_9 = arith.constant 0 : index
      %c0_10 = arith.constant 0 : index
      %13 = vector.load %arg9[%c0_9, %c0_10] : memref<16x32xf32, #tpu.memory_space<vmem>>, vector<16x32xf32>
      %c0_11 = arith.constant 0 : index
      %c0_12 = arith.constant 0 : index
      %14 = vector.load %arg4[%c0_11, %c0_12] : memref<1x32xf32, #tpu.memory_space<vmem>>, vector<1x32xf32>
      %15 = vector.broadcast %14 : vector<1x32xf32> to vector<16x32xf32>
      %16 = arith.addf %13, %15 : vector<16x32xf32>
      %c0_13 = arith.constant 0 : index
      %c0_14 = arith.constant 0 : index
      %17 = vector.load %arg5[%c0_13, %c0_14] : memref<16x32xf32, #tpu.memory_space<vmem>>, vector<16x32xf32>
      %18 = arith.addf %16, %17 : vector<16x32xf32>
      %cst_15 = arith.constant dense<0.000000e+00> : vector<16xf32>
      %19 = vector.multi_reduction <add>, %18, %cst_15 [1] : vector<16x32xf32> to vector<16xf32>
      %20 = vector.shape_cast %19 : vector<16xf32> to vector<16x1xf32>
      %cst_16 = arith.constant 3.200000e+01 : f32
      %21 = vector.broadcast %cst_16 : f32 to vector<16x1xf32>
      %22 = arith.divf %20, %21 : vector<16x1xf32>
      %23 = vector.broadcast %22 : vector<16x1xf32> to vector<16x32xf32>
      %24 = arith.subf %18, %23 : vector<16x32xf32>
      %25 = arith.mulf %24, %24 : vector<16x32xf32>
      %cst_17 = arith.constant dense<0.000000e+00> : vector<16xf32>
      %26 = vector.multi_reduction <add>, %25, %cst_17 [1] : vector<16x32xf32> to vector<16xf32>
      %27 = vector.shape_cast %26 : vector<16xf32> to vector<16x1xf32>
      %cst_18 = arith.constant 3.200000e+01 : f32
      %28 = vector.broadcast %cst_18 : f32 to vector<16x1xf32>
      %29 = arith.divf %27, %28 : vector<16x1xf32>
      %30 = vector.broadcast %22 : vector<16x1xf32> to vector<16x32xf32>
      %31 = arith.subf %18, %30 : vector<16x32xf32>
      %cst_19 = arith.constant 9.99999974E-6 : f32
      %32 = vector.broadcast %cst_19 : f32 to vector<16x1xf32>
      %33 = arith.addf %29, %32 : vector<16x1xf32>
      %34 = math.rsqrt %33 : vector<16x1xf32>
      %35 = vector.broadcast %34 : vector<16x1xf32> to vector<16x32xf32>
      %36 = arith.mulf %31, %35 : vector<16x32xf32>
      %c0_20 = arith.constant 0 : index
      %c0_21 = arith.constant 0 : index
      %37 = vector.load %arg6[%c0_20, %c0_21] : memref<1x32xf32, #tpu.memory_space<vmem>>, vector<1x32xf32>
      %38 = vector.broadcast %37 : vector<1x32xf32> to vector<16x32xf32>
      %39 = arith.mulf %36, %38 : vector<16x32xf32>
      %c0_22 = arith.constant 0 : index
      %c0_23 = arith.constant 0 : index
      %40 = vector.load %arg7[%c0_22, %c0_23] : memref<1x32xf32, #tpu.memory_space<vmem>>, vector<1x32xf32>
      %41 = vector.broadcast %40 : vector<1x32xf32> to vector<16x32xf32>
      %42 = arith.addf %39, %41 : vector<16x32xf32>
      %c0_24 = arith.constant 0 : index
      %c0_25 = arith.constant 0 : index
      %43 = vector.load %arg8[%c0_24, %c0_25] : memref<16x32xf32, #tpu.memory_space<vmem>>, vector<16x32xf32>
      tpu.vector_store %arg8[%c0_24, %c0_25], %42 {strides = array<i32>} : memref<16x32xf32, #tpu.memory_space<vmem>>, vector<16x32xf32>,
    } else {
    }
    return
  }
  func.func @transform_0(%arg0: i32, %arg1: i32) -> (i32, i32) {
    %c0_i32 = arith.constant 0 : i32
    return %arg0, %arg1 : i32, i32
  }
  func.func @transform_1(%arg0: i32, %arg1: i32) -> (i32, i32) {
    %c0_i32 = arith.constant 0 : i32
    %c0_i32_0 = arith.constant 0 : i32
    return %arg1, %c0_i32 : i32, i32
  }
  func.func @transform_2(%arg0: i32, %arg1: i32) -> (i32, i32) {
    %c0_i32 = arith.constant 0 : i32
    %c0_i32_0 = arith.constant 0 : i32
    %c0_i32_1 = arith.constant 0 : i32
    return %c0_i32, %c0_i32_0 : i32, i32
  }
  func.func @transform_3(%arg0: i32, %arg1: i32) -> (i32, i32) {
    %c0_i32 = arith.constant 0 : i32
    %c0_i32_0 = arith.constant 0 : i32
    return %arg0, %c0_i32 : i32, i32
  }
  func.func @transform_4(%arg0: i32, %arg1: i32) -> (i32, i32) {
    %c0_i32 = arith.constant 0 : i32
    %c0_i32_0 = arith.constant 0 : i32
    %c0_i32_1 = arith.constant 0 : i32
    return %c0_i32, %c0_i32_0 : i32, i32
  }
  func.func @transform_5(%arg0: i32, %arg1: i32) -> (i32, i32) {
    %c0_i32 = arith.constant 0 : i32
    %c0_i32_0 = arith.constant 0 : i32
    %c0_i32_1 = arith.constant 0 : i32
    return %c0_i32, %c0_i32_0 : i32, i32
  }
  func.func @transform_6(%arg0: i32, %arg1: i32) -> (i32, i32) {
    %c0_i32 = arith.constant 0 : i32
    %c0_i32_0 = arith.constant 0 : i32
    return %arg0, %c0_i32 : i32, i32
  }
}

module attributes {stable_mosaic.version = 11 : i64} {
  func.func @_mm_bias_kernel(%arg0: i32, %arg1: i32, %arg2: i32, %arg3: memref<16x32xf32, #tpu.memory_space<vmem>>, %arg4: memref<32x128xbf16, #tpu.memory_space<vmem>>, %arg5: memref<1x128xf32, #tpu.memory_space<vmem>>, %arg6: memref<16x128xf32, #tpu.memory_space<vmem>>, %arg7: memref<16x128xf32, #tpu.memory_space<vmem>>) attributes {dimension_semantics = [#tpu.dimension_semantics<parallel>, #tpu.dimension_semantics<parallel>, #tpu.dimension_semantics<arbitrary>], iteration_bounds = array<i64: 1, 1, 1>, scalar_prefetch = 0 : i64, scratch_operands = 1 : i64, tpu.core_type = #tpu.core_type<tc>, window_params = [{transform_indices = @transform_0, window_bounds = array<i64: 16, 32>}, {transform_indices = @transform_1, window_bounds = array<i64: 32, 128>}, {transform_indices = @transform_2, window_bounds = array<i64: 1, 128>}, {transform_indices = @transform_3, window_bounds = array<i64: 16, 128>}]} {
    %c0_i32 = arith.constant 0 : i32
    %0 = arith.cmpi eq, %arg2, %c0_i32 : i32
    %1 = arith.extui %0 : i1 to i32
    %c0_i32_0 = arith.constant 0 : i32
    %2 = arith.cmpi ne, %1, %c0_i32_0 : i32
    scf.if %2 {
      %cst_10 = arith.constant 0.000000e+00 : f32
      %13 = vector.broadcast %cst_10 : f32 to vector<16x128xf32>
      %c0_11 = arith.constant 0 : index
      %c0_12 = arith.constant 0 : index
      %14 = vector.load %arg7[%c0_11, %c0_12] : memref<16x128xf32, #tpu.memory_space<vmem>>, vector<16x128xf32>
      tpu.vector_store %arg7[%c0_11, %c0_12], %13 {strides = array<i32>} : memref<16x128xf32, #tpu.memory_space<vmem>>, vector<16x128xf32>,
    } else {
    }
    %c0 = arith.constant 0 : index
    %c0_1 = arith.constant 0 : index
    %3 = vector.load %arg7[%c0, %c0_1] : memref<16x128xf32, #tpu.memory_space<vmem>>, vector<16x128xf32>
    %c0_2 = arith.constant 0 : index
    %c0_3 = arith.constant 0 : index
    %4 = vector.load %arg3[%c0_2, %c0_3] : memref<16x32xf32, #tpu.memory_space<vmem>>, vector<16x32xf32>
    %5 = arith.truncf %4 : vector<16x32xf32> to vector<16x32xbf16>
    %c0_4 = arith.constant 0 : index
    %c0_5 = arith.constant 0 : index
    %6 = vector.load %arg4[%c0_4, %c0_5] : memref<32x128xbf16, #tpu.memory_space<vmem>>, vector<32x128xbf16>
    %cst = arith.constant dense<0.000000e+00> : vector<16x128xf32>
    %7 = tpu.matmul %5, %6, %cst {dimension_numbers = #tpu.dot_dimension_numbers<[1], [0], [0], [1], [0, 0, 1, 1], [], []>} : vector<16x32xbf16>, vector<32x128xbf16>, vector<16x128xf32> -> vector<16x128xf32>
    %8 = arith.addf %3, %7 : vector<16x128xf32>
    %c0_6 = arith.constant 0 : index
    %c0_7 = arith.constant 0 : index
    %9 = vector.load %arg7[%c0_6, %c0_7] : memref<16x128xf32, #tpu.memory_space<vmem>>, vector<16x128xf32>
    tpu.vector_store %arg7[%c0_6, %c0_7], %8 {strides = array<i32>} : memref<16x128xf32, #tpu.memory_space<vmem>>, vector<16x128xf32>,
    %c0_i32_8 = arith.constant 0 : i32
    %10 = arith.cmpi eq, %arg2, %c0_i32_8 : i32
    %11 = arith.extui %10 : i1 to i32
    %c0_i32_9 = arith.constant 0 : i32
    %12 = arith.cmpi ne, %11, %c0_i32_9 : i32
    scf.if %12 {
      %c0_10 = arith.constant 0 : index
      %c0_11 = arith.constant 0 : index
      %13 = vector.load %arg7[%c0_10, %c0_11] : memref<16x128xf32, #tpu.memory_space<vmem>>, vector<16x128xf32>
      %c0_12 = arith.constant 0 : index
      %c0_13 = arith.constant 0 : index
      %14 = vector.load %arg5[%c0_12, %c0_13] : memref<1x128xf32, #tpu.memory_space<vmem>>, vector<1x128xf32>
      %15 = vector.broadcast %14 : vector<1x128xf32> to vector<16x128xf32>
      %16 = arith.addf %13, %15 : vector<16x128xf32>
      %c0_14 = arith.constant 0 : index
      %c0_15 = arith.constant 0 : index
      %17 = vector.load %arg6[%c0_14, %c0_15] : memref<16x128xf32, #tpu.memory_space<vmem>>, vector<16x128xf32>
      tpu.vector_store %arg6[%c0_14, %c0_15], %16 {strides = array<i32>} : memref<16x128xf32, #tpu.memory_space<vmem>>, vector<16x128xf32>,
    } else {
    }
    return
  }
  func.func @transform_0(%arg0: i32, %arg1: i32, %arg2: i32) -> (i32, i32) {
    %c0_i32 = arith.constant 0 : i32
    return %arg0, %arg2 : i32, i32
  }
  func.func @transform_1(%arg0: i32, %arg1: i32, %arg2: i32) -> (i32, i32) {
    %c0_i32 = arith.constant 0 : i32
    return %arg2, %arg1 : i32, i32
  }
  func.func @transform_2(%arg0: i32, %arg1: i32, %arg2: i32) -> (i32, i32) {
    %c0_i32 = arith.constant 0 : i32
    %c0_i32_0 = arith.constant 0 : i32
    return %c0_i32, %arg1 : i32, i32
  }
  func.func @transform_3(%arg0: i32, %arg1: i32, %arg2: i32) -> (i32, i32) {
    %c0_i32 = arith.constant 0 : i32
    return %arg0, %arg1 : i32, i32
  }
}

</mosaic_0001>

<llo_original>
// kernel: decoder_only_transformer.20
$region0: #{decoder_only_transformer.20}
  #allocation0 [shape = 'u32[]', space=smem, size = 0x4, offset = 0x4, fixed_abs, tag = 'smem constant byte address 0x4 - core index']
  #allocation1 [shape = 'u32[72,128]{1,0:T(1,128)}', space=vmem, size = 0x9000, scoped, tag = 'internal scratch']
  %s0 = inlined_call_operand.vmem [shape: f32[2,8,32], index: 0, kind: input, shape index: {}]
  %s1 = inlined_call_operand.vmem [shape: f32[8,32], index: 1, kind: input, shape index: {}]
  %s2 = inlined_call_operand.vmem [shape: f32[8,32], index: 2, kind: input, shape index: {}]
  %s3 = inlined_call_operand.vmem [shape: f32[2,8,32], index: 3, kind: output, shape index: {}]
  %s4 = sld [smem:[#allocation0]]
  $region45: #{decoder_only_transformer.20} parent=0
    _
  %s6 = ssub.s32 1, %s4
  %s7 = scalar_select 0, %s6, %s4
  loop: start=0, step=1, limit=4
  $region2: #{decoder_only_transformer.20} parent=0 // loop_pre_header
    _
  $region3: #{decoder_only_transformer.20} parent=0 // loop_header
    %s9 = sphi 0, %s13
    %p10 = scmp.ge.s32.totalorder %s9, 4
    %s16 = sphi 0, %s28
    %s17 = sphi 0, %s24
    %s18 = sphi 0, %s16
    %s19 = sphi 0, %s17
    %s20 = sphi 0, %s18
    %s21 = sphi 0, %s19
    %s33 = sphi 0, %s35
    %s36 = sphi 0, %s33
    %s37 = sphi 0, %s36
    %s53 = sphi 0, %s37
    %s59 = sphi 0, %s61
    %s62 = sphi 0, %s59
    %s63 = sphi 0, %s62
    %s79 = sphi 0, %s63
    %s85 = sphi 0, %s87
    %s88 = sphi 0, %s85
    %s89 = sphi 0, %s88
    %s105 = sphi 0, %s89
    %s113 = sphi 0, %s115
    %s116 = sphi 0, %s113
    %s117 = sphi 0, %s116
    %s133 = sphi 0, %s117
  $region4: #{decoder_only_transformer.20} parent=0 // loop_header_branch
    %12 = sbr.rel (%p10) target = $region8
  $region5: #{decoder_only_transformer.20} parent=0 // loop_body
    %s14 = ssub.s32 %s9, 1
    %s15 = ssub.s32 %s9, 2
    %s22 = sadd.s32 1, %s17
    %p23 = scmp.ge.s32.totalorder %s22, 1
    %s24 = scalar_select %p23, 0, %s22
    %s25 = sadd.s32 1, %s16
    %s26 = scalar_select %p23, %s25, %s16
    %p27 = scmp.ge.s32.totalorder %s26, 2
    %s28 = scalar_select %p27, 0, %s26
    %s29 = ssub.s32 %s16, %s28
    %s30 = ssub.s32 %s17, %s24
    %s31 = sor.u32 %s29, %s30
    %p32 = scmp.eq.s32.totalorder %s31, 0
    %s34 = sadd.s32 %s33, 1
    %s35 = scalar_select %p32, %s33, %s34
    %p38 = pneg %p32
    %p39 = scmp.eq.s32.totalorder %s9, 1
    %p40 = por %p38, %p39
    %p41 = scmp.ne.s32.totalorder %s33, %s36
    %p42 = scmp.eq.s32.totalorder %s9, 0
    %p43 = por %p41, %p42
    %p44 = scmp.ne.s32.totalorder %s33, %s36
    %p45 = scmp.eq.s32.totalorder %s14, 1
    %p46 = por %p44, %p45
    %p47 = scmp.ne.s32.totalorder %s36, %s37
    %p48 = scmp.eq.s32.totalorder %s14, 0
    %p49 = por %p47, %p48
    %p50 = scmp.ne.s32.totalorder %s36, %s37
    %p51 = scmp.eq.s32.totalorder %s15, 1
    %p52 = por %p50, %p51
    %p54 = scmp.ne.s32.totalorder %s37, %s53
    %p55 = scmp.eq.s32.totalorder %s15, 0
    %p56 = por %p54, %p55
    %s57 = ssub.s32 %s17, %s24
    %p58 = scmp.eq.s32.totalorder %s57, 0
    %s60 = sadd.s32 %s59, 1
    %s61 = scalar_select %p58, %s59, %s60
    %p64 = pneg %p58
    %p65 = scmp.eq.s32.totalorder %s9, 1
    %p66 = por %p64, %p65
    %p67 = scmp.ne.s32.totalorder %s59, %s62
    %p68 = scmp.eq.s32.totalorder %s9, 0
    %p69 = por %p67, %p68
    %p70 = scmp.ne.s32.totalorder %s59, %s62
    %p71 = scmp.eq.s32.totalorder %s14, 1
    %p72 = por %p70, %p71
    %p73 = scmp.ne.s32.totalorder %s62, %s63
    %p74 = scmp.eq.s32.totalorder %s14, 0
    %p75 = por %p73, %p74
    %p76 = scmp.ne.s32.totalorder %s62, %s63
    %p77 = scmp.eq.s32.totalorder %s15, 1
    %p78 = por %p76, %p77
    %p80 = scmp.ne.s32.totalorder %s63, %s79
    %p81 = scmp.eq.s32.totalorder %s15, 0
    %p82 = por %p80, %p81
    %s83 = ssub.s32 %s17, %s24
    %p84 = scmp.eq.s32.totalorder %s83, 0
    %s86 = sadd.s32 %s85, 1
    %s87 = scalar_select %p84, %s85, %s86
    %p90 = pneg %p84
    %p91 = scmp.eq.s32.totalorder %s9, 1
    %p92 = por %p90, %p91
    %p93 = scmp.ne.s32.totalorder %s85, %s88
    %p94 = scmp.eq.s32.totalorder %s9, 0
    %p95 = por %p93, %p94
    %p96 = scmp.ne.s32.totalorder %s85, %s88
    %p97 = scmp.eq.s32.totalorder %s14, 1
    %p98 = por %p96, %p97
    %p99 = scmp.ne.s32.totalorder %s88, %s89
    %p100 = scmp.eq.s32.totalorder %s14, 0
    %p101 = por %p99, %p100
    %p102 = scmp.ne.s32.totalorder %s88, %s89
    %p103 = scmp.eq.s32.totalorder %s15, 1
    %p104 = por %p102, %p103
    %p106 = scmp.ne.s32.totalorder %s89, %s105
    %p107 = scmp.eq.s32.totalorder %s15, 0
    %p108 = por %p106, %p107
    %s109 = ssub.s32 %s16, %s28
    %s110 = ssub.s32 %s17, %s24
    %s111 = sor.u32 %s109, %s110
    %p112 = scmp.eq.s32.totalorder %s111, 0
    %s114 = sadd.s32 %s113, 1
    %s115 = scalar_select %p112, %s113, %s114
    %p118 = pneg %p112
    %p119 = scmp.eq.s32.totalorder %s9, 1
    %p120 = por %p118, %p119
    %p121 = scmp.ne.s32.totalorder %s113, %s116
    %p122 = scmp.eq.s32.totalorder %s9, 0
    %p123 = por %p121, %p122
    %p124 = scmp.ne.s32.totalorder %s113, %s116
    %p125 = scmp.eq.s32.totalorder %s14, 1
    %p126 = por %p124, %p125
    %p127 = scmp.ne.s32.totalorder %s116, %s117
    %p128 = scmp.eq.s32.totalorder %s14, 0
    %p129 = por %p127, %p128
    %p130 = scmp.ne.s32.totalorder %s116, %s117
    %p131 = scmp.eq.s32.totalorder %s15, 1
    %p132 = por %p130, %p131
    %p134 = scmp.ne.s32.totalorder %s117, %s133
    %p135 = scmp.eq.s32.totalorder %s15, 0
    %p136 = por %p134, %p135
    %p137 = scmp.le.s32.totalorder 1, %s9
    %p138 = scmp.lt.s32.totalorder %s9, 3
    %p139 = pnand %p137, %p138
    %p140 = pneg %p139
    // Predicated region
    $region9: #{decoder_only_transformer.20} parent=5 // pred_check
      _
    $region10: #{decoder_only_transformer.20} parent=5 // pred_check_branch
      %142 = sbr.rel (%p139) target = $region12
    $region11: #{decoder_only_transformer.20} parent=5 // pred_region
      %s143 = ssub.s32 %s9, 1
      // Predicated region
      $region13: #{decoder_only_transformer.20} parent=11 // pred_check
        %p144 = pneg %p75
      $region14: #{decoder_only_transformer.20} parent=11 // pred_check_branch
        %146 = sbr.rel (%p144) target = $region16
      $region15: #{decoder_only_transformer.20} parent=11 // pred_region
        %p147 = scmp.lt.s32.totalorder %s19, 0
        %s148 = scalar_select %p147, %s19, 0
        %s149 = smul.addr %s148, 8
        %s150 = scalar_lea.vmem %s1, %s149
      $region16: #{decoder_only_transformer.20} parent=11 // pred_fallthru
        _
      // Predicated region
      $region17: #{decoder_only_transformer.20} parent=11 // pred_check
        %p151 = pneg %p101
      $region18: #{decoder_only_transformer.20} parent=11 // pred_check_branch
        %153 = sbr.rel (%p151) target = $region20
      $region19: #{decoder_only_transformer.20} parent=11 // pred_region
        %p154 = scmp.lt.s32.totalorder %s19, 0
        %s155 = scalar_select %p154, %s19, 0
        %s156 = smul.addr %s155, 8
        %s157 = scalar_lea.vmem %s2, %s156
      $region20: #{decoder_only_transformer.20} parent=11 // pred_fallthru
        _
    $region12: #{decoder_only_transformer.20} parent=5 // pred_fallthru
      _
    %p158 = scmp.lt.s32.totalorder %s9, 2
    // Predicated region
    $region21: #{decoder_only_transformer.20} parent=5 // pred_check
      %p159 = pneg %p158
    $region22: #{decoder_only_transformer.20} parent=5 // pred_check_branch
      %161 = sbr.rel (%p159) target = $region24
    $region23: #{decoder_only_transformer.20} parent=5 // pred_region
      // Predicated region
      $region25: #{decoder_only_transformer.20} parent=23 // pred_check
        %p162 = pneg %p43
      $region26: #{decoder_only_transformer.20} parent=23 // pred_check_branch
        %164 = sbr.rel (%p162) target = $region28
      $region27: #{decoder_only_transformer.20} parent=23 // pred_region
        %p165 = scmp.lt.s32.totalorder %s16, 1
        %s166 = scalar_select %p165, %s16, 1
        %p167 = scmp.lt.s32.totalorder %s17, 0
        %s168 = scalar_select %p167, %s17, 0
        %s169 = sadd.s32 %s168, %s166
        %s170 = smul.addr %s169, 8
        %s171 = scalar_lea.vmem %s0, %s170
      $region28: #{decoder_only_transformer.20} parent=23 // pred_fallthru
        _
    $region24: #{decoder_only_transformer.20} parent=5 // pred_fallthru
      _
    %p172 = scmp.le.s32.totalorder 1, %s9
    %p173 = scmp.lt.s32.totalorder %s9, 3
    %p174 = pnand %p172, %p173
    %p175 = pneg %p174
    // Predicated region
    $region29: #{decoder_only_transformer.20} parent=5 // pred_check
      _
    $region30: #{decoder_only_transformer.20} parent=5 // pred_check_branch
      %177 = sbr.rel (%p174) target = $region32
    $region31: #{decoder_only_transformer.20} parent=5 // pred_region
      %s178 = ssub.s32 %s9, 1
      %p179 = scmp.lt.s32.totalorder %s18, 1
      %s180 = scalar_select %p179, %s18, 1
      %p181 = scmp.lt.s32.totalorder %s19, 0
      %s182 = scalar_select %p181, %s19, 0
      %s183 = sadd.s32 %s182, %s180
      %s184 = smul.addr %s183, 8
      %s185 = scalar_lea.vmem %s0, %s184
      %p186 = pneg %p49
      %p187 = pneg %p46
      %p188 = scmp.lt.s32.totalorder %s19, 0
      %s189 = scalar_select %p188, %s19, 0
      %s190 = smul.addr %s189, 8
      %s191 = scalar_lea.vmem %s1, %s190
      %p192 = pneg %p75
      %p193 = pneg %p72
      %p194 = scmp.lt.s32.totalorder %s19, 0
      %s195 = scalar_select %p194, %s19, 0
      %s196 = smul.addr %s195, 8
      %s197 = scalar_lea.vmem %s2, %s196
      %p198 = pneg %p101
      %p199 = pneg %p98
      %p200 = pneg %p129
      %p201 = pneg %p126
      %p202 = scmp.lt.s32.totalorder %s18, 1
      %s203 = scalar_select %p202, %s18, 1
      %p204 = scmp.lt.s32.totalorder %s19, 0
      %s205 = scalar_select %p204, %s19, 0
      %s206 = sadd.s32 %s205, %s203
      %s207 = smul.addr %s206, 8
      %s208 = scalar_lea.vmem %s3, %s207
      %p209 = scmp.lt.s32.totalorder %s18, 1
      %s210 = scalar_select %p209, %s18, 1
      %p211 = scmp.lt.s32.totalorder %s19, 0
      %s212 = scalar_select %p211, %s19, 0
      %s213 = sadd.s32 %s212, %s210
      %s214 = smul.addr %s213, 8
      %s215 = scalar_lea.vmem %s0, %s214
      %p216 = scmp.lt.s32.totalorder %s19, 0
      %s217 = scalar_select %p216, %s19, 0
      %s218 = smul.addr %s217, 8
      %s219 = scalar_lea.vmem %s1, %s218
      %p220 = scmp.lt.s32.totalorder %s19, 0
      %s221 = scalar_select %p220, %s19, 0
      %s222 = smul.addr %s221, 8
      %s223 = scalar_lea.vmem %s2, %s222
      %p224 = scmp.lt.s32.totalorder %s18, 1
      %s225 = scalar_select %p224, %s18, 1
      %p226 = scmp.lt.s32.totalorder %s19, 0
      %s227 = scalar_select %p226, %s19, 0
      %s228 = sadd.s32 %s227, %s225
      %s229 = smul.addr %s228, 8
      %s230 = scalar_lea.vmem %s3, %s229
      %v231 = vld [vmem:[%s215] sm:$0xff]
      %233 = vrot.lane.b32.xlu0 %v231, 112
      %v234 = vpop.permute.xlu0 %233
      %236 = vrot.lane.b32.xlu0 %v231, 16
      %v237 = vpop.permute.xlu0 %236
      %vm239 = vcmask 130048
      %v240 = vsel %vm239, %v234, %v237
      %v241 = vld [vmem:[%s219] sm:$0xff]
      %v242 = vmul.f32 %v231, %v241
      %v243 = vld [vmem:[%s223] sm:$0xff]
      %v244 = vmul.f32 %v240, %v243
      %v245 = vadd.f32 %v242, %v244
      %vm246 = vcmask 261120
      %247 = vst.msk [vmem:[%s230] sm:$0xff] %vm246, %v245
      %p248 = scmp.lt.s32.totalorder %s18, 1
      %s249 = scalar_select %p248, %s18, 1
      %p250 = scmp.lt.s32.totalorder %s19, 0
      %s251 = scalar_select %p250, %s19, 0
      %s252 = sadd.s32 %s251, %s249
      %s253 = smul.addr %s252, 8
      %s254 = scalar_lea.vmem %s3, %s253
      // Predicated region
      $region33: #{decoder_only_transformer.20} parent=31 // pred_check
        %p255 = pneg %p126
      $region34: #{decoder_only_transformer.20} parent=31 // pred_check_branch
        %257 = sbr.rel (%p255) target = $region36
      $region35: #{decoder_only_transformer.20} parent=31 // pred_region
        _
      $region36: #{decoder_only_transformer.20} parent=31 // pred_fallthru
        _
    $region32: #{decoder_only_transformer.20} parent=5 // pred_fallthru
      _
    %p258 = scmp.le.s32.totalorder 2, %s9
    // Predicated region
    $region37: #{decoder_only_transformer.20} parent=5 // pred_check
      %p259 = pneg %p258
    $region38: #{decoder_only_transformer.20} parent=5 // pred_check_branch
      %261 = sbr.rel (%p259) target = $region40
    $region39: #{decoder_only_transformer.20} parent=5 // pred_region
      %s262 = ssub.s32 %s9, 2
      // Predicated region
      $region41: #{decoder_only_transformer.20} parent=39 // pred_check
        %p263 = pneg %p132
      $region42: #{decoder_only_transformer.20} parent=39 // pred_check_branch
        %265 = sbr.rel (%p263) target = $region44
      $region43: #{decoder_only_transformer.20} parent=39 // pred_region
        %p266 = scmp.lt.s32.totalorder %s20, 1
        %s267 = scalar_select %p266, %s20, 1
        %p268 = scmp.lt.s32.totalorder %s21, 0
        %s269 = scalar_select %p268, %s21, 0
        %s270 = sadd.s32 %s269, %s267
        %s271 = smul.addr %s270, 8
        %s272 = scalar_lea.vmem %s3, %s271
      $region44: #{decoder_only_transformer.20} parent=39 // pred_fallthru
        _
    $region40: #{decoder_only_transformer.20} parent=5 // pred_fallthru
      _
  $region6: #{decoder_only_transformer.20} parent=0 // loop_footer
    %s13 = sadd.s32 1, %s9
  $region7: #{decoder_only_transformer.20} parent=0 // loop_footer_branch
    %8 = sbr.rel target = $region3
  $region8: #{decoder_only_transformer.20} parent=0 // loop_exit
    _

// kernel: decoder_only_transformer.21
$region0: #{decoder_only_transformer.21}
  #allocation0 [shape = 'u32[]', space=smem, size = 0x4, offset = 0x4, fixed_abs, tag = 'smem constant byte address 0x4 - core index']
  #allocation1 [shape = 'u32[72,128]{1,0:T(1,128)}', space=vmem, size = 0x9000, scoped, tag = 'internal scratch']
  #allocation2 [shape = 'f32[16,96]{1,0:T(8,128)}', space=vmem, size = 0x2000, scoped, tag = 'scratch operand']
  %s0 = inlined_call_operand.vmem [shape: f32[16,32], index: 0, kind: input, shape index: {}]
  %s1 = inlined_call_operand.vmem [shape: bf16[32,96], index: 1, kind: input, shape index: {}]
  %s2 = inlined_call_operand.vmem [shape: f32[1,96], index: 2, kind: input, shape index: {}]
  %s3 = inlined_call_operand.vmem [shape: f32[16,96], index: 3, kind: output, shape index: {}]
  %s4 = sld [smem:[#allocation0]]
  $region30: #{decoder_only_transformer.21} parent=0
    _
  %s6 = ssub.s32 1, %s4
  %s7 = scalar_select 0, %s6, %s4
  // Predicated region
  $region2: #{decoder_only_transformer.21} parent=0 // pred_check
    _
  $region3: #{decoder_only_transformer.21} parent=0 // pred_check_branch
    %9 = sbr.rel (0) target = $region5
  $region4: #{decoder_only_transformer.21} parent=0 // pred_region
    _
  $region5: #{decoder_only_transformer.21} parent=0 // pred_fallthru
    _
  // Predicated region
  $region6: #{decoder_only_transformer.21} parent=0 // pred_check
    _
  $region7: #{decoder_only_transformer.21} parent=0 // pred_check_branch
    %11 = sbr.rel (0) target = $region9
  $region8: #{decoder_only_transformer.21} parent=0 // pred_region
    _
  $region9: #{decoder_only_transformer.21} parent=0 // pred_fallthru
    _
  // Predicated region
  $region10: #{decoder_only_transformer.21} parent=0 // pred_check
    _
  $region11: #{decoder_only_transformer.21} parent=0 // pred_check_branch
    %13 = sbr.rel (0) target = $region13
  $region12: #{decoder_only_transformer.21} parent=0 // pred_region
    _
  $region13: #{decoder_only_transformer.21} parent=0 // pred_fallthru
    _
  %p15 = scmp.eq.s32.totalorder 0, 0
  // Predicated region
  $region14: #{decoder_only_transformer.21} parent=0 // pred_check
    %p16 = pneg %p15
  $region15: #{decoder_only_transformer.21} parent=0 // pred_check_branch
    %18 = sbr.rel (%p16) target = $region17
  $region16: #{decoder_only_transformer.21} parent=0 // pred_region
    %vm19 = vcmask 785408
    %20 = vst.msk [vmem:[#allocation2] sm:$0xff] %vm19, 0.0
    %21 = vst.msk [vmem:[#allocation2 + $0x8] sm:$0xff] %vm19, 0.0
  $region17: #{decoder_only_transformer.21} parent=0 // pred_fallthru
    _
  %v22 = vld [vmem:[#allocation2] sm:$0xff]
  %v23 = vld [vmem:[#allocation2 + $0x8] sm:$0xff]
  %v24 = vld [vmem:[%s0] sm:$0xff]
  %v25 = vld [vmem:[%s0 + $0x8] sm:$0xff]
  %v26 = vpack.c.bf16 %v25, %v24
  %v27 = vld [vmem:[%s1] sm:$0xf]
  %v28 = vld [vmem:[%s1 + $0x4] sm:$0xf]
  %v29 = vld [vmem:[%s1 + $0x8] sm:$0xf]
  %v30 = vld [vmem:[%s1 + $0xc] sm:$0xf]
  %v35 = vunpack.c.l.b16 %v27
  %v36 = vunpack.c.l.b16 %v28
  %v37 = vunpack.c.l.b16 %v29
  %v38 = vunpack.c.l.b16 %v30
  %v39 = vpack.c.b16 %v36, %v35
  %v40 = vpack.c.b16 %v38, %v37
  %vm43 = vcmask 261120
  %v45 = vsel %vm43, %v26, 0
  %47 = vmatpush.bf16.msra.mxu0 0
  %48 = vmatpush.bf16.msra.mxu0 0
  %49 = vmatpush.bf16.msra.mxu0 0
  %50 = vmatpush.bf16.msra.mxu0 0
  %51 = vmatpush.bf16.msra.mxu0 0
  %52 = vmatpush.bf16.msra.mxu0 0
  %53 = vmatpush.bf16.msra.mxu0 %v40
  %54 = vmatpush.bf16.msra.mxu0 %v39
  %55 = vmatmul.bf16.gmra.mxu0 %v45
  %v56 = vpop.f32.mrf.mxu0
  %v57 = vadd.f32 0.0, %v56
  %v58 = vpop.f32.mrf.mxu0
  %v59 = vadd.f32 0.0, %v58
  %60 = vdwg.mxu0
  %v61 = vadd.f32 %v22, %v57
  %v62 = vadd.f32 %v23, %v59
  %vm63 = vcmask 785408
  %64 = vst.msk [vmem:[#allocation2] sm:$0xff] %vm63, %v61
  %65 = vst.msk [vmem:[#allocation2 + $0x8] sm:$0xff] %vm63, %v62
  // Predicated region
  $region18: #{decoder_only_transformer.21} parent=0 // pred_check
    %p66 = pneg %p15
  $region19: #{decoder_only_transformer.21} parent=0 // pred_check_branch
    %68 = sbr.rel (%p66) target = $region21
  $region20: #{decoder_only_transformer.21} parent=0 // pred_region
    %v69 = vld [vmem:[#allocation2] sm:$0xff]
    %v70 = vld [vmem:[#allocation2 + $0x8] sm:$0xff]
    %v71 = vld [vmem:[%s2] sm:$0x1]
    %v73 = vperm.slane %v71, 0
    %v75 = vadd.f32 %v69, %v73
    %v76 = vadd.f32 %v70, %v73
    %77 = vst.msk [vmem:[%s3] sm:$0xff] %vm63, %v75
    %78 = vst.msk [vmem:[%s3 + $0x8] sm:$0xff] %vm63, %v76
  $region21: #{decoder_only_transformer.21} parent=0 // pred_fallthru
    _
  // Predicated region
  $region22: #{decoder_only_transformer.21} parent=0 // pred_check
    _
  $region23: #{decoder_only_transformer.21} parent=0 // pred_check_branch
    %80 = sbr.rel (0) target = $region25
  $region24: #{decoder_only_transformer.21} parent=0 // pred_region
    _
  $region25: #{decoder_only_transformer.21} parent=0 // pred_fallthru
    _
  // Predicated region
  $region26: #{decoder_only_transformer.21} parent=0 // pred_check
    _
  $region27: #{decoder_only_transformer.21} parent=0 // pred_check_branch
    %82 = sbr.rel (0) target = $region29
  $region28: #{decoder_only_transformer.21} parent=0 // pred_region
    _
  $region29: #{decoder_only_transformer.21} parent=0 // pred_fallthru
    _

// kernel: decoder_only_transformer.22
$region0: #{decoder_only_transformer.22}
  #allocation0 [shape = 'u32[]', space=smem, size = 0x4, offset = 0x4, fixed_abs, tag = 'smem constant byte address 0x4 - core index']
  #allocation1 [shape = 'u32[72,128]{1,0:T(1,128)}', space=vmem, size = 0x9000, scoped, tag = 'internal scratch']
  #allocation2 [shape = 'f32[4,8,1]{2,1,0:T(8,128)}', space=vmem, size = 0x4000, scoped, tag = 'scratch operand']
  #allocation3 [shape = 'f32[4,8,1]{2,1,0:T(8,128)}', space=vmem, size = 0x4000, scoped, tag = 'scratch operand']
  #allocation4 [shape = 'f32[4,8,8]{2,1,0:T(8,128)}', space=vmem, size = 0x4000, scoped, tag = 'scratch operand']
  %s0 = inlined_call_operand.vmem [shape: f32[6,8,32], index: 0, kind: input, shape index: {}, may-alias: {0,1,2}]
  %s1 = inlined_call_operand.vmem [shape: f32[6,8,32], index: 1, kind: input, shape index: {}, may-alias: {0,1,2}]
  %s2 = inlined_call_operand.vmem [shape: f32[6,8,32], index: 2, kind: input, shape index: {}, may-alias: {0,1,2}]
  %s3 = inlined_call_operand.vmem [shape: f32[2,8,32], index: 3, kind: output, shape index: {}]
  %s4 = sld [smem:[#allocation0]]
  $region53: #{decoder_only_transformer.22} parent=0
    _
  %s6 = ssub.s32 1, %s4
  %s7 = scalar_select 0, %s6, %s4
  loop: start=0, step=1, limit=4
  $region2: #{decoder_only_transformer.22} parent=0 // loop_pre_header
    _
  $region3: #{decoder_only_transformer.22} parent=0 // loop_header
    %s9 = sphi 0, %s13
    %p10 = scmp.ge.s32.totalorder %s9, 4
    %s16 = sphi 0, %s35
    %s17 = sphi 0, %s31
    %s18 = sphi 0, %s27
    %s19 = sphi 0, %s16
    %s20 = sphi 0, %s17
    %s21 = sphi 0, %s18
    %s22 = sphi 0, %s19
    %s23 = sphi 0, %s20
    %s24 = sphi 0, %s21
    %s40 = sphi 0, %s42
    %s43 = sphi 0, %s40
    %s44 = sphi 0, %s43
    %s60 = sphi 0, %s44
    %s70 = sphi 0, %s72
    %s73 = sphi 0, %s70
    %s74 = sphi 0, %s73
    %s90 = sphi 0, %s74
    %s100 = sphi 0, %s102
    %s103 = sphi 0, %s100
    %s104 = sphi 0, %s103
    %s120 = sphi 0, %s104
    %s128 = sphi 0, %s130
    %s131 = sphi 0, %s128
    %s132 = sphi 0, %s131
    %s148 = sphi 0, %s132
  $region4: #{decoder_only_transformer.22} parent=0 // loop_header_branch
    %12 = sbr.rel (%p10) target = $region8
  $region5: #{decoder_only_transformer.22} parent=0 // loop_body
    %s14 = ssub.s32 %s9, 1
    %s15 = ssub.s32 %s9, 2
    %s25 = sadd.s32 1, %s18
    %p26 = scmp.ge.s32.totalorder %s25, 1
    %s27 = scalar_select %p26, 0, %s25
    %s28 = sadd.s32 1, %s17
    %s29 = scalar_select %p26, %s28, %s17
    %p30 = scmp.ge.s32.totalorder %s29, 1
    %s31 = scalar_select %p30, 0, %s29
    %s32 = sadd.s32 1, %s16
    %s33 = scalar_select %p30, %s32, %s16
    %p34 = scmp.ge.s32.totalorder %s33, 2
    %s35 = scalar_select %p34, 0, %s33
    %s36 = ssub.s32 %s16, %s35
    %s37 = ssub.s32 %s17, %s31
    %s38 = sor.u32 %s36, %s37
    %p39 = scmp.eq.s32.totalorder %s38, 0
    %s41 = sadd.s32 %s40, 1
    %s42 = scalar_select %p39, %s40, %s41
    %p45 = pneg %p39
    %p46 = scmp.eq.s32.totalorder %s9, 1
    %p47 = por %p45, %p46
    %p48 = scmp.ne.s32.totalorder %s40, %s43
    %p49 = scmp.eq.s32.totalorder %s9, 0
    %p50 = por %p48, %p49
    %p51 = scmp.ne.s32.totalorder %s40, %s43
    %p52 = scmp.eq.s32.totalorder %s14, 1
    %p53 = por %p51, %p52
    %p54 = scmp.ne.s32.totalorder %s43, %s44
    %p55 = scmp.eq.s32.totalorder %s14, 0
    %p56 = por %p54, %p55
    %p57 = scmp.ne.s32.totalorder %s43, %s44
    %p58 = scmp.eq.s32.totalorder %s15, 1
    %p59 = por %p57, %p58
    %p61 = scmp.ne.s32.totalorder %s44, %s60
    %p62 = scmp.eq.s32.totalorder %s15, 0
    %p63 = por %p61, %p62
    %s64 = sadd.s32 %s16, 2
    %s65 = sadd.s32 %s35, 2
    %s66 = ssub.s32 %s64, %s65
    %s67 = ssub.s32 %s18, %s27
    %s68 = sor.u32 %s66, %s67
    %p69 = scmp.eq.s32.totalorder %s68, 0
    %s71 = sadd.s32 %s70, 1
    %s72 = scalar_select %p69, %s70, %s71
    %p75 = pneg %p69
    %p76 = scmp.eq.s32.totalorder %s9, 1
    %p77 = por %p75, %p76
    %p78 = scmp.ne.s32.totalorder %s70, %s73
    %p79 = scmp.eq.s32.totalorder %s9, 0
    %p80 = por %p78, %p79
    %p81 = scmp.ne.s32.totalorder %s70, %s73
    %p82 = scmp.eq.s32.totalorder %s14, 1
    %p83 = por %p81, %p82
    %p84 = scmp.ne.s32.totalorder %s73, %s74
    %p85 = scmp.eq.s32.totalorder %s14, 0
    %p86 = por %p84, %p85
    %p87 = scmp.ne.s32.totalorder %s73, %s74
    %p88 = scmp.eq.s32.totalorder %s15, 1
    %p89 = por %p87, %p88
    %p91 = scmp.ne.s32.totalorder %s74, %s90
    %p92 = scmp.eq.s32.totalorder %s15, 0
    %p93 = por %p91, %p92
    %s94 = sadd.s32 %s16, 4
    %s95 = sadd.s32 %s35, 4
    %s96 = ssub.s32 %s94, %s95
    %s97 = ssub.s32 %s18, %s27
    %s98 = sor.u32 %s96, %s97
    %p99 = scmp.eq.s32.totalorder %s98, 0
    %s101 = sadd.s32 %s100, 1
    %s102 = scalar_select %p99, %s100, %s101
    %p105 = pneg %p99
    %p106 = scmp.eq.s32.totalorder %s9, 1
    %p107 = por %p105, %p106
    %p108 = scmp.ne.s32.totalorder %s100, %s103
    %p109 = scmp.eq.s32.totalorder %s9, 0
    %p110 = por %p108, %p109
    %p111 = scmp.ne.s32.totalorder %s100, %s103
    %p112 = scmp.eq.s32.totalorder %s14, 1
    %p113 = por %p111, %p112
    %p114 = scmp.ne.s32.totalorder %s103, %s104
    %p115 = scmp.eq.s32.totalorder %s14, 0
    %p116 = por %p114, %p115
    %p117 = scmp.ne.s32.totalorder %s103, %s104
    %p118 = scmp.eq.s32.totalorder %s15, 1
    %p119 = por %p117, %p118
    %p121 = scmp.ne.s32.totalorder %s104, %s120
    %p122 = scmp.eq.s32.totalorder %s15, 0
    %p123 = por %p121, %p122
    %s124 = ssub.s32 %s16, %s35
    %s125 = ssub.s32 %s17, %s31
    %s126 = sor.u32 %s124, %s125
    %p127 = scmp.eq.s32.totalorder %s126, 0
    %s129 = sadd.s32 %s128, 1
    %s130 = scalar_select %p127, %s128, %s129
    %p133 = pneg %p127
    %p134 = scmp.eq.s32.totalorder %s9, 1
    %p135 = por %p133, %p134
    %p136 = scmp.ne.s32.totalorder %s128, %s131
    %p137 = scmp.eq.s32.totalorder %s9, 0
    %p138 = por %p136, %p137
    %p139 = scmp.ne.s32.totalorder %s128, %s131
    %p140 = scmp.eq.s32.totalorder %s14, 1
    %p141 = por %p139, %p140
    %p142 = scmp.ne.s32.totalorder %s131, %s132
    %p143 = scmp.eq.s32.totalorder %s14, 0
    %p144 = por %p142, %p143
    %p145 = scmp.ne.s32.totalorder %s131, %s132
    %p146 = scmp.eq.s32.totalorder %s15, 1
    %p147 = por %p145, %p146
    %p149 = scmp.ne.s32.totalorder %s132, %s148
    %p150 = scmp.eq.s32.totalorder %s15, 0
    %p151 = por %p149, %p150
    %p152 = scmp.le.s32.totalorder 1, %s9
    %p153 = scmp.lt.s32.totalorder %s9, 3
    %p154 = pnand %p152, %p153
    %p155 = pneg %p154
    // Predicated region
    $region9: #{decoder_only_transformer.22} parent=5 // pred_check
      _
    $region10: #{decoder_only_transformer.22} parent=5 // pred_check_branch
      %157 = sbr.rel (%p154) target = $region12
    $region11: #{decoder_only_transformer.22} parent=5 // pred_region
      %s158 = ssub.s32 %s9, 1
    $region12: #{decoder_only_transformer.22} parent=5 // pred_fallthru
      _
    %p159 = scmp.lt.s32.totalorder %s9, 2
    // Predicated region
    $region13: #{decoder_only_transformer.22} parent=5 // pred_check
      %p160 = pneg %p159
    $region14: #{decoder_only_transformer.22} parent=5 // pred_check_branch
      %162 = sbr.rel (%p160) target = $region16
    $region15: #{decoder_only_transformer.22} parent=5 // pred_region
      // Predicated region
      $region17: #{decoder_only_transformer.22} parent=15 // pred_check
        %p163 = pneg %p50
      $region18: #{decoder_only_transformer.22} parent=15 // pred_check_branch
        %165 = sbr.rel (%p163) target = $region20
      $region19: #{decoder_only_transformer.22} parent=15 // pred_region
        %p166 = scmp.lt.s32.totalorder %s16, 5
        %s167 = scalar_select %p166, %s16, 5
        %p168 = scmp.lt.s32.totalorder %s17, 0
        %s169 = scalar_select %p168, %s17, 0
        %s170 = sadd.s32 %s169, %s167
        %s171 = smul.addr %s170, 8
        %s172 = scalar_lea.vmem %s0, %s171
      $region20: #{decoder_only_transformer.22} parent=15 // pred_fallthru
        _
      // Predicated region
      $region21: #{decoder_only_transformer.22} parent=15 // pred_check
        %p173 = pneg %p80
      $region22: #{decoder_only_transformer.22} parent=15 // pred_check_branch
        %175 = sbr.rel (%p173) target = $region24
      $region23: #{decoder_only_transformer.22} parent=15 // pred_region
        %s176 = sadd.s32 %s16, 2
        %p177 = scmp.lt.s32.totalorder %s176, 5
        %s178 = scalar_select %p177, %s176, 5
        %p179 = scmp.lt.s32.totalorder %s18, 0
        %s180 = scalar_select %p179, %s18, 0
        %s181 = sadd.s32 %s180, %s178
        %s182 = smul.addr %s181, 8
        %s183 = scalar_lea.vmem %s1, %s182
        %s184 = sadd.s32 %s16, 2
      $region24: #{decoder_only_transformer.22} parent=15 // pred_fallthru
        _
      // Predicated region
      $region25: #{decoder_only_transformer.22} parent=15 // pred_check
        %p185 = pneg %p110
      $region26: #{decoder_only_transformer.22} parent=15 // pred_check_branch
        %187 = sbr.rel (%p185) target = $region28
      $region27: #{decoder_only_transformer.22} parent=15 // pred_region
        %s188 = sadd.s32 %s16, 4
        %p189 = scmp.lt.s32.totalorder %s188, 5
        %s190 = scalar_select %p189, %s188, 5
        %p191 = scmp.lt.s32.totalorder %s18, 0
        %s192 = scalar_select %p191, %s18, 0
        %s193 = sadd.s32 %s192, %s190
        %s194 = smul.addr %s193, 8
        %s195 = scalar_lea.vmem %s2, %s194
        %s196 = sadd.s32 %s16, 4
      $region28: #{decoder_only_transformer.22} parent=15 // pred_fallthru
        _
    $region16: #{decoder_only_transformer.22} parent=5 // pred_fallthru
      _
    %p197 = scmp.le.s32.totalorder 1, %s9
    %p198 = scmp.lt.s32.totalorder %s9, 3
    %p199 = pnand %p197, %p198
    %p200 = pneg %p199
    // Predicated region
    $region29: #{decoder_only_transformer.22} parent=5 // pred_check
      _
    $region30: #{decoder_only_transformer.22} parent=5 // pred_check_branch
      %202 = sbr.rel (%p199) target = $region32
    $region31: #{decoder_only_transformer.22} parent=5 // pred_region
      %s203 = ssub.s32 %s9, 1
      %p204 = scmp.lt.s32.totalorder %s19, 5
      %s205 = scalar_select %p204, %s19, 5
      %p206 = scmp.lt.s32.totalorder %s20, 0
      %s207 = scalar_select %p206, %s20, 0
      %s208 = sadd.s32 %s207, %s205
      %s209 = smul.addr %s208, 8
      %s210 = scalar_lea.vmem %s0, %s209
      %p211 = pneg %p56
      %p212 = pneg %p53
      %s213 = sadd.s32 %s19, 2
      %p214 = scmp.lt.s32.totalorder %s213, 5
      %s215 = scalar_select %p214, %s213, 5
      %p216 = scmp.lt.s32.totalorder %s21, 0
      %s217 = scalar_select %p216, %s21, 0
      %s218 = sadd.s32 %s217, %s215
      %s219 = smul.addr %s218, 8
      %s220 = scalar_lea.vmem %s1, %s219
      %p221 = pneg %p86
      %p222 = pneg %p83
      %s223 = sadd.s32 %s19, 4
      %p224 = scmp.lt.s32.totalorder %s223, 5
      %s225 = scalar_select %p224, %s223, 5
      %p226 = scmp.lt.s32.totalorder %s21, 0
      %s227 = scalar_select %p226, %s21, 0
      %s228 = sadd.s32 %s227, %s225
      %s229 = smul.addr %s228, 8
      %s230 = scalar_lea.vmem %s2, %s229
      %p231 = pneg %p116
      %p232 = pneg %p113
      %p233 = pneg %p144
      %p234 = pneg %p141
      %p235 = scmp.lt.s32.totalorder %s19, 1
      %s236 = scalar_select %p235, %s19, 1
      %p237 = scmp.lt.s32.totalorder %s20, 0
      %s238 = scalar_select %p237, %s20, 0
      %s239 = sadd.s32 %s238, %s236
      %s240 = smul.addr %s239, 8
      %s241 = scalar_lea.vmem %s3, %s240
      %p242 = scmp.lt.s32.totalorder %s19, 5
      %s243 = scalar_select %p242, %s19, 5
      %p244 = scmp.lt.s32.totalorder %s20, 0
      %s245 = scalar_select %p244, %s20, 0
      %s246 = sadd.s32 %s245, %s243
      %s247 = smul.addr %s246, 8
      %s248 = scalar_lea.vmem %s0, %s247
      %s249 = sadd.s32 %s19, 2
      %p250 = scmp.lt.s32.totalorder %s249, 5
      %s251 = scalar_select %p250, %s249, 5
      %p252 = scmp.lt.s32.totalorder %s21, 0
      %s253 = scalar_select %p252, %s21, 0
      %s254 = sadd.s32 %s253, %s251
      %s255 = smul.addr %s254, 8
      %s256 = scalar_lea.vmem %s1, %s255
      %s257 = sadd.s32 %s19, 2
      %s258 = sadd.s32 %s19, 4
      %p259 = scmp.lt.s32.totalorder %s258, 5
      %s260 = scalar_select %p259, %s258, 5
      %p261 = scmp.lt.s32.totalorder %s21, 0
      %s262 = scalar_select %p261, %s21, 0
      %s263 = sadd.s32 %s262, %s260
      %s264 = smul.addr %s263, 8
      %s265 = scalar_lea.vmem %s2, %s264
      %s266 = sadd.s32 %s19, 4
      %p267 = scmp.lt.s32.totalorder %s19, 1
      %s268 = scalar_select %p267, %s19, 1
      %p269 = scmp.lt.s32.totalorder %s20, 0
      %s270 = scalar_select %p269, %s20, 0
      %s271 = sadd.s32 %s270, %s268
      %s272 = smul.addr %s271, 8
      %s273 = scalar_lea.vmem %s3, %s272
      %p275 = scmp.eq.s32.totalorder %s21, 0
      // Predicated region
      $region33: #{decoder_only_transformer.22} parent=31 // pred_check
        %p276 = pneg %p275
      $region34: #{decoder_only_transformer.22} parent=31 // pred_check_branch
        %278 = sbr.rel (%p276) target = $region36
      $region35: #{decoder_only_transformer.22} parent=31 // pred_region
        %vm279 = vcmask 7168
        %280 = vst.msk [vmem:[#allocation2] sm:$0xff] %vm279, -inf
        %281 = vst.msk [vmem:[#allocation2 + $0x8] sm:$0xff] %vm279, -inf
        %282 = vst.msk [vmem:[#allocation2 + $0x10] sm:$0xff] %vm279, -inf
        %283 = vst.msk [vmem:[#allocation2 + $0x18] sm:$0xff] %vm279, -inf
        %284 = vst.msk [vmem:[#allocation3] sm:$0xff] %vm279, 0.0
        %285 = vst.msk [vmem:[#allocation3 + $0x8] sm:$0xff] %vm279, 0.0
        %286 = vst.msk [vmem:[#allocation3 + $0x10] sm:$0xff] %vm279, 0.0
        %287 = vst.msk [vmem:[#allocation3 + $0x18] sm:$0xff] %vm279, 0.0
        %vm288 = vcmask 64512
        %289 = vst.msk [vmem:[#allocation4] sm:$0xff] %vm288, 0.0
        %290 = vst.msk [vmem:[#allocation4 + $0x8] sm:$0xff] %vm288, 0.0
        %291 = vst.msk [vmem:[#allocation4 + $0x10] sm:$0xff] %vm288, 0.0
        %292 = vst.msk [vmem:[#allocation4 + $0x18] sm:$0xff] %vm288, 0.0
      $region36: #{decoder_only_transformer.22} parent=31 // pred_fallthru
        _
      %v293 = vld [vmem:[%s248] sm:$0xff]
      %v294 = vld [vmem:[%s256] sm:$0xff]
      %v295 = vld [vmem:[%s265] sm:$0xff]
      %v296 = vpack.c.bf16 %v293, %v293
      %v297 = vpack.c.bf16 %v294, %v294
      %v298 = vpack.c.bf16 %v295, %v295
      %vm299 = vcmask 64512
      %v301 = vsel %vm299, %v296, 0
      %v304 = vsel %vm299, %v297, 0
      %306 = vmatpush.bf16.xpose.msra.mxu0 0
      %307 = vmatpush.bf16.xpose.msra.mxu0 0
      %308 = vmatpush.bf16.xpose.msra.mxu0 0
      %309 = vmatpush.bf16.xpose.msra.mxu0 0
      %310 = vmatpush.bf16.xpose.msra.mxu0 0
      %311 = vmatpush.bf16.xpose.msra.mxu0 0
      %312 = vmatpush.bf16.xpose.msra.mxu0 0
      %313 = vmatpush.bf16.xpose.msra.mxu0 %v304
      %314 = vmatmul.bf16.gmra.mxu0 %v301
      %v315 = vpop.f32.mrf.mxu0
      %v316 = vadd.f32 0.0, %v315
      %v317 = vpop.f32.mrf.mxu0
      %318 = vdwg.mxu0
      %v319 = vld [vmem:[#allocation2] sm:$0xff]
      %v320 = vsel %vm299, %v316, -inf
      %321 = vmax.xlane.f32.xlu0 %v320
      %v322 = vpop.xlane.xlu0 %321
      %v323 = vmax.f32 %v319, %v322
      %v324 = vsub.f32 %v319, %v323
      %v325 = vmul.f32 %v324, 1.442695
      %v326 = vpow.pop %v325
      %328 = vset.pattern.permute.xlu0 0
      %329 = vperm.xlu0 %328, %v323
      %v330 = vpop.permute.xlu0 %329
      %v332 = vsub.f32 %v316, %v330
      %v333 = vmul.f32 %v332, 1.442695
      %v334 = vpow.pop %v333
      %v335 = vld [vmem:[#allocation3] sm:$0xff]
      %v336 = vmul.f32 %v326, %v335
      %v337 = vsel %vm299, %v334, 0.0
      %338 = vadd.xlane.f32.xlu0 %v337
      %v339 = vpop.xlane.xlu0 %338
      %v340 = vadd.f32 %v336, %v339
      %vm341 = vcmask 7168
      %342 = vst.msk [vmem:[#allocation3] sm:$0xff] %vm341, %v340
      %v343 = vld [vmem:[#allocation4] sm:$0xff]
      %345 = vset.pattern.permute.xlu0 0
      %346 = vperm.xlu0 %345, %v326
      %v347 = vpop.permute.xlu0 %346
      %v349 = vmul.f32 %v347, %v343
      %v350 = vpack.c.bf16 %v334, %v334
      %v352 = vsel %vm299, %v350, 0
      %vm354 = vcmask 1043456
      %v356 = vsel %vm354, %v298, 0
      %358 = vmatpush.bf16.msra.mxu0 0
      %359 = vmatpush.bf16.msra.mxu0 0
      %360 = vmatpush.bf16.msra.mxu0 0
      %361 = vmatpush.bf16.msra.mxu0 0
      %362 = vmatpush.bf16.msra.mxu0 0
      %363 = vmatpush.bf16.msra.mxu0 0
      %364 = vmatpush.bf16.msra.mxu0 0
      %365 = vmatpush.bf16.msra.mxu0 %v356
      %366 = vmatmul.bf16.gmra.mxu0 %v352
      %v367 = vpop.f32.mrf.mxu0
      %v368 = vadd.f32 0.0, %v367
      %v369 = vpop.f32.mrf.mxu0
      %370 = vdwg.mxu0
      %v371 = vadd.f32 %v349, %v368
      %372 = vst.msk [vmem:[#allocation4] sm:$0xff] %vm299, %v371
      %373 = vst.msk [vmem:[#allocation2] sm:$0xff] %vm341, %v323
      %375 = vrot.lane.b32.xlu0 %v296, 120
      %v376 = vpop.permute.xlu0 %375
      %378 = vrot.lane.b32.xlu0 %v297, 120
      %v379 = vpop.permute.xlu0 %378
      %v381 = vsel %vm299, %v376, 0
      %v384 = vsel %vm299, %v379, 0
      %386 = vmatpush.bf16.xpose.msra.mxu0 0
      %387 = vmatpush.bf16.xpose.msra.mxu0 0
      %388 = vmatpush.bf16.xpose.msra.mxu0 0
      %389 = vmatpush.bf16.xpose.msra.mxu0 0
      %390 = vmatpush.bf16.xpose.msra.mxu0 0
      %391 = vmatpush.bf16.xpose.msra.mxu0 0
      %392 = vmatpush.bf16.xpose.msra.mxu0 0
      %393 = vmatpush.bf16.xpose.msra.mxu0 %v384
      %394 = vmatmul.bf16.gmra.mxu0 %v381
      %v395 = vpop.f32.mrf.mxu0
      %v396 = vadd.f32 0.0, %v395
      %v397 = vpop.f32.mrf.mxu0
      %398 = vdwg.mxu0
      %s399 = scalar_lea.vmem [#allocation2], 8
      %v400 = vld [vmem:[%s399] sm:$0xff]
      %v401 = vsel %vm299, %v396, -inf
      %402 = vmax.xlane.f32.xlu0 %v401
      %v403 = vpop.xlane.xlu0 %402
      %v404 = vmax.f32 %v400, %v403
      %v405 = vsub.f32 %v400, %v404
      %v406 = vmul.f32 %v405, 1.442695
      %v407 = vpow.pop %v406
      %409 = vset.pattern.permute.xlu0 0
      %410 = vperm.xlu0 %409, %v404
      %v411 = vpop.permute.xlu0 %410
      %v413 = vsub.f32 %v396, %v411
      %v414 = vmul.f32 %v413, 1.442695
      %v415 = vpow.pop %v414
      %s416 = scalar_lea.vmem [#allocation3], 8
      %v417 = vld [vmem:[%s416] sm:$0xff]
      %v418 = vmul.f32 %v407, %v417
      %v419 = vsel %vm299, %v415, 0.0
      %420 = vadd.xlane.f32.xlu0 %v419
      %v421 = vpop.xlane.xlu0 %420
      %v422 = vadd.f32 %v418, %v421
      %423 = vst.msk [vmem:[%s416] sm:$0xff] %vm341, %v422
      %s424 = scalar_lea.vmem [#allocation4], 8
      %v425 = vld [vmem:[%s424] sm:$0xff]
      %427 = vset.pattern.permute.xlu0 0
      %428 = vperm.xlu0 %427, %v407
      %v429 = vpop.permute.xlu0 %428
      %v431 = vmul.f32 %v429, %v425
      %v432 = vpack.c.bf16 %v415, %v415
      %434 = vrot.lane.b32.xlu0 %v298, 120
      %v435 = vpop.permute.xlu0 %434
      %v437 = vsel %vm299, %v432, 0
      %v440 = vsel %vm354, %v435, 0
      %442 = vmatpush.bf16.msra.mxu0 0
      %443 = vmatpush.bf16.msra.mxu0 0
      %444 = vmatpush.bf16.msra.mxu0 0
      %445 = vmatpush.bf16.msra.mxu0 0
      %446 = vmatpush.bf16.msra.mxu0 0
      %447 = vmatpush.bf16.msra.mxu0 0
      %448 = vmatpush.bf16.msra.mxu0 0
      %449 = vmatpush.bf16.msra.mxu0 %v440
      %450 = vmatmul.bf16.gmra.mxu0 %v437
      %v451 = vpop.f32.mrf.mxu0
      %v452 = vadd.f32 0.0, %v451
      %v453 = vpop.f32.mrf.mxu0
      %454 = vdwg.mxu0
      %v455 = vadd.f32 %v431, %v452
      %456 = vst.msk [vmem:[%s424] sm:$0xff] %vm299, %v455
      %457 = vst.msk [vmem:[%s399] sm:$0xff] %vm341, %v404
      %458 = vrot.lane.b32.xlu0 %v296, 112
      %v459 = vpop.permute.xlu0 %458
      %460 = vrot.lane.b32.xlu0 %v297, 112
      %v461 = vpop.permute.xlu0 %460
      %v463 = vsel %vm299, %v459, 0
      %v466 = vsel %vm299, %v461, 0
      %468 = vmatpush.bf16.xpose.msra.mxu0 0
      %469 = vmatpush.bf16.xpose.msra.mxu0 0
      %470 = vmatpush.bf16.xpose.msra.mxu0 0
      %471 = vmatpush.bf16.xpose.msra.mxu0 0
      %472 = vmatpush.bf16.xpose.msra.mxu0 0
      %473 = vmatpush.bf16.xpose.msra.mxu0 0
      %474 = vmatpush.bf16.xpose.msra.mxu0 0
      %475 = vmatpush.bf16.xpose.msra.mxu0 %v466
      %476 = vmatmul.bf16.gmra.mxu0 %v463
      %v477 = vpop.f32.mrf.mxu0
      %v478 = vadd.f32 0.0, %v477
      %v479 = vpop.f32.mrf.mxu0
      %480 = vdwg.mxu0
      %s481 = scalar_lea.vmem [#allocation2], 16
      %v482 = vld [vmem:[%s481] sm:$0xff]
      %v483 = vsel %vm299, %v478, -inf
      %484 = vmax.xlane.f32.xlu0 %v483
      %v485 = vpop.xlane.xlu0 %484
      %v486 = vmax.f32 %v482, %v485
      %v487 = vsub.f32 %v482, %v486
      %v488 = vmul.f32 %v487, 1.442695
      %v489 = vpow.pop %v488
      %491 = vset.pattern.permute.xlu0 0
      %492 = vperm.xlu0 %491, %v486
      %v493 = vpop.permute.xlu0 %492
      %v495 = vsub.f32 %v478, %v493
      %v496 = vmul.f32 %v495, 1.442695
      %v497 = vpow.pop %v496
      %s498 = scalar_lea.vmem [#allocation3], 16
      %v499 = vld [vmem:[%s498] sm:$0xff]
      %v500 = vmul.f32 %v489, %v499
      %v501 = vsel %vm299, %v497, 0.0
      %502 = vadd.xlane.f32.xlu0 %v501
      %v503 = vpop.xlane.xlu0 %502
      %v504 = vadd.f32 %v500, %v503
      %505 = vst.msk [vmem:[%s498] sm:$0xff] %vm341, %v504
      %s506 = scalar_lea.vmem [#allocation4], 16
      %v507 = vld [vmem:[%s506] sm:$0xff]
      %509 = vset.pattern.permute.xlu0 0
      %510 = vperm.xlu0 %509, %v489
      %v511 = vpop.permute.xlu0 %510
      %v513 = vmul.f32 %v511, %v507
      %v514 = vpack.c.bf16 %v497, %v497
      %515 = vrot.lane.b32.xlu0 %v298, 112
      %v516 = vpop.permute.xlu0 %515
      %v518 = vsel %vm299, %v514, 0
      %v521 = vsel %vm354, %v516, 0
      %523 = vmatpush.bf16.msra.mxu0 0
      %524 = vmatpush.bf16.msra.mxu0 0
      %525 = vmatpush.bf16.msra.mxu0 0
      %526 = vmatpush.bf16.msra.mxu0 0
      %527 = vmatpush.bf16.msra.mxu0 0
      %528 = vmatpush.bf16.msra.mxu0 0
      %529 = vmatpush.bf16.msra.mxu0 0
      %530 = vmatpush.bf16.msra.mxu0 %v521
      %531 = vmatmul.bf16.gmra.mxu0 %v518
      %v532 = vpop.f32.mrf.mxu0
      %v533 = vadd.f32 0.0, %v532
      %v534 = vpop.f32.mrf.mxu0
      %535 = vdwg.mxu0
      %v536 = vadd.f32 %v513, %v533
      %537 = vst.msk [vmem:[%s506] sm:$0xff] %vm299, %v536
      %538 = vst.msk [vmem:[%s481] sm:$0xff] %vm341, %v486
      %539 = vrot.lane.b32.xlu0 %v296, 104
      %v540 = vpop.permute.xlu0 %539
      %541 = vrot.lane.b32.xlu0 %v297, 104
      %v542 = vpop.permute.xlu0 %541
      %v544 = vsel %vm299, %v540, 0
      %v547 = vsel %vm299, %v542, 0
      %549 = vmatpush.bf16.xpose.msra.mxu0 0
      %550 = vmatpush.bf16.xpose.msra.mxu0 0
      %551 = vmatpush.bf16.xpose.msra.mxu0 0
      %552 = vmatpush.bf16.xpose.msra.mxu0 0
      %553 = vmatpush.bf16.xpose.msra.mxu0 0
      %554 = vmatpush.bf16.xpose.msra.mxu0 0
      %555 = vmatpush.bf16.xpose.msra.mxu0 0
      %556 = vmatpush.bf16.xpose.msra.mxu0 %v547
      %557 = vmatmul.bf16.gmra.mxu0 %v544
      %v558 = vpop.f32.mrf.mxu0
      %v559 = vadd.f32 0.0, %v558
      %v560 = vpop.f32.mrf.mxu0
      %561 = vdwg.mxu0
      %s562 = scalar_lea.vmem [#allocation2], 24
      %v563 = vld [vmem:[%s562] sm:$0xff]
      %v564 = vsel %vm299, %v559, -inf
      %565 = vmax.xlane.f32.xlu0 %v564
      %v566 = vpop.xlane.xlu0 %565
      %v567 = vmax.f32 %v563, %v566
      %v568 = vsub.f32 %v563, %v567
      %v569 = vmul.f32 %v568, 1.442695
      %v570 = vpow.pop %v569
      %572 = vset.pattern.permute.xlu0 0
      %573 = vperm.xlu0 %572, %v567
      %v574 = vpop.permute.xlu0 %573
      %v576 = vsub.f32 %v559, %v574
      %v577 = vmul.f32 %v576, 1.442695
      %v578 = vpow.pop %v577
      %s579 = scalar_lea.vmem [#allocation3], 24
      %v580 = vld [vmem:[%s579] sm:$0xff]
      %v581 = vmul.f32 %v570, %v580
      %v582 = vsel %vm299, %v578, 0.0
      %583 = vadd.xlane.f32.xlu0 %v582
      %v584 = vpop.xlane.xlu0 %583
      %v585 = vadd.f32 %v581, %v584
      %586 = vst.msk [vmem:[%s579] sm:$0xff] %vm341, %v585
      %s587 = scalar_lea.vmem [#allocation4], 24
      %v588 = vld [vmem:[%s587] sm:$0xff]
      %590 = vset.pattern.permute.xlu0 0
      %591 = vperm.xlu0 %590, %v570
      %v592 = vpop.permute.xlu0 %591
      %v594 = vmul.f32 %v592, %v588
      %v595 = vpack.c.bf16 %v578, %v578
      %596 = vrot.lane.b32.xlu0 %v298, 104
      %v597 = vpop.permute.xlu0 %596
      %v599 = vsel %vm299, %v595, 0
      %v602 = vsel %vm354, %v597, 0
      %604 = vmatpush.bf16.msra.mxu0 0
      %605 = vmatpush.bf16.msra.mxu0 0
      %606 = vmatpush.bf16.msra.mxu0 0
      %607 = vmatpush.bf16.msra.mxu0 0
      %608 = vmatpush.bf16.msra.mxu0 0
      %609 = vmatpush.bf16.msra.mxu0 0
      %610 = vmatpush.bf16.msra.mxu0 0
      %611 = vmatpush.bf16.msra.mxu0 %v602
      %612 = vmatmul.bf16.gmra.mxu0 %v599
      %v613 = vpop.f32.mrf.mxu0
      %v614 = vadd.f32 0.0, %v613
      %v615 = vpop.f32.mrf.mxu0
      %616 = vdwg.mxu0
      %v617 = vadd.f32 %v594, %v614
      %618 = vst.msk [vmem:[%s587] sm:$0xff] %vm299, %v617
      %619 = vst.msk [vmem:[%s562] sm:$0xff] %vm341, %v567
      // Predicated region
      $region37: #{decoder_only_transformer.22} parent=31 // pred_check
        %p620 = pneg %p275
      $region38: #{decoder_only_transformer.22} parent=31 // pred_check_branch
        %622 = sbr.rel (%p620) target = $region40
      $region39: #{decoder_only_transformer.22} parent=31 // pred_region
        %v623 = vld [vmem:[#allocation3] sm:$0xff]
        %v624 = vrcp.pop %v623
        %v625 = vld [vmem:[#allocation4] sm:$0xff]
        %627 = vset.pattern.permute.xlu0 0
        %628 = vperm.xlu0 %627, %v624
        %v629 = vpop.permute.xlu0 %628
        %v631 = vmul.f32 %v625, %v629
        %v632 = vld [vmem:[%s416] sm:$0xff]
        %v633 = vrcp.pop %v632
        %v634 = vld [vmem:[%s424] sm:$0xff]
        %636 = vset.pattern.permute.xlu0 0
        %637 = vperm.xlu0 %636, %v633
        %v638 = vpop.permute.xlu0 %637
        %v640 = vmul.f32 %v634, %v638
        %v641 = vld [vmem:[%s498] sm:$0xff]
        %v642 = vrcp.pop %v641
        %v643 = vld [vmem:[%s506] sm:$0xff]
        %645 = vset.pattern.permute.xlu0 0
        %646 = vperm.xlu0 %645, %v642
        %v647 = vpop.permute.xlu0 %646
        %v649 = vmul.f32 %v643, %v647
        %v650 = vld [vmem:[%s579] sm:$0xff]
        %v651 = vrcp.pop %v650
        %v652 = vld [vmem:[%s587] sm:$0xff]
        %654 = vset.pattern.permute.xlu0 0
        %655 = vperm.xlu0 %654, %v651
        %v656 = vpop.permute.xlu0 %655
        %v658 = vmul.f32 %v652, %v656
        %660 = vrot.lane.b32.xlu0 %v640, 8
        %v661 = vpop.permute.xlu0 %660
        %664 = vrot.lane.b32.xlu0 %v649, 16
        %v665 = vpop.permute.xlu0 %664
        %668 = vrot.lane.b32.xlu0 %v658, 24
        %v669 = vpop.permute.xlu0 %668
        %v671 = vsel %vm299, %v631, %v661
        %vm672 = vcmask 130048
        %v673 = vsel %vm672, %v671, %v665
        %vm674 = vcmask 195584
        %v675 = vsel %vm674, %v673, %v669
        %vm676 = vcmask 261120
        %677 = vst.msk [vmem:[%s273] sm:$0xff] %vm676, %v675
      $region40: #{decoder_only_transformer.22} parent=31 // pred_fallthru
        _
      %p678 = scmp.lt.s32.totalorder %s19, 1
      %s679 = scalar_select %p678, %s19, 1
      %p680 = scmp.lt.s32.totalorder %s20, 0
      %s681 = scalar_select %p680, %s20, 0
      %s682 = sadd.s32 %s681, %s679
      %s683 = smul.addr %s682, 8
      %s684 = scalar_lea.vmem %s3, %s683
      // Predicated region
      $region41: #{decoder_only_transformer.22} parent=31 // pred_check
        %p685 = pneg %p141
      $region42: #{decoder_only_transformer.22} parent=31 // pred_check_branch
        %687 = sbr.rel (%p685) target = $region44
      $region43: #{decoder_only_transformer.22} parent=31 // pred_region
        _
      $region44: #{decoder_only_transformer.22} parent=31 // pred_fallthru
        _
    $region32: #{decoder_only_transformer.22} parent=5 // pred_fallthru
      _
    %p688 = scmp.le.s32.totalorder 2, %s9
    // Predicated region
    $region45: #{decoder_only_transformer.22} parent=5 // pred_check
      %p689 = pneg %p688
    $region46: #{decoder_only_transformer.22} parent=5 // pred_check_branch
      %691 = sbr.rel (%p689) target = $region48
    $region47: #{decoder_only_transformer.22} parent=5 // pred_region
      %s692 = ssub.s32 %s9, 2
      // Predicated region
      $region49: #{decoder_only_transformer.22} parent=47 // pred_check
        %p693 = pneg %p147
      $region50: #{decoder_only_transformer.22} parent=47 // pred_check_branch
        %695 = sbr.rel (%p693) target = $region52
      $region51: #{decoder_only_transformer.22} parent=47 // pred_region
        %p696 = scmp.lt.s32.totalorder %s22, 1
        %s697 = scalar_select %p696, %s22, 1
        %p698 = scmp.lt.s32.totalorder %s23, 0
        %s699 = scalar_select %p698, %s23, 0
        %s700 = sadd.s32 %s699, %s697
        %s701 = smul.addr %s700, 8
        %s702 = scalar_lea.vmem %s3, %s701
      $region52: #{decoder_only_transformer.22} parent=47 // pred_fallthru
        _
    $region48: #{decoder_only_transformer.22} parent=5 // pred_fallthru
      _
  $region6: #{decoder_only_transformer.22} parent=0 // loop_footer
    %s13 = sadd.s32 1, %s9
  $region7: #{decoder_only_transformer.22} parent=0 // loop_footer_branch
    %8 = sbr.rel target = $region3
  $region8: #{decoder_only_transformer.22} parent=0 // loop_exit
    _

// kernel: decoder_only_transformer.23
$region0: #{decoder_only_transformer.23}
  #allocation0 [shape = 'u32[]', space=smem, size = 0x4, offset = 0x4, fixed_abs, tag = 'smem constant byte address 0x4 - core index']
  #allocation1 [shape = 'u32[72,128]{1,0:T(1,128)}', space=vmem, size = 0x9000, scoped, tag = 'internal scratch']
  #allocation2 [shape = 'f32[16,32]{1,0:T(8,128)}', space=vmem, size = 0x2000, scoped, tag = 'scratch operand']
  %s0 = inlined_call_operand.vmem [shape: f32[16,32], index: 0, kind: input, shape index: {}]
  %s1 = inlined_call_operand.vmem [shape: bf16[32,32], index: 1, kind: input, shape index: {}]
  %s2 = inlined_call_operand.vmem [shape: f32[1,32], index: 2, kind: input, shape index: {}]
  %s3 = inlined_call_operand.vmem [shape: f32[16,32], index: 3, kind: input, shape index: {}]
  %s4 = inlined_call_operand.vmem [shape: f32[1,32], index: 4, kind: input, shape index: {}]
  %s5 = inlined_call_operand.vmem [shape: f32[1,32], index: 5, kind: input, shape index: {}]
  %s6 = inlined_call_operand.vmem [shape: f32[16,32], index: 6, kind: output, shape index: {}]
  %s7 = sld [smem:[#allocation0]]
  $region42: #{decoder_only_transformer.23} parent=0
    _
  %s9 = ssub.s32 1, %s7
  %s10 = scalar_select 0, %s9, %s7
  // Predicated region
  $region2: #{decoder_only_transformer.23} parent=0 // pred_check
    _
  $region3: #{decoder_only_transformer.23} parent=0 // pred_check_branch
    %12 = sbr.rel (0) target = $region5
  $region4: #{decoder_only_transformer.23} parent=0 // pred_region
    _
  $region5: #{decoder_only_transformer.23} parent=0 // pred_fallthru
    _
  // Predicated region
  $region6: #{decoder_only_transformer.23} parent=0 // pred_check
    _
  $region7: #{decoder_only_transformer.23} parent=0 // pred_check_branch
    %14 = sbr.rel (0) target = $region9
  $region8: #{decoder_only_transformer.23} parent=0 // pred_region
    _
  $region9: #{decoder_only_transformer.23} parent=0 // pred_fallthru
    _
  // Predicated region
  $region10: #{decoder_only_transformer.23} parent=0 // pred_check
    _
  $region11: #{decoder_only_transformer.23} parent=0 // pred_check_branch
    %16 = sbr.rel (0) target = $region13
  $region12: #{decoder_only_transformer.23} parent=0 // pred_region
    _
  $region13: #{decoder_only_transformer.23} parent=0 // pred_fallthru
    _
  // Predicated region
  $region14: #{decoder_only_transformer.23} parent=0 // pred_check
    _
  $region15: #{decoder_only_transformer.23} parent=0 // pred_check_branch
    %18 = sbr.rel (0) target = $region17
  $region16: #{decoder_only_transformer.23} parent=0 // pred_region
    _
  $region17: #{decoder_only_transformer.23} parent=0 // pred_fallthru
    _
  // Predicated region
  $region18: #{decoder_only_transformer.23} parent=0 // pred_check
    _
  $region19: #{decoder_only_transformer.23} parent=0 // pred_check_branch
    %20 = sbr.rel (0) target = $region21
  $region20: #{decoder_only_transformer.23} parent=0 // pred_region
    _
  $region21: #{decoder_only_transformer.23} parent=0 // pred_fallthru
    _
  // Predicated region
  $region22: #{decoder_only_transformer.23} parent=0 // pred_check
    _
  $region23: #{decoder_only_transformer.23} parent=0 // pred_check_branch
    %22 = sbr.rel (0) target = $region25
  $region24: #{decoder_only_transformer.23} parent=0 // pred_region
    _
  $region25: #{decoder_only_transformer.23} parent=0 // pred_fallthru
    _
  %p24 = scmp.eq.s32.totalorder 0, 0
  // Predicated region
  $region26: #{decoder_only_transformer.23} parent=0 // pred_check
    %p25 = pneg %p24
  $region27: #{decoder_only_transformer.23} parent=0 // pred_check_branch
    %27 = sbr.rel (%p25) target = $region29
  $region28: #{decoder_only_transformer.23} parent=0 // pred_region
    %vm28 = vcmask 261120
    %29 = vst.msk [vmem:[#allocation2] sm:$0xff] %vm28, 0.0
    %30 = vst.msk [vmem:[#allocation2 + $0x8] sm:$0xff] %vm28, 0.0
  $region29: #{decoder_only_transformer.23} parent=0 // pred_fallthru
    _
  %v31 = vld [vmem:[#allocation2] sm:$0xff]
  %v32 = vld [vmem:[#allocation2 + $0x8] sm:$0xff]
  %v33 = vld [vmem:[%s0] sm:$0xff]
  %v34 = vld [vmem:[%s0 + $0x8] sm:$0xff]
  %v35 = vpack.c.bf16 %v34, %v33
  %v36 = vld [vmem:[%s1] sm:$0xf]
  %v37 = vld [vmem:[%s1 + $0x4] sm:$0xf]
  %v38 = vld [vmem:[%s1 + $0x8] sm:$0xf]
  %v39 = vld [vmem:[%s1 + $0xc] sm:$0xf]
  %v44 = vunpack.c.l.b16 %v36
  %v45 = vunpack.c.l.b16 %v37
  %v46 = vunpack.c.l.b16 %v38
  %v47 = vunpack.c.l.b16 %v39
  %v48 = vpack.c.b16 %v45, %v44
  %v49 = vpack.c.b16 %v47, %v46
  %vm52 = vcmask 261120
  %v54 = vsel %vm52, %v35, 0
  %56 = vmatpush.bf16.msra.mxu0 0
  %57 = vmatpush.bf16.msra.mxu0 0
  %58 = vmatpush.bf16.msra.mxu0 0
  %59 = vmatpush.bf16.msra.mxu0 0
  %60 = vmatpush.bf16.msra.mxu0 0
  %61 = vmatpush.bf16.msra.mxu0 0
  %62 = vmatpush.bf16.msra.mxu0 %v49
  %63 = vmatpush.bf16.msra.mxu0 %v48
  %64 = vmatmul.bf16.gmra.mxu0 %v54
  %v65 = vpop.f32.mrf.mxu0
  %v66 = vadd.f32 0.0, %v65
  %v67 = vpop.f32.mrf.mxu0
  %v68 = vadd.f32 0.0, %v67
  %69 = vdwg.mxu0
  %v70 = vadd.f32 %v31, %v66
  %v71 = vadd.f32 %v32, %v68
  %72 = vst.msk [vmem:[#allocation2] sm:$0xff] %vm52, %v70
  %73 = vst.msk [vmem:[#allocation2 + $0x8] sm:$0xff] %vm52, %v71
  // Predicated region
  $region30: #{decoder_only_transformer.23} parent=0 // pred_check
    %p74 = pneg %p24
  $region31: #{decoder_only_transformer.23} parent=0 // pred_check_branch
    %76 = sbr.rel (%p74) target = $region33
  $region32: #{decoder_only_transformer.23} parent=0 // pred_region
    %v77 = vld [vmem:[#allocation2] sm:$0xff]
    %v78 = vld [vmem:[#allocation2 + $0x8] sm:$0xff]
    %v79 = vld [vmem:[%s2] sm:$0x1]
    %v81 = vperm.slane %v79, 0
    %v83 = vadd.f32 %v77, %v81
    %v84 = vadd.f32 %v78, %v81
    %v85 = vld [vmem:[%s3] sm:$0xff]
    %v86 = vld [vmem:[%s3 + $0x8] sm:$0xff]
    %v87 = vadd.f32 %v83, %v85
    %v88 = vadd.f32 %v84, %v86
    %v89 = vsel %vm52, %v87, 0.0
    %90 = vadd.xlane.f32.xlu0 %v89
    %v91 = vpop.xlane.xlu0 %90
    %v92 = vsel %vm52, %v88, 0.0
    %93 = vadd.xlane.f32.xlu0 %v92
    %v94 = vpop.xlane.xlu0 %93
    %v95 = vrcp.pop 32.0
    %v96 = vmul.f32 32.0, %v95
    %v97 = vsub.f32 1.0, %v96
    %v98 = vmul.f32 %v95, %v97
    %v99 = vadd.f32 %v95, %v98
    %vm100 = vweird.f32 %v95
    %v101 = vsel %vm100, %v95, %v99
    %v102 = vmul.f32 %v91, %v101
    %v103 = vmul.f32 %v94, %v101
    %v104 = vsub.f32 %v87, %v102
    %v105 = vsub.f32 %v88, %v103
    %v106 = vmul.f32 %v104, %v104
    %v107 = vmul.f32 %v105, %v105
    %v108 = vsel %vm52, %v106, 0.0
    %109 = vadd.xlane.f32.xlu0 %v108
    %v110 = vpop.xlane.xlu0 %109
    %v111 = vsel %vm52, %v107, 0.0
    %112 = vadd.xlane.f32.xlu0 %v111
    %v113 = vpop.xlane.xlu0 %112
    %v114 = vmul.f32 %v110, %v101
    %v115 = vmul.f32 %v113, %v101
    %v116 = vadd.f32 %v114, 1e-05
    %v117 = vadd.f32 %v115, 1e-05
    %v118 = vrsqrt.pop %v116
    %v119 = vmul.f32 %v118, %v116
    %v120 = vmul.f32 %v119, %v118
    %v121 = vmul.f32 0.5, %v120
    %v122 = vsub.f32 1.5, %v121
    %v123 = vmul.f32 %v118, %v122
    %vm124 = vweird.f32 %v116
    %vm125 = vweird.f32 %v118
    %vm126 = vmor %vm124, %vm125
    %v127 = vsel %vm126, %v118, %v123
    %v128 = vrsqrt.pop %v117
    %v129 = vmul.f32 %v128, %v117
    %v130 = vmul.f32 %v129, %v128
    %v131 = vmul.f32 0.5, %v130
    %v132 = vsub.f32 1.5, %v131
    %v133 = vmul.f32 %v128, %v132
    %vm134 = vweird.f32 %v117
    %vm135 = vweird.f32 %v128
    %vm136 = vmor %vm134, %vm135
    %v137 = vsel %vm136, %v128, %v133
    %v138 = vmul.f32 %v104, %v127
    %v139 = vmul.f32 %v105, %v137
    %v140 = vld [vmem:[%s4] sm:$0x1]
    %v142 = vperm.slane %v140, 0
    %v144 = vmul.f32 %v138, %v142
    %v145 = vmul.f32 %v139, %v142
    %v146 = vld [vmem:[%s5] sm:$0x1]
    %v148 = vperm.slane %v146, 0
    %v150 = vadd.f32 %v144, %v148
    %v151 = vadd.f32 %v145, %v148
    %152 = vst.msk [vmem:[%s6] sm:$0xff] %vm52, %v150
    %153 = vst.msk [vmem:[%s6 + $0x8] sm:$0xff] %vm52, %v151
  $region33: #{decoder_only_transformer.23} parent=0 // pred_fallthru
    _
  // Predicated region
  $region34: #{decoder_only_transformer.23} parent=0 // pred_check
    _
  $region35: #{decoder_only_transformer.23} parent=0 // pred_check_branch
    %155 = sbr.rel (0) target = $region37
  $region36: #{decoder_only_transformer.23} parent=0 // pred_region
    _
  $region37: #{decoder_only_transformer.23} parent=0 // pred_fallthru
    _
  // Predicated region
  $region38: #{decoder_only_transformer.23} parent=0 // pred_check
    _
  $region39: #{decoder_only_transformer.23} parent=0 // pred_check_branch
    %157 = sbr.rel (0) target = $region41
  $region40: #{decoder_only_transformer.23} parent=0 // pred_region
    _
  $region41: #{decoder_only_transformer.23} parent=0 // pred_fallthru
    _

// kernel: decoder_only_transformer.24
$region0: #{decoder_only_transformer.24}
  #allocation0 [shape = 'u32[]', space=smem, size = 0x4, offset = 0x4, fixed_abs, tag = 'smem constant byte address 0x4 - core index']
  #allocation1 [shape = 'u32[72,128]{1,0:T(1,128)}', space=vmem, size = 0x9000, scoped, tag = 'internal scratch']
  #allocation2 [shape = 'f32[16,32]{1,0:T(8,128)}', space=vmem, size = 0x2000, scoped, tag = 'scratch operand']
  %s0 = inlined_call_operand.vmem [shape: f32[16,32], index: 0, kind: input, shape index: {}]
  %s1 = inlined_call_operand.vmem [shape: bf16[32,32], index: 1, kind: input, shape index: {}]
  %s2 = inlined_call_operand.vmem [shape: f32[1,32], index: 2, kind: input, shape index: {}]
  %s3 = inlined_call_operand.vmem [shape: f32[16,32], index: 3, kind: output, shape index: {}]
  %s4 = sld [smem:[#allocation0]]
  $region30: #{decoder_only_transformer.24} parent=0
    _
  %s6 = ssub.s32 1, %s4
  %s7 = scalar_select 0, %s6, %s4
  // Predicated region
  $region2: #{decoder_only_transformer.24} parent=0 // pred_check
    _
  $region3: #{decoder_only_transformer.24} parent=0 // pred_check_branch
    %9 = sbr.rel (0) target = $region5
  $region4: #{decoder_only_transformer.24} parent=0 // pred_region
    _
  $region5: #{decoder_only_transformer.24} parent=0 // pred_fallthru
    _
  // Predicated region
  $region6: #{decoder_only_transformer.24} parent=0 // pred_check
    _
  $region7: #{decoder_only_transformer.24} parent=0 // pred_check_branch
    %11 = sbr.rel (0) target = $region9
  $region8: #{decoder_only_transformer.24} parent=0 // pred_region
    _
  $region9: #{decoder_only_transformer.24} parent=0 // pred_fallthru
    _
  // Predicated region
  $region10: #{decoder_only_transformer.24} parent=0 // pred_check
    _
  $region11: #{decoder_only_transformer.24} parent=0 // pred_check_branch
    %13 = sbr.rel (0) target = $region13
  $region12: #{decoder_only_transformer.24} parent=0 // pred_region
    _
  $region13: #{decoder_only_transformer.24} parent=0 // pred_fallthru
    _
  %p15 = scmp.eq.s32.totalorder 0, 0
  // Predicated region
  $region14: #{decoder_only_transformer.24} parent=0 // pred_check
    %p16 = pneg %p15
  $region15: #{decoder_only_transformer.24} parent=0 // pred_check_branch
    %18 = sbr.rel (%p16) target = $region17
  $region16: #{decoder_only_transformer.24} parent=0 // pred_region
    %vm19 = vcmask 261120
    %20 = vst.msk [vmem:[#allocation2] sm:$0xff] %vm19, 0.0
    %21 = vst.msk [vmem:[#allocation2 + $0x8] sm:$0xff] %vm19, 0.0
  $region17: #{decoder_only_transformer.24} parent=0 // pred_fallthru
    _
  %v22 = vld [vmem:[#allocation2] sm:$0xff]
  %v23 = vld [vmem:[#allocation2 + $0x8] sm:$0xff]
  %v24 = vld [vmem:[%s0] sm:$0xff]
  %v25 = vld [vmem:[%s0 + $0x8] sm:$0xff]
  %v26 = vpack.c.bf16 %v25, %v24
  %v27 = vld [vmem:[%s1] sm:$0xf]
  %v28 = vld [vmem:[%s1 + $0x4] sm:$0xf]
  %v29 = vld [vmem:[%s1 + $0x8] sm:$0xf]
  %v30 = vld [vmem:[%s1 + $0xc] sm:$0xf]
  %v35 = vunpack.c.l.b16 %v27
  %v36 = vunpack.c.l.b16 %v28
  %v37 = vunpack.c.l.b16 %v29
  %v38 = vunpack.c.l.b16 %v30
  %v39 = vpack.c.b16 %v36, %v35
  %v40 = vpack.c.b16 %v38, %v37
  %vm43 = vcmask 261120
  %v45 = vsel %vm43, %v26, 0
  %47 = vmatpush.bf16.msra.mxu0 0
  %48 = vmatpush.bf16.msra.mxu0 0
  %49 = vmatpush.bf16.msra.mxu0 0
  %50 = vmatpush.bf16.msra.mxu0 0
  %51 = vmatpush.bf16.msra.mxu0 0
  %52 = vmatpush.bf16.msra.mxu0 0
  %53 = vmatpush.bf16.msra.mxu0 %v40
  %54 = vmatpush.bf16.msra.mxu0 %v39
  %55 = vmatmul.bf16.gmra.mxu0 %v45
  %v56 = vpop.f32.mrf.mxu0
  %v57 = vadd.f32 0.0, %v56
  %v58 = vpop.f32.mrf.mxu0
  %v59 = vadd.f32 0.0, %v58
  %60 = vdwg.mxu0
  %v61 = vadd.f32 %v22, %v57
  %v62 = vadd.f32 %v23, %v59
  %63 = vst.msk [vmem:[#allocation2] sm:$0xff] %vm43, %v61
  %64 = vst.msk [vmem:[#allocation2 + $0x8] sm:$0xff] %vm43, %v62
  // Predicated region
  $region18: #{decoder_only_transformer.24} parent=0 // pred_check
    %p65 = pneg %p15
  $region19: #{decoder_only_transformer.24} parent=0 // pred_check_branch
    %67 = sbr.rel (%p65) target = $region21
  $region20: #{decoder_only_transformer.24} parent=0 // pred_region
    %v68 = vld [vmem:[#allocation2] sm:$0xff]
    %v69 = vld [vmem:[#allocation2 + $0x8] sm:$0xff]
    %v70 = vld [vmem:[%s2] sm:$0x1]
    %v72 = vperm.slane %v70, 0
    %v74 = vadd.f32 %v68, %v72
    %v75 = vadd.f32 %v69, %v72
    %76 = vst.msk [vmem:[%s3] sm:$0xff] %vm43, %v74
    %77 = vst.msk [vmem:[%s3 + $0x8] sm:$0xff] %vm43, %v75
  $region21: #{decoder_only_transformer.24} parent=0 // pred_fallthru
    _
  // Predicated region
  $region22: #{decoder_only_transformer.24} parent=0 // pred_check
    _
  $region23: #{decoder_only_transformer.24} parent=0 // pred_check_branch
    %79 = sbr.rel (0) target = $region25
  $region24: #{decoder_only_transformer.24} parent=0 // pred_region
    _
  $region25: #{decoder_only_transformer.24} parent=0 // pred_fallthru
    _
  // Predicated region
  $region26: #{decoder_only_transformer.24} parent=0 // pred_check
    _
  $region27: #{decoder_only_transformer.24} parent=0 // pred_check_branch
    %81 = sbr.rel (0) target = $region29
  $region28: #{decoder_only_transformer.24} parent=0 // pred_region
    _
  $region29: #{decoder_only_transformer.24} parent=0 // pred_fallthru
    _

// kernel: decoder_only_transformer.25
$region0: #{decoder_only_transformer.25}
  #allocation0 [shape = 'u32[]', space=smem, size = 0x4, offset = 0x4, fixed_abs, tag = 'smem constant byte address 0x4 - core index']
  #allocation1 [shape = 'u32[72,128]{1,0:T(1,128)}', space=vmem, size = 0x9000, scoped, tag = 'internal scratch']
  #allocation2 [shape = 'f32[16,64]{1,0:T(8,128)}', space=vmem, size = 0x2000, scoped, tag = 'scratch operand']
  %s0 = inlined_call_operand.vmem [shape: f32[16,32], index: 0, kind: input, shape index: {}]
  %s1 = inlined_call_operand.vmem [shape: bf16[32,64], index: 1, kind: input, shape index: {}]
  %s2 = inlined_call_operand.vmem [shape: f32[1,64], index: 2, kind: input, shape index: {}]
  %s3 = inlined_call_operand.vmem [shape: f32[16,64], index: 3, kind: output, shape index: {}]
  %s4 = sld [smem:[#allocation0]]
  $region30: #{decoder_only_transformer.25} parent=0
    _
  %s6 = ssub.s32 1, %s4
  %s7 = scalar_select 0, %s6, %s4
  // Predicated region
  $region2: #{decoder_only_transformer.25} parent=0 // pred_check
    _
  $region3: #{decoder_only_transformer.25} parent=0 // pred_check_branch
    %9 = sbr.rel (0) target = $region5
  $region4: #{decoder_only_transformer.25} parent=0 // pred_region
    _
  $region5: #{decoder_only_transformer.25} parent=0 // pred_fallthru
    _
  // Predicated region
  $region6: #{decoder_only_transformer.25} parent=0 // pred_check
    _
  $region7: #{decoder_only_transformer.25} parent=0 // pred_check_branch
    %11 = sbr.rel (0) target = $region9
  $region8: #{decoder_only_transformer.25} parent=0 // pred_region
    _
  $region9: #{decoder_only_transformer.25} parent=0 // pred_fallthru
    _
  // Predicated region
  $region10: #{decoder_only_transformer.25} parent=0 // pred_check
    _
  $region11: #{decoder_only_transformer.25} parent=0 // pred_check_branch
    %13 = sbr.rel (0) target = $region13
  $region12: #{decoder_only_transformer.25} parent=0 // pred_region
    _
  $region13: #{decoder_only_transformer.25} parent=0 // pred_fallthru
    _
  %p15 = scmp.eq.s32.totalorder 0, 0
  // Predicated region
  $region14: #{decoder_only_transformer.25} parent=0 // pred_check
    %p16 = pneg %p15
  $region15: #{decoder_only_transformer.25} parent=0 // pred_check_branch
    %18 = sbr.rel (%p16) target = $region17
  $region16: #{decoder_only_transformer.25} parent=0 // pred_region
    %vm19 = vcmask 523264
    %20 = vst.msk [vmem:[#allocation2] sm:$0xff] %vm19, 0.0
    %21 = vst.msk [vmem:[#allocation2 + $0x8] sm:$0xff] %vm19, 0.0
  $region17: #{decoder_only_transformer.25} parent=0 // pred_fallthru
    _
  %v22 = vld [vmem:[#allocation2] sm:$0xff]
  %v23 = vld [vmem:[#allocation2 + $0x8] sm:$0xff]
  %v24 = vld [vmem:[%s0] sm:$0xff]
  %v25 = vld [vmem:[%s0 + $0x8] sm:$0xff]
  %v26 = vpack.c.bf16 %v25, %v24
  %v27 = vld [vmem:[%s1] sm:$0xf]
  %v28 = vld [vmem:[%s1 + $0x4] sm:$0xf]
  %v29 = vld [vmem:[%s1 + $0x8] sm:$0xf]
  %v30 = vld [vmem:[%s1 + $0xc] sm:$0xf]
  %v35 = vunpack.c.l.b16 %v27
  %v36 = vunpack.c.l.b16 %v28
  %v37 = vunpack.c.l.b16 %v29
  %v38 = vunpack.c.l.b16 %v30
  %v39 = vpack.c.b16 %v36, %v35
  %v40 = vpack.c.b16 %v38, %v37
  %vm43 = vcmask 261120
  %v45 = vsel %vm43, %v26, 0
  %47 = vmatpush.bf16.msra.mxu0 0
  %48 = vmatpush.bf16.msra.mxu0 0
  %49 = vmatpush.bf16.msra.mxu0 0
  %50 = vmatpush.bf16.msra.mxu0 0
  %51 = vmatpush.bf16.msra.mxu0 0
  %52 = vmatpush.bf16.msra.mxu0 0
  %53 = vmatpush.bf16.msra.mxu0 %v40
  %54 = vmatpush.bf16.msra.mxu0 %v39
  %55 = vmatmul.bf16.gmra.mxu0 %v45
  %v56 = vpop.f32.mrf.mxu0
  %v57 = vadd.f32 0.0, %v56
  %v58 = vpop.f32.mrf.mxu0
  %v59 = vadd.f32 0.0, %v58
  %60 = vdwg.mxu0
  %v61 = vadd.f32 %v22, %v57
  %v62 = vadd.f32 %v23, %v59
  %vm63 = vcmask 523264
  %64 = vst.msk [vmem:[#allocation2] sm:$0xff] %vm63, %v61
  %65 = vst.msk [vmem:[#allocation2 + $0x8] sm:$0xff] %vm63, %v62
  // Predicated region
  $region18: #{decoder_only_transformer.25} parent=0 // pred_check
    %p66 = pneg %p15
  $region19: #{decoder_only_transformer.25} parent=0 // pred_check_branch
    %68 = sbr.rel (%p66) target = $region21
  $region20: #{decoder_only_transformer.25} parent=0 // pred_region
    %v69 = vld [vmem:[#allocation2] sm:$0xff]
    %v70 = vld [vmem:[#allocation2 + $0x8] sm:$0xff]
    %v71 = vld [vmem:[%s2] sm:$0x1]
    %v73 = vperm.slane %v71, 0
    %v75 = vadd.f32 %v69, %v73
    %v76 = vadd.f32 %v70, %v73
    %77 = vst.msk [vmem:[%s3] sm:$0xff] %vm63, %v75
    %78 = vst.msk [vmem:[%s3 + $0x8] sm:$0xff] %vm63, %v76
  $region21: #{decoder_only_transformer.25} parent=0 // pred_fallthru
    _
  // Predicated region
  $region22: #{decoder_only_transformer.25} parent=0 // pred_check
    _
  $region23: #{decoder_only_transformer.25} parent=0 // pred_check_branch
    %80 = sbr.rel (0) target = $region25
  $region24: #{decoder_only_transformer.25} parent=0 // pred_region
    _
  $region25: #{decoder_only_transformer.25} parent=0 // pred_fallthru
    _
  // Predicated region
  $region26: #{decoder_only_transformer.25} parent=0 // pred_check
    _
  $region27: #{decoder_only_transformer.25} parent=0 // pred_check_branch
    %82 = sbr.rel (0) target = $region29
  $region28: #{decoder_only_transformer.25} parent=0 // pred_region
    _
  $region29: #{decoder_only_transformer.25} parent=0 // pred_fallthru
    _

// kernel: decoder_only_transformer.28
$region0: #{decoder_only_transformer.28}
  #allocation0 [shape = 'u32[]', space=smem, size = 0x4, offset = 0x4, fixed_abs, tag = 'smem constant byte address 0x4 - core index']
  #allocation1 [shape = 'u32[72,128]{1,0:T(1,128)}', space=vmem, size = 0x9000, scoped, tag = 'internal scratch']
  #allocation2 [shape = 'f32[16,512]{1,0:T(8,128)}', space=vmem, size = 0x8000, scoped, tag = 'scratch operand']
  %s0 = inlined_call_operand.vmem [shape: f32[16,32], index: 0, kind: input, shape index: {}]
  %s1 = inlined_call_operand.vmem [shape: bf16[32,2048], index: 1, kind: input, shape index: {}]
  %s2 = inlined_call_operand.vmem [shape: f32[1,2048], index: 2, kind: input, shape index: {}]
  %s3 = inlined_call_operand.vmem [shape: f32[16,2048], index: 3, kind: output, shape index: {}]
  %s4 = sld [smem:[#allocation0]]
  $region95: #{decoder_only_transformer.28} parent=0
    _
  %s6 = ssub.s32 1, %s4
  %s7 = scalar_select 0, %s6, %s4
  $region1: #{decoder_only_transformer.28} parent=0
    #allocation3 [shape = 'u8[65536]{0}', space=vmem, size = 0x10000, scoped, tag = 'input window, operand 1']
    #allocation4 [shape = 'u8[65536]{0}', space=vmem, size = 0x10000, scoped, tag = 'output window, operand 0']
    loop: start=0, step=1, limit=6
    $region2: #{decoder_only_transformer.28} parent=1 // loop_pre_header
      _
    $region3: #{decoder_only_transformer.28} parent=1 // loop_header
      %s9 = sphi 0, %s13
      %p10 = scmp.ge.s32.totalorder %s9, 6
      %s16 = sphi 0, %s35
      %s17 = sphi 0, %s31
      %s18 = sphi 0, %s27
      %s19 = sphi 0, %s16
      %s20 = sphi 0, %s17
      %s21 = sphi 0, %s18
      %s22 = sphi 0, %s19
      %s23 = sphi 0, %s20
      %s24 = sphi 0, %s21
      %s40 = sphi 0, %s42
      %s43 = sphi 0, %s40
      %s44 = sphi 0, %s43
      %s60 = sphi 0, %s44
      %s68 = sphi 0, %s70
      %s71 = sphi 0, %s68
      %s72 = sphi 0, %s71
      %s88 = sphi 0, %s72
      %s94 = sphi 0, %s96
      %s97 = sphi 0, %s94
      %s98 = sphi 0, %s97
      %s114 = sphi 0, %s98
      %s122 = sphi 0, %s124
      %s125 = sphi 0, %s122
      %s126 = sphi 0, %s125
      %s142 = sphi 0, %s126
    $region4: #{decoder_only_transformer.28} parent=1 // loop_header_branch
      %12 = sbr.rel (%p10) target = $region8
    $region5: #{decoder_only_transformer.28} parent=1 // loop_body
      %s14 = ssub.s32 %s9, 1
      %s15 = ssub.s32 %s9, 2
      %s25 = sadd.s32 1, %s18
      %p26 = scmp.ge.s32.totalorder %s25, 1
      %s27 = scalar_select %p26, 0, %s25
      %s28 = sadd.s32 1, %s17
      %s29 = scalar_select %p26, %s28, %s17
      %p30 = scmp.ge.s32.totalorder %s29, 4
      %s31 = scalar_select %p30, 0, %s29
      %s32 = sadd.s32 1, %s16
      %s33 = scalar_select %p30, %s32, %s16
      %p34 = scmp.ge.s32.totalorder %s33, 1
      %s35 = scalar_select %p34, 0, %s33
      %s36 = ssub.s32 %s16, %s35
      %s37 = ssub.s32 %s18, %s27
      %s38 = sor.u32 %s36, %s37
      %p39 = scmp.eq.s32.totalorder %s38, 0
      %s41 = sadd.s32 %s40, 1
      %s42 = scalar_select %p39, %s40, %s41
      %p45 = pneg %p39
      %p46 = scmp.eq.s32.totalorder %s9, 3
      %p47 = por %p45, %p46
      %p48 = scmp.ne.s32.totalorder %s40, %s43
      %p49 = scmp.eq.s32.totalorder %s9, 0
      %p50 = por %p48, %p49
      %p51 = scmp.ne.s32.totalorder %s40, %s43
      %p52 = scmp.eq.s32.totalorder %s14, 3
      %p53 = por %p51, %p52
      %p54 = scmp.ne.s32.totalorder %s43, %s44
      %p55 = scmp.eq.s32.totalorder %s14, 0
      %p56 = por %p54, %p55
      %p57 = scmp.ne.s32.totalorder %s43, %s44
      %p58 = scmp.eq.s32.totalorder %s15, 3
      %p59 = por %p57, %p58
      %p61 = scmp.ne.s32.totalorder %s44, %s60
      %p62 = scmp.eq.s32.totalorder %s15, 0
      %p63 = por %p61, %p62
      %s64 = ssub.s32 %s18, %s27
      %s65 = ssub.s32 %s17, %s31
      %s66 = sor.u32 %s64, %s65
      %p67 = scmp.eq.s32.totalorder %s66, 0
      %s69 = sadd.s32 %s68, 1
      %s70 = scalar_select %p67, %s68, %s69
      %p73 = pneg %p67
      %p74 = scmp.eq.s32.totalorder %s9, 3
      %p75 = por %p73, %p74
      %p76 = scmp.ne.s32.totalorder %s68, %s71
      %p77 = scmp.eq.s32.totalorder %s9, 0
      %p78 = por %p76, %p77
      %p79 = scmp.ne.s32.totalorder %s68, %s71
      %p80 = scmp.eq.s32.totalorder %s14, 3
      %p81 = por %p79, %p80
      %p82 = scmp.ne.s32.totalorder %s71, %s72
      %p83 = scmp.eq.s32.totalorder %s14, 0
      %p84 = por %p82, %p83
      %p85 = scmp.ne.s32.totalorder %s71, %s72
      %p86 = scmp.eq.s32.totalorder %s15, 3
      %p87 = por %p85, %p86
      %p89 = scmp.ne.s32.totalorder %s72, %s88
      %p90 = scmp.eq.s32.totalorder %s15, 0
      %p91 = por %p89, %p90
      %s92 = ssub.s32 %s17, %s31
      %p93 = scmp.eq.s32.totalorder %s92, 0
      %s95 = sadd.s32 %s94, 1
      %s96 = scalar_select %p93, %s94, %s95
      %p99 = pneg %p93
      %p100 = scmp.eq.s32.totalorder %s9, 3
      %p101 = por %p99, %p100
      %p102 = scmp.ne.s32.totalorder %s94, %s97
      %p103 = scmp.eq.s32.totalorder %s9, 0
      %p104 = por %p102, %p103
      %p105 = scmp.ne.s32.totalorder %s94, %s97
      %p106 = scmp.eq.s32.totalorder %s14, 3
      %p107 = por %p105, %p106
      %p108 = scmp.ne.s32.totalorder %s97, %s98
      %p109 = scmp.eq.s32.totalorder %s14, 0
      %p110 = por %p108, %p109
      %p111 = scmp.ne.s32.totalorder %s97, %s98
      %p112 = scmp.eq.s32.totalorder %s15, 3
      %p113 = por %p111, %p112
      %p115 = scmp.ne.s32.totalorder %s98, %s114
      %p116 = scmp.eq.s32.totalorder %s15, 0
      %p117 = por %p115, %p116
      %s118 = ssub.s32 %s16, %s35
      %s119 = ssub.s32 %s17, %s31
      %s120 = sor.u32 %s118, %s119
      %p121 = scmp.eq.s32.totalorder %s120, 0
      %s123 = sadd.s32 %s122, 1
      %s124 = scalar_select %p121, %s122, %s123
      %p127 = pneg %p121
      %p128 = scmp.eq.s32.totalorder %s9, 3
      %p129 = por %p127, %p128
      %p130 = scmp.ne.s32.totalorder %s122, %s125
      %p131 = scmp.eq.s32.totalorder %s9, 0
      %p132 = por %p130, %p131
      %p133 = scmp.ne.s32.totalorder %s122, %s125
      %p134 = scmp.eq.s32.totalorder %s14, 3
      %p135 = por %p133, %p134
      %p136 = scmp.ne.s32.totalorder %s125, %s126
      %p137 = scmp.eq.s32.totalorder %s14, 0
      %p138 = por %p136, %p137
      %p139 = scmp.ne.s32.totalorder %s125, %s126
      %p140 = scmp.eq.s32.totalorder %s15, 3
      %p141 = por %p139, %p140
      %p143 = scmp.ne.s32.totalorder %s126, %s142
      %p144 = scmp.eq.s32.totalorder %s15, 0
      %p145 = por %p143, %p144
      %p146 = scmp.le.s32.totalorder 1, %s9
      %p147 = scmp.lt.s32.totalorder %s9, 5
      %p148 = pnand %p146, %p147
      %p149 = pneg %p148
      // Predicated region
      $region9: #{decoder_only_transformer.28} parent=5 // pred_check
        _
      $region10: #{decoder_only_transformer.28} parent=5 // pred_check_branch
        %151 = sbr.rel (%p148) target = $region12
      $region11: #{decoder_only_transformer.28} parent=5 // pred_region
        %s152 = ssub.s32 %s9, 1
        // Predicated region
        $region13: #{decoder_only_transformer.28} parent=11 // pred_check
          %p153 = pneg %p56
        $region14: #{decoder_only_transformer.28} parent=11 // pred_check_branch
          %155 = sbr.rel (%p153) target = $region16
        $region15: #{decoder_only_transformer.28} parent=11 // pred_region
          %s156 = smul.u32 2, %s19
          %p157 = scmp.lt.s32.totalorder %s156, 1
          %s158 = scalar_select %p157, %s156, 1
          %p159 = scmp.lt.s32.totalorder %s21, 0
          %s160 = scalar_select %p159, %s21, 0
          %s161 = sadd.s32 %s160, %s158
          %s162 = smul.addr %s161, 8
          %s163 = scalar_lea.vmem %s0, %s162
          %s164 = smul.u32 2, %s19
        $region16: #{decoder_only_transformer.28} parent=11 // pred_fallthru
          _
      $region12: #{decoder_only_transformer.28} parent=5 // pred_fallthru
        _
      %p165 = scmp.lt.s32.totalorder %s9, 4
      // Predicated region
      $region17: #{decoder_only_transformer.28} parent=5 // pred_check
        %p166 = pneg %p165
      $region18: #{decoder_only_transformer.28} parent=5 // pred_check_branch
        %168 = sbr.rel (%p166) target = $region20
      $region19: #{decoder_only_transformer.28} parent=5 // pred_region
        // Predicated region
        $region21: #{decoder_only_transformer.28} parent=19 // pred_check
          %p169 = pneg %p78
        $region22: #{decoder_only_transformer.28} parent=19 // pred_check_branch
          %171 = sbr.rel (%p169) target = $region24
        $region23: #{decoder_only_transformer.28} parent=19 // pred_region
          %s172 = sand.u32 %s68, 1
          %s173 = sand.u32 %s68, 1
          %s174 = smul.addr %s173, 64
          %s175 = scalar_lea.vmem [#allocation3], %s174
          %s176 = smul.u32 4, %s18
          %s177 = smul.u32 4, %s17
          %s178 = smul.addr %s176, 16
          %s179 = sadd.s32 %s177, %s178
          %s180 = smul.addr %s179, 4
          %s181 = scalar_lea.vmem %s1, %s180
          // Predicated region
          $region25: #{decoder_only_transformer.28} parent=23 // pred_check
            _
          $region26: #{decoder_only_transformer.28} parent=23 // pred_check_branch
            %183 = sbr.rel (0) target = $region28
          $region27: #{decoder_only_transformer.28} parent=23 // pred_region
            // Predicated region
            $region29: #{decoder_only_transformer.28} parent=27 // pred_check
              _
            $region30: #{decoder_only_transformer.28} parent=27 // pred_check_branch
              %185 = sbr.rel (0) target = $region32
            $region31: #{decoder_only_transformer.28} parent=27 // pred_region
              loop: start=0, step=1, limit=1
              $region33: #{decoder_only_transformer.28} parent=31 // loop_pre_header
                _
              $region34: #{decoder_only_transformer.28} parent=31 // loop_header
                %s187 = sphi 0, %s191
                %p188 = scmp.ge.s32.totalorder %s187, 1
                %s192 = sphi %s181, %s181
                %s193 = sphi %s175, %s175
              $region35: #{decoder_only_transformer.28} parent=31 // loop_header_branch
                %190 = sbr.rel (%p188) target = $region39
              $region36: #{decoder_only_transformer.28} parent=31 // loop_body
                %v194 = vld [vmem:[%s192] sm:$0xff]
                %195 = vst [vmem:[%s193] sm:$0xff] %v194
                %v196 = vld [vmem:[%s192 + $0x8] sm:$0xff]
                %197 = vst [vmem:[%s193 + $0x8] sm:$0xff] %v196
                %v198 = vld [vmem:[%s192 + $0x40] sm:$0xff]
                %199 = vst [vmem:[%s193 + $0x10] sm:$0xff] %v198
                %v200 = vld [vmem:[%s192 + $0x48] sm:$0xff]
                %201 = vst [vmem:[%s193 + $0x18] sm:$0xff] %v200
                %v202 = vld [vmem:[%s192 + $0x80] sm:$0xff]
                %203 = vst [vmem:[%s193 + $0x20] sm:$0xff] %v202
                %v204 = vld [vmem:[%s192 + $0x88] sm:$0xff]
                %205 = vst [vmem:[%s193 + $0x28] sm:$0xff] %v204
                %v206 = vld [vmem:[%s192 + $0xc0] sm:$0xff]
                %207 = vst [vmem:[%s193 + $0x30] sm:$0xff] %v206
                %v208 = vld [vmem:[%s192 + $0xc8] sm:$0xff]
                %209 = vst [vmem:[%s193 + $0x38] sm:$0xff] %v208
              $region37: #{decoder_only_transformer.28} parent=31 // loop_footer
                %s191 = sadd.s32 1, %s187
              $region38: #{decoder_only_transformer.28} parent=31 // loop_footer_branch
                %186 = sbr.rel target = $region34
              $region39: #{decoder_only_transformer.28} parent=31 // loop_exit
                _
            $region32: #{decoder_only_transformer.28} parent=27 // pred_fallthru
              _
            // Predicated region
            $region40: #{decoder_only_transformer.28} parent=27 // pred_check
              _
            $region41: #{decoder_only_transformer.28} parent=27 // pred_check_branch
              %211 = sbr.rel target = $region43
            $region42: #{decoder_only_transformer.28} parent=27 // pred_region
              _
            $region43: #{decoder_only_transformer.28} parent=27 // pred_fallthru
              _
          $region28: #{decoder_only_transformer.28} parent=23 // pred_fallthru
            _
          %212 = vnop
        $region24: #{decoder_only_transformer.28} parent=19 // pred_fallthru
          _
        // Predicated region
        $region44: #{decoder_only_transformer.28} parent=19 // pred_check
          %p213 = pneg %p104
        $region45: #{decoder_only_transformer.28} parent=19 // pred_check_branch
          %215 = sbr.rel (%p213) target = $region47
        $region46: #{decoder_only_transformer.28} parent=19 // pred_region
          %s216 = smul.u32 4, %s17
          %p217 = scmp.lt.s32.totalorder %s216, 15
          %s218 = scalar_select %p217, %s216, 15
          %s219 = scalar_lea.vmem %s2, %s218
          %s220 = smul.u32 4, %s17
        $region47: #{decoder_only_transformer.28} parent=19 // pred_fallthru
          _
      $region20: #{decoder_only_transformer.28} parent=5 // pred_fallthru
        _
      %p221 = scmp.le.s32.totalorder 1, %s9
      %p222 = scmp.lt.s32.totalorder %s9, 5
      %p223 = pnand %p221, %p222
      %p224 = pneg %p223
      // Predicated region
      $region48: #{decoder_only_transformer.28} parent=5 // pred_check
        _
      $region49: #{decoder_only_transformer.28} parent=5 // pred_check_branch
        %226 = sbr.rel (%p223) target = $region51
      $region50: #{decoder_only_transformer.28} parent=5 // pred_region
        %s227 = ssub.s32 %s9, 1
        %s228 = sand.u32 %s71, 1
        %s229 = sand.u32 %s71, 1
        %s230 = smul.addr %s229, 64
        %s231 = scalar_lea.vmem [#allocation3], %s230
        // Predicated region
        $region52: #{decoder_only_transformer.28} parent=50 // pred_check
          %p232 = pneg %p84
        $region53: #{decoder_only_transformer.28} parent=50 // pred_check_branch
          %234 = sbr.rel (%p232) target = $region55
        $region54: #{decoder_only_transformer.28} parent=50 // pred_region
          _
        $region55: #{decoder_only_transformer.28} parent=50 // pred_fallthru
          _
        %s235 = smul.u32 2, %s19
        %p236 = scmp.lt.s32.totalorder %s235, 1
        %s237 = scalar_select %p236, %s235, 1
        %p238 = scmp.lt.s32.totalorder %s21, 0
        %s239 = scalar_select %p238, %s21, 0
        %s240 = sadd.s32 %s239, %s237
        %s241 = smul.addr %s240, 8
        %s242 = scalar_lea.vmem %s0, %s241
        %p243 = pneg %p56
        %p244 = pneg %p53
        %s245 = sand.u32 %s71, 1
        %s246 = sand.u32 %s71, 1
        %s247 = smul.addr %s246, 64
        %s248 = scalar_lea.vmem [#allocation3], %s247
        %p249 = pneg %p84
        %p250 = pneg %p81
        %s251 = smul.u32 4, %s20
        %p252 = scmp.lt.s32.totalorder %s251, 15
        %s253 = scalar_select %p252, %s251, 15
        %s254 = scalar_lea.vmem %s2, %s253
        %p255 = pneg %p110
        %p256 = pneg %p107
        %p257 = pneg %p138
        %p258 = pneg %p135
        %s259 = sand.u32 %s125, 1
        %s260 = sand.u32 %s125, 1
        %s261 = smul.addr %s260, 64
        %s262 = scalar_lea.vmem [#allocation4], %s261
        %s263 = smul.u32 2, %s19
        %p264 = scmp.lt.s32.totalorder %s263, 1
        %s265 = scalar_select %p264, %s263, 1
        %p266 = scmp.lt.s32.totalorder %s21, 0
        %s267 = scalar_select %p266, %s21, 0
        %s268 = sadd.s32 %s267, %s265
        %s269 = smul.addr %s268, 8
        %s270 = scalar_lea.vmem %s0, %s269
        %s271 = smul.u32 2, %s19
        %s272 = smul.u32 4, %s21
        %s273 = smul.u32 4, %s20
        %s274 = smul.u32 4, %s20
        %p275 = scmp.lt.s32.totalorder %s274, 15
        %s276 = scalar_select %p275, %s274, 15
        %s277 = scalar_lea.vmem %s2, %s276
        %s278 = smul.u32 4, %s20
        %s279 = smul.u32 2, %s19
        %s280 = smul.u32 4, %s20
        %p282 = scmp.eq.s32.totalorder %s21, 0
        // Predicated region
        $region56: #{decoder_only_transformer.28} parent=50 // pred_check
          %p283 = pneg %p282
        $region57: #{decoder_only_transformer.28} parent=50 // pred_check_branch
          %285 = sbr.rel (%p283) target = $region59
        $region58: #{decoder_only_transformer.28} parent=50 // pred_region
          %286 = vst [vmem:[#allocation2] sm:$0xff] 0.0
          %287 = vst [vmem:[#allocation2 + $0x8] sm:$0xff] 0.0
          %288 = vst [vmem:[#allocation2 + $0x10] sm:$0xff] 0.0
          %289 = vst [vmem:[#allocation2 + $0x18] sm:$0xff] 0.0
          %290 = vst [vmem:[#allocation2 + $0x20] sm:$0xff] 0.0
          %291 = vst [vmem:[#allocation2 + $0x28] sm:$0xff] 0.0
          %292 = vst [vmem:[#allocation2 + $0x30] sm:$0xff] 0.0
          %293 = vst [vmem:[#allocation2 + $0x38] sm:$0xff] 0.0
        $region59: #{decoder_only_transformer.28} parent=50 // pred_fallthru
          _
        %v294 = vld [vmem:[#allocation2] sm:$0xff]
        %v295 = vld [vmem:[#allocation2 + $0x8] sm:$0xff]
        %v296 = vld [vmem:[#allocation2 + $0x10] sm:$0xff]
        %v297 = vld [vmem:[#allocation2 + $0x18] sm:$0xff]
        %v298 = vld [vmem:[#allocation2 + $0x20] sm:$0xff]
        %v299 = vld [vmem:[#allocation2 + $0x28] sm:$0xff]
        %v300 = vld [vmem:[#allocation2 + $0x30] sm:$0xff]
        %v301 = vld [vmem:[#allocation2 + $0x38] sm:$0xff]
        %v302 = vld [vmem:[%s270] sm:$0xff]
        %v303 = vld [vmem:[%s270 + $0x8] sm:$0xff]
        %v304 = vpack.c.bf16 %v303, %v302
        %v305 = vld [vmem:[%s231] sm:$0xff]
        %v306 = vld [vmem:[%s231 + $0x8] sm:$0xff]
        %v307 = vld [vmem:[%s231 + $0x10] sm:$0xff]
        %v308 = vld [vmem:[%s231 + $0x18] sm:$0xff]
        %v309 = vld [vmem:[%s231 + $0x20] sm:$0xff]
        %v310 = vld [vmem:[%s231 + $0x28] sm:$0xff]
        %v311 = vld [vmem:[%s231 + $0x30] sm:$0xff]
        %v312 = vld [vmem:[%s231 + $0x38] sm:$0xff]
        %v321 = vunpack.c.l.b16 %v305
        %v322 = vunpack.c.h.b16 %v305
        %v323 = vunpack.c.l.b16 %v306
        %v324 = vunpack.c.h.b16 %v306
        %v325 = vunpack.c.l.b16 %v307
        %v326 = vunpack.c.h.b16 %v307
        %v327 = vunpack.c.l.b16 %v308
        %v328 = vunpack.c.h.b16 %v308
        %v329 = vunpack.c.l.b16 %v309
        %v330 = vunpack.c.h.b16 %v309
        %v331 = vunpack.c.l.b16 %v310
        %v332 = vunpack.c.h.b16 %v310
        %v333 = vunpack.c.l.b16 %v311
        %v334 = vunpack.c.h.b16 %v311
        %v335 = vunpack.c.l.b16 %v312
        %v336 = vunpack.c.h.b16 %v312
        %v337 = vpack.c.b16 %v325, %v321
        %v338 = vpack.c.b16 %v326, %v322
        %v339 = vpack.c.b16 %v327, %v323
        %v340 = vpack.c.b16 %v328, %v324
        %v341 = vpack.c.b16 %v333, %v329
        %v342 = vpack.c.b16 %v334, %v330
        %v343 = vpack.c.b16 %v335, %v331
        %v344 = vpack.c.b16 %v336, %v332
        %vm353 = vcmask 261120
        %v355 = vsel %vm353, %v304, 0
        %357 = vmatpush.bf16.msra.mxu0 0
        %358 = vmatpush.bf16.msra.mxu0 0
        %359 = vmatpush.bf16.msra.mxu0 0
        %360 = vmatpush.bf16.msra.mxu0 0
        %361 = vmatpush.bf16.msra.mxu0 0
        %362 = vmatpush.bf16.msra.mxu0 0
        %363 = vmatpush.bf16.msra.mxu0 %v341
        %364 = vmatpush.bf16.msra.mxu0 %v337
        %365 = vmatmul.bf16.gmra.mxu0 %v355
        %v366 = vpop.f32.mrf.mxu0
        %v367 = vadd.f32 0.0, %v366
        %v368 = vpop.f32.mrf.mxu0
        %v369 = vadd.f32 0.0, %v368
        %370 = vdwg.mxu0
        %371 = vmatpush.bf16.msra.mxu0 0
        %372 = vmatpush.bf16.msra.mxu0 0
        %373 = vmatpush.bf16.msra.mxu0 0
        %374 = vmatpush.bf16.msra.mxu0 0
        %375 = vmatpush.bf16.msra.mxu0 0
        %376 = vmatpush.bf16.msra.mxu0 0
        %377 = vmatpush.bf16.msra.mxu0 %v342
        %378 = vmatpush.bf16.msra.mxu0 %v338
        %379 = vmatmul.bf16.gmra.mxu0 %v355
        %v380 = vpop.f32.mrf.mxu0
        %v381 = vadd.f32 0.0, %v380
        %v382 = vpop.f32.mrf.mxu0
        %v383 = vadd.f32 0.0, %v382
        %384 = vdwg.mxu0
        %385 = vmatpush.bf16.msra.mxu0 0
        %386 = vmatpush.bf16.msra.mxu0 0
        %387 = vmatpush.bf16.msra.mxu0 0
        %388 = vmatpush.bf16.msra.mxu0 0
        %389 = vmatpush.bf16.msra.mxu0 0
        %390 = vmatpush.bf16.msra.mxu0 0
        %391 = vmatpush.bf16.msra.mxu0 %v343
        %392 = vmatpush.bf16.msra.mxu0 %v339
        %393 = vmatmul.bf16.gmra.mxu0 %v355
        %v394 = vpop.f32.mrf.mxu0
        %v395 = vadd.f32 0.0, %v394
        %v396 = vpop.f32.mrf.mxu0
        %v397 = vadd.f32 0.0, %v396
        %398 = vdwg.mxu0
        %399 = vmatpush.bf16.msra.mxu0 0
        %400 = vmatpush.bf16.msra.mxu0 0
        %401 = vmatpush.bf16.msra.mxu0 0
        %402 = vmatpush.bf16.msra.mxu0 0
        %403 = vmatpush.bf16.msra.mxu0 0
        %404 = vmatpush.bf16.msra.mxu0 0
        %405 = vmatpush.bf16.msra.mxu0 %v344
        %406 = vmatpush.bf16.msra.mxu0 %v340
        %407 = vmatmul.bf16.gmra.mxu0 %v355
        %v408 = vpop.f32.mrf.mxu0
        %v409 = vadd.f32 0.0, %v408
        %v410 = vpop.f32.mrf.mxu0
        %v411 = vadd.f32 0.0, %v410
        %412 = vdwg.mxu0
        %v413 = vadd.f32 %v294, %v367
        %v414 = vadd.f32 %v295, %v381
        %v415 = vadd.f32 %v296, %v395
        %v416 = vadd.f32 %v297, %v409
        %v417 = vadd.f32 %v298, %v369
        %v418 = vadd.f32 %v299, %v383
        %v419 = vadd.f32 %v300, %v397
        %v420 = vadd.f32 %v301, %v411
        %421 = vst [vmem:[#allocation2] sm:$0xff] %v413
        %422 = vst [vmem:[#allocation2 + $0x8] sm:$0xff] %v414
        %423 = vst [vmem:[#allocation2 + $0x10] sm:$0xff] %v415
        %424 = vst [vmem:[#allocation2 + $0x18] sm:$0xff] %v416
        %425 = vst [vmem:[#allocation2 + $0x20] sm:$0xff] %v417
        %426 = vst [vmem:[#allocation2 + $0x28] sm:$0xff] %v418
        %427 = vst [vmem:[#allocation2 + $0x30] sm:$0xff] %v419
        %428 = vst [vmem:[#allocation2 + $0x38] sm:$0xff] %v420
        // Predicated region
        $region60: #{decoder_only_transformer.28} parent=50 // pred_check
          %p429 = pneg %p282
        $region61: #{decoder_only_transformer.28} parent=50 // pred_check_branch
          %431 = sbr.rel (%p429) target = $region63
        $region62: #{decoder_only_transformer.28} parent=50 // pred_region
          %v432 = vld [vmem:[#allocation2] sm:$0xff]
          %v433 = vld [vmem:[#allocation2 + $0x8] sm:$0xff]
          %v434 = vld [vmem:[#allocation2 + $0x10] sm:$0xff]
          %v435 = vld [vmem:[#allocation2 + $0x18] sm:$0xff]
          %v436 = vld [vmem:[#allocation2 + $0x20] sm:$0xff]
          %v437 = vld [vmem:[#allocation2 + $0x28] sm:$0xff]
          %v438 = vld [vmem:[#allocation2 + $0x30] sm:$0xff]
          %v439 = vld [vmem:[#allocation2 + $0x38] sm:$0xff]
          %v440 = vld [vmem:[%s277] sm:$0xf]
          %v442 = vperm.slane %v440, 0
          %v443 = vperm.slane %v440, 1
          %v444 = vperm.slane %v440, 2
          %v445 = vperm.slane %v440, 3
          %v450 = vadd.f32 %v432, %v442
          %v451 = vadd.f32 %v433, %v443
          %v452 = vadd.f32 %v434, %v444
          %v453 = vadd.f32 %v435, %v445
          %v454 = vadd.f32 %v436, %v442
          %v455 = vadd.f32 %v437, %v443
          %v456 = vadd.f32 %v438, %v444
          %v457 = vadd.f32 %v439, %v445
          %v458 = vmax.f32 %v450, 0.0
          %v459 = vmax.f32 %v451, 0.0
          %v460 = vmax.f32 %v452, 0.0
          %v461 = vmax.f32 %v453, 0.0
          %v462 = vmax.f32 %v454, 0.0
          %v463 = vmax.f32 %v455, 0.0
          %v464 = vmax.f32 %v456, 0.0
          %v465 = vmax.f32 %v457, 0.0
          %466 = vst [vmem:[%s262] sm:$0xff] %v458
          %467 = vst [vmem:[%s262 + $0x8] sm:$0xff] %v459
          %468 = vst [vmem:[%s262 + $0x10] sm:$0xff] %v460
          %469 = vst [vmem:[%s262 + $0x18] sm:$0xff] %v461
          %470 = vst [vmem:[%s262 + $0x20] sm:$0xff] %v462
          %471 = vst [vmem:[%s262 + $0x28] sm:$0xff] %v463
          %472 = vst [vmem:[%s262 + $0x30] sm:$0xff] %v464
          %473 = vst [vmem:[%s262 + $0x38] sm:$0xff] %v465
        $region63: #{decoder_only_transformer.28} parent=50 // pred_fallthru
          _
        %s474 = sand.u32 %s125, 1
        %s475 = sand.u32 %s125, 1
        %s476 = smul.addr %s475, 64
        %s477 = scalar_lea.vmem [#allocation4], %s476
        // Predicated region
        $region64: #{decoder_only_transformer.28} parent=50 // pred_check
          %p478 = pneg %p135
        $region65: #{decoder_only_transformer.28} parent=50 // pred_check_branch
          %480 = sbr.rel (%p478) target = $region67
        $region66: #{decoder_only_transformer.28} parent=50 // pred_region
          %s481 = smul.u32 2, %s19
          %s482 = smul.u32 4, %s20
          %s483 = smul.addr %s481, 16
          %s484 = sadd.s32 %s482, %s483
          %s485 = smul.addr %s484, 8
          %s486 = scalar_lea.vmem %s3, %s485
          // Predicated region
          $region68: #{decoder_only_transformer.28} parent=66 // pred_check
            _
          $region69: #{decoder_only_transformer.28} parent=66 // pred_check_branch
            %488 = sbr.rel (0) target = $region71
          $region70: #{decoder_only_transformer.28} parent=66 // pred_region
            // Predicated region
            $region72: #{decoder_only_transformer.28} parent=70 // pred_check
              _
            $region73: #{decoder_only_transformer.28} parent=70 // pred_check_branch
              %490 = sbr.rel (0) target = $region75
            $region74: #{decoder_only_transformer.28} parent=70 // pred_region
              loop: start=0, step=1, limit=1
              $region76: #{decoder_only_transformer.28} parent=74 // loop_pre_header
                _
              $region77: #{decoder_only_transformer.28} parent=74 // loop_header
                %s492 = sphi 0, %s496
                %p493 = scmp.ge.s32.totalorder %s492, 1
                %s497 = sphi %s477, %s477
                %s498 = sphi %s486, %s486
              $region78: #{decoder_only_transformer.28} parent=74 // loop_header_branch
                %495 = sbr.rel (%p493) target = $region82
              $region79: #{decoder_only_transformer.28} parent=74 // loop_body
                %v499 = vld [vmem:[%s497] sm:$0xff]
                %500 = vst [vmem:[%s498] sm:$0xff] %v499
                %v501 = vld [vmem:[%s497 + $0x8] sm:$0xff]
                %502 = vst [vmem:[%s498 + $0x8] sm:$0xff] %v501
                %v503 = vld [vmem:[%s497 + $0x10] sm:$0xff]
                %504 = vst [vmem:[%s498 + $0x10] sm:$0xff] %v503
                %v505 = vld [vmem:[%s497 + $0x18] sm:$0xff]
                %506 = vst [vmem:[%s498 + $0x18] sm:$0xff] %v505
                %v507 = vld [vmem:[%s497 + $0x20] sm:$0xff]
                %508 = vst [vmem:[%s498 + $0x80] sm:$0xff] %v507
                %v509 = vld [vmem:[%s497 + $0x28] sm:$0xff]
                %510 = vst [vmem:[%s498 + $0x88] sm:$0xff] %v509
                %v511 = vld [vmem:[%s497 + $0x30] sm:$0xff]
                %512 = vst [vmem:[%s498 + $0x90] sm:$0xff] %v511
                %v513 = vld [vmem:[%s497 + $0x38] sm:$0xff]
                %514 = vst [vmem:[%s498 + $0x98] sm:$0xff] %v513
              $region80: #{decoder_only_transformer.28} parent=74 // loop_footer
                %s496 = sadd.s32 1, %s492
              $region81: #{decoder_only_transformer.28} parent=74 // loop_footer_branch
                %491 = sbr.rel target = $region77
              $region82: #{decoder_only_transformer.28} parent=74 // loop_exit
                _
            $region75: #{decoder_only_transformer.28} parent=70 // pred_fallthru
              _
            // Predicated region
            $region83: #{decoder_only_transformer.28} parent=70 // pred_check
              _
            $region84: #{decoder_only_transformer.28} parent=70 // pred_check_branch
              %516 = sbr.rel target = $region86
            $region85: #{decoder_only_transformer.28} parent=70 // pred_region
              _
            $region86: #{decoder_only_transformer.28} parent=70 // pred_fallthru
              _
          $region71: #{decoder_only_transformer.28} parent=66 // pred_fallthru
            _
          %517 = vnop
        $region67: #{decoder_only_transformer.28} parent=50 // pred_fallthru
          _
      $region51: #{decoder_only_transformer.28} parent=5 // pred_fallthru
        _
      %p518 = scmp.le.s32.totalorder 2, %s9
      // Predicated region
      $region87: #{decoder_only_transformer.28} parent=5 // pred_check
        %p519 = pneg %p518
      $region88: #{decoder_only_transformer.28} parent=5 // pred_check_branch
        %521 = sbr.rel (%p519) target = $region90
      $region89: #{decoder_only_transformer.28} parent=5 // pred_region
        %s522 = ssub.s32 %s9, 2
        // Predicated region
        $region91: #{decoder_only_transformer.28} parent=89 // pred_check
          %p523 = pneg %p141
        $region92: #{decoder_only_transformer.28} parent=89 // pred_check_branch
          %525 = sbr.rel (%p523) target = $region94
        $region93: #{decoder_only_transformer.28} parent=89 // pred_region
          %s526 = sand.u32 %s126, 1
          %s527 = sand.u32 %s126, 1
          %s528 = smul.addr %s527, 64
          %s529 = scalar_lea.vmem [#allocation4], %s528
        $region94: #{decoder_only_transformer.28} parent=89 // pred_fallthru
          _
      $region90: #{decoder_only_transformer.28} parent=5 // pred_fallthru
        _
    $region6: #{decoder_only_transformer.28} parent=1 // loop_footer
      %s13 = sadd.s32 1, %s9
    $region7: #{decoder_only_transformer.28} parent=1 // loop_footer_branch
      %8 = sbr.rel target = $region3
    $region8: #{decoder_only_transformer.28} parent=1 // loop_exit
      _

// kernel: decoder_only_transformer.26
$region0: #{decoder_only_transformer.26}
  #allocation0 [shape = 'u32[]', space=smem, size = 0x4, offset = 0x4, fixed_abs, tag = 'smem constant byte address 0x4 - core index']
  #allocation1 [shape = 'u32[72,128]{1,0:T(1,128)}', space=vmem, size = 0x9000, scoped, tag = 'internal scratch']
  #allocation2 [shape = 'f32[4,8,1]{2,1,0:T(8,128)}', space=vmem, size = 0x4000, scoped, tag = 'scratch operand']
  #allocation3 [shape = 'f32[4,8,1]{2,1,0:T(8,128)}', space=vmem, size = 0x4000, scoped, tag = 'scratch operand']
  #allocation4 [shape = 'f32[4,8,8]{2,1,0:T(8,128)}', space=vmem, size = 0x4000, scoped, tag = 'scratch operand']
  %s0 = inlined_call_operand.vmem [shape: f32[2,8,32], index: 0, kind: input, shape index: {}]
  %s1 = inlined_call_operand.vmem [shape: f32[4,8,32], index: 1, kind: input, shape index: {}, may-alias: {1,2}]
  %s2 = inlined_call_operand.vmem [shape: f32[4,8,32], index: 2, kind: input, shape index: {}, may-alias: {1,2}]
  %s3 = inlined_call_operand.vmem [shape: f32[2,8,32], index: 3, kind: output, shape index: {}]
  %s4 = sld [smem:[#allocation0]]
  $region53: #{decoder_only_transformer.26} parent=0
    _
  %s6 = ssub.s32 1, %s4
  %s7 = scalar_select 0, %s6, %s4
  loop: start=0, step=1, limit=4
  $region2: #{decoder_only_transformer.26} parent=0 // loop_pre_header
    _
  $region3: #{decoder_only_transformer.26} parent=0 // loop_header
    %s9 = sphi 0, %s13
    %p10 = scmp.ge.s32.totalorder %s9, 4
    %s16 = sphi 0, %s35
    %s17 = sphi 0, %s31
    %s18 = sphi 0, %s27
    %s19 = sphi 0, %s16
    %s20 = sphi 0, %s17
    %s21 = sphi 0, %s18
    %s22 = sphi 0, %s19
    %s23 = sphi 0, %s20
    %s24 = sphi 0, %s21
    %s40 = sphi 0, %s42
    %s43 = sphi 0, %s40
    %s44 = sphi 0, %s43
    %s60 = sphi 0, %s44
    %s68 = sphi 0, %s70
    %s71 = sphi 0, %s68
    %s72 = sphi 0, %s71
    %s88 = sphi 0, %s72
    %s98 = sphi 0, %s100
    %s101 = sphi 0, %s98
    %s102 = sphi 0, %s101
    %s118 = sphi 0, %s102
    %s126 = sphi 0, %s128
    %s129 = sphi 0, %s126
    %s130 = sphi 0, %s129
    %s146 = sphi 0, %s130
  $region4: #{decoder_only_transformer.26} parent=0 // loop_header_branch
    %12 = sbr.rel (%p10) target = $region8
  $region5: #{decoder_only_transformer.26} parent=0 // loop_body
    %s14 = ssub.s32 %s9, 1
    %s15 = ssub.s32 %s9, 2
    %s25 = sadd.s32 1, %s18
    %p26 = scmp.ge.s32.totalorder %s25, 1
    %s27 = scalar_select %p26, 0, %s25
    %s28 = sadd.s32 1, %s17
    %s29 = scalar_select %p26, %s28, %s17
    %p30 = scmp.ge.s32.totalorder %s29, 1
    %s31 = scalar_select %p30, 0, %s29
    %s32 = sadd.s32 1, %s16
    %s33 = scalar_select %p30, %s32, %s16
    %p34 = scmp.ge.s32.totalorder %s33, 2
    %s35 = scalar_select %p34, 0, %s33
    %s36 = ssub.s32 %s16, %s35
    %s37 = ssub.s32 %s17, %s31
    %s38 = sor.u32 %s36, %s37
    %p39 = scmp.eq.s32.totalorder %s38, 0
    %s41 = sadd.s32 %s40, 1
    %s42 = scalar_select %p39, %s40, %s41
    %p45 = pneg %p39
    %p46 = scmp.eq.s32.totalorder %s9, 1
    %p47 = por %p45, %p46
    %p48 = scmp.ne.s32.totalorder %s40, %s43
    %p49 = scmp.eq.s32.totalorder %s9, 0
    %p50 = por %p48, %p49
    %p51 = scmp.ne.s32.totalorder %s40, %s43
    %p52 = scmp.eq.s32.totalorder %s14, 1
    %p53 = por %p51, %p52
    %p54 = scmp.ne.s32.totalorder %s43, %s44
    %p55 = scmp.eq.s32.totalorder %s14, 0
    %p56 = por %p54, %p55
    %p57 = scmp.ne.s32.totalorder %s43, %s44
    %p58 = scmp.eq.s32.totalorder %s15, 1
    %p59 = por %p57, %p58
    %p61 = scmp.ne.s32.totalorder %s44, %s60
    %p62 = scmp.eq.s32.totalorder %s15, 0
    %p63 = por %p61, %p62
    %s64 = ssub.s32 %s16, %s35
    %s65 = ssub.s32 %s18, %s27
    %s66 = sor.u32 %s64, %s65
    %p67 = scmp.eq.s32.totalorder %s66, 0
    %s69 = sadd.s32 %s68, 1
    %s70 = scalar_select %p67, %s68, %s69
    %p73 = pneg %p67
    %p74 = scmp.eq.s32.totalorder %s9, 1
    %p75 = por %p73, %p74
    %p76 = scmp.ne.s32.totalorder %s68, %s71
    %p77 = scmp.eq.s32.totalorder %s9, 0
    %p78 = por %p76, %p77
    %p79 = scmp.ne.s32.totalorder %s68, %s71
    %p80 = scmp.eq.s32.totalorder %s14, 1
    %p81 = por %p79, %p80
    %p82 = scmp.ne.s32.totalorder %s71, %s72
    %p83 = scmp.eq.s32.totalorder %s14, 0
    %p84 = por %p82, %p83
    %p85 = scmp.ne.s32.totalorder %s71, %s72
    %p86 = scmp.eq.s32.totalorder %s15, 1
    %p87 = por %p85, %p86
    %p89 = scmp.ne.s32.totalorder %s72, %s88
    %p90 = scmp.eq.s32.totalorder %s15, 0
    %p91 = por %p89, %p90
    %s92 = sadd.s32 %s16, 2
    %s93 = sadd.s32 %s35, 2
    %s94 = ssub.s32 %s92, %s93
    %s95 = ssub.s32 %s18, %s27
    %s96 = sor.u32 %s94, %s95
    %p97 = scmp.eq.s32.totalorder %s96, 0
    %s99 = sadd.s32 %s98, 1
    %s100 = scalar_select %p97, %s98, %s99
    %p103 = pneg %p97
    %p104 = scmp.eq.s32.totalorder %s9, 1
    %p105 = por %p103, %p104
    %p106 = scmp.ne.s32.totalorder %s98, %s101
    %p107 = scmp.eq.s32.totalorder %s9, 0
    %p108 = por %p106, %p107
    %p109 = scmp.ne.s32.totalorder %s98, %s101
    %p110 = scmp.eq.s32.totalorder %s14, 1
    %p111 = por %p109, %p110
    %p112 = scmp.ne.s32.totalorder %s101, %s102
    %p113 = scmp.eq.s32.totalorder %s14, 0
    %p114 = por %p112, %p113
    %p115 = scmp.ne.s32.totalorder %s101, %s102
    %p116 = scmp.eq.s32.totalorder %s15, 1
    %p117 = por %p115, %p116
    %p119 = scmp.ne.s32.totalorder %s102, %s118
    %p120 = scmp.eq.s32.totalorder %s15, 0
    %p121 = por %p119, %p120
    %s122 = ssub.s32 %s16, %s35
    %s123 = ssub.s32 %s17, %s31
    %s124 = sor.u32 %s122, %s123
    %p125 = scmp.eq.s32.totalorder %s124, 0
    %s127 = sadd.s32 %s126, 1
    %s128 = scalar_select %p125, %s126, %s127
    %p131 = pneg %p125
    %p132 = scmp.eq.s32.totalorder %s9, 1
    %p133 = por %p131, %p132
    %p134 = scmp.ne.s32.totalorder %s126, %s129
    %p135 = scmp.eq.s32.totalorder %s9, 0
    %p136 = por %p134, %p135
    %p137 = scmp.ne.s32.totalorder %s126, %s129
    %p138 = scmp.eq.s32.totalorder %s14, 1
    %p139 = por %p137, %p138
    %p140 = scmp.ne.s32.totalorder %s129, %s130
    %p141 = scmp.eq.s32.totalorder %s14, 0
    %p142 = por %p140, %p141
    %p143 = scmp.ne.s32.totalorder %s129, %s130
    %p144 = scmp.eq.s32.totalorder %s15, 1
    %p145 = por %p143, %p144
    %p147 = scmp.ne.s32.totalorder %s130, %s146
    %p148 = scmp.eq.s32.totalorder %s15, 0
    %p149 = por %p147, %p148
    %p150 = scmp.le.s32.totalorder 1, %s9
    %p151 = scmp.lt.s32.totalorder %s9, 3
    %p152 = pnand %p150, %p151
    %p153 = pneg %p152
    // Predicated region
    $region9: #{decoder_only_transformer.26} parent=5 // pred_check
      _
    $region10: #{decoder_only_transformer.26} parent=5 // pred_check_branch
      %155 = sbr.rel (%p152) target = $region12
    $region11: #{decoder_only_transformer.26} parent=5 // pred_region
      %s156 = ssub.s32 %s9, 1
    $region12: #{decoder_only_transformer.26} parent=5 // pred_fallthru
      _
    %p157 = scmp.lt.s32.totalorder %s9, 2
    // Predicated region
    $region13: #{decoder_only_transformer.26} parent=5 // pred_check
      %p158 = pneg %p157
    $region14: #{decoder_only_transformer.26} parent=5 // pred_check_branch
      %160 = sbr.rel (%p158) target = $region16
    $region15: #{decoder_only_transformer.26} parent=5 // pred_region
      // Predicated region
      $region17: #{decoder_only_transformer.26} parent=15 // pred_check
        %p161 = pneg %p50
      $region18: #{decoder_only_transformer.26} parent=15 // pred_check_branch
        %163 = sbr.rel (%p161) target = $region20
      $region19: #{decoder_only_transformer.26} parent=15 // pred_region
        %p164 = scmp.lt.s32.totalorder %s16, 1
        %s165 = scalar_select %p164, %s16, 1
        %p166 = scmp.lt.s32.totalorder %s17, 0
        %s167 = scalar_select %p166, %s17, 0
        %s168 = sadd.s32 %s167, %s165
        %s169 = smul.addr %s168, 8
        %s170 = scalar_lea.vmem %s0, %s169
      $region20: #{decoder_only_transformer.26} parent=15 // pred_fallthru
        _
      // Predicated region
      $region21: #{decoder_only_transformer.26} parent=15 // pred_check
        %p171 = pneg %p78
      $region22: #{decoder_only_transformer.26} parent=15 // pred_check_branch
        %173 = sbr.rel (%p171) target = $region24
      $region23: #{decoder_only_transformer.26} parent=15 // pred_region
        %p174 = scmp.lt.s32.totalorder %s16, 3
        %s175 = scalar_select %p174, %s16, 3
        %p176 = scmp.lt.s32.totalorder %s18, 0
        %s177 = scalar_select %p176, %s18, 0
        %s178 = sadd.s32 %s177, %s175
        %s179 = smul.addr %s178, 8
        %s180 = scalar_lea.vmem %s1, %s179
      $region24: #{decoder_only_transformer.26} parent=15 // pred_fallthru
        _
      // Predicated region
      $region25: #{decoder_only_transformer.26} parent=15 // pred_check
        %p181 = pneg %p108
      $region26: #{decoder_only_transformer.26} parent=15 // pred_check_branch
        %183 = sbr.rel (%p181) target = $region28
      $region27: #{decoder_only_transformer.26} parent=15 // pred_region
        %s184 = sadd.s32 %s16, 2
        %p185 = scmp.lt.s32.totalorder %s184, 3
        %s186 = scalar_select %p185, %s184, 3
        %p187 = scmp.lt.s32.totalorder %s18, 0
        %s188 = scalar_select %p187, %s18, 0
        %s189 = sadd.s32 %s188, %s186
        %s190 = smul.addr %s189, 8
        %s191 = scalar_lea.vmem %s2, %s190
        %s192 = sadd.s32 %s16, 2
      $region28: #{decoder_only_transformer.26} parent=15 // pred_fallthru
        _
    $region16: #{decoder_only_transformer.26} parent=5 // pred_fallthru
      _
    %p193 = scmp.le.s32.totalorder 1, %s9
    %p194 = scmp.lt.s32.totalorder %s9, 3
    %p195 = pnand %p193, %p194
    %p196 = pneg %p195
    // Predicated region
    $region29: #{decoder_only_transformer.26} parent=5 // pred_check
      _
    $region30: #{decoder_only_transformer.26} parent=5 // pred_check_branch
      %198 = sbr.rel (%p195) target = $region32
    $region31: #{decoder_only_transformer.26} parent=5 // pred_region
      %s199 = ssub.s32 %s9, 1
      %p200 = scmp.lt.s32.totalorder %s19, 1
      %s201 = scalar_select %p200, %s19, 1
      %p202 = scmp.lt.s32.totalorder %s20, 0
      %s203 = scalar_select %p202, %s20, 0
      %s204 = sadd.s32 %s203, %s201
      %s205 = smul.addr %s204, 8
      %s206 = scalar_lea.vmem %s0, %s205
      %p207 = pneg %p56
      %p208 = pneg %p53
      %p209 = scmp.lt.s32.totalorder %s19, 3
      %s210 = scalar_select %p209, %s19, 3
      %p211 = scmp.lt.s32.totalorder %s21, 0
      %s212 = scalar_select %p211, %s21, 0
      %s213 = sadd.s32 %s212, %s210
      %s214 = smul.addr %s213, 8
      %s215 = scalar_lea.vmem %s1, %s214
      %p216 = pneg %p84
      %p217 = pneg %p81
      %s218 = sadd.s32 %s19, 2
      %p219 = scmp.lt.s32.totalorder %s218, 3
      %s220 = scalar_select %p219, %s218, 3
      %p221 = scmp.lt.s32.totalorder %s21, 0
      %s222 = scalar_select %p221, %s21, 0
      %s223 = sadd.s32 %s222, %s220
      %s224 = smul.addr %s223, 8
      %s225 = scalar_lea.vmem %s2, %s224
      %p226 = pneg %p114
      %p227 = pneg %p111
      %p228 = pneg %p142
      %p229 = pneg %p139
      %p230 = scmp.lt.s32.totalorder %s19, 1
      %s231 = scalar_select %p230, %s19, 1
      %p232 = scmp.lt.s32.totalorder %s20, 0
      %s233 = scalar_select %p232, %s20, 0
      %s234 = sadd.s32 %s233, %s231
      %s235 = smul.addr %s234, 8
      %s236 = scalar_lea.vmem %s3, %s235
      %p237 = scmp.lt.s32.totalorder %s19, 1
      %s238 = scalar_select %p237, %s19, 1
      %p239 = scmp.lt.s32.totalorder %s20, 0
      %s240 = scalar_select %p239, %s20, 0
      %s241 = sadd.s32 %s240, %s238
      %s242 = smul.addr %s241, 8
      %s243 = scalar_lea.vmem %s0, %s242
      %p244 = scmp.lt.s32.totalorder %s19, 3
      %s245 = scalar_select %p244, %s19, 3
      %p246 = scmp.lt.s32.totalorder %s21, 0
      %s247 = scalar_select %p246, %s21, 0
      %s248 = sadd.s32 %s247, %s245
      %s249 = smul.addr %s248, 8
      %s250 = scalar_lea.vmem %s1, %s249
      %s251 = sadd.s32 %s19, 2
      %p252 = scmp.lt.s32.totalorder %s251, 3
      %s253 = scalar_select %p252, %s251, 3
      %p254 = scmp.lt.s32.totalorder %s21, 0
      %s255 = scalar_select %p254, %s21, 0
      %s256 = sadd.s32 %s255, %s253
      %s257 = smul.addr %s256, 8
      %s258 = scalar_lea.vmem %s2, %s257
      %s259 = sadd.s32 %s19, 2
      %p260 = scmp.lt.s32.totalorder %s19, 1
      %s261 = scalar_select %p260, %s19, 1
      %p262 = scmp.lt.s32.totalorder %s20, 0
      %s263 = scalar_select %p262, %s20, 0
      %s264 = sadd.s32 %s263, %s261
      %s265 = smul.addr %s264, 8
      %s266 = scalar_lea.vmem %s3, %s265
      %p268 = scmp.eq.s32.totalorder %s21, 0
      // Predicated region
      $region33: #{decoder_only_transformer.26} parent=31 // pred_check
        %p269 = pneg %p268
      $region34: #{decoder_only_transformer.26} parent=31 // pred_check_branch
        %271 = sbr.rel (%p269) target = $region36
      $region35: #{decoder_only_transformer.26} parent=31 // pred_region
        %vm272 = vcmask 7168
        %273 = vst.msk [vmem:[#allocation2] sm:$0xff] %vm272, -inf
        %274 = vst.msk [vmem:[#allocation2 + $0x8] sm:$0xff] %vm272, -inf
        %275 = vst.msk [vmem:[#allocation2 + $0x10] sm:$0xff] %vm272, -inf
        %276 = vst.msk [vmem:[#allocation2 + $0x18] sm:$0xff] %vm272, -inf
        %277 = vst.msk [vmem:[#allocation3] sm:$0xff] %vm272, 0.0
        %278 = vst.msk [vmem:[#allocation3 + $0x8] sm:$0xff] %vm272, 0.0
        %279 = vst.msk [vmem:[#allocation3 + $0x10] sm:$0xff] %vm272, 0.0
        %280 = vst.msk [vmem:[#allocation3 + $0x18] sm:$0xff] %vm272, 0.0
        %vm281 = vcmask 64512
        %282 = vst.msk [vmem:[#allocation4] sm:$0xff] %vm281, 0.0
        %283 = vst.msk [vmem:[#allocation4 + $0x8] sm:$0xff] %vm281, 0.0
        %284 = vst.msk [vmem:[#allocation4 + $0x10] sm:$0xff] %vm281, 0.0
        %285 = vst.msk [vmem:[#allocation4 + $0x18] sm:$0xff] %vm281, 0.0
      $region36: #{decoder_only_transformer.26} parent=31 // pred_fallthru
        _
      %v286 = vld [vmem:[%s243] sm:$0xff]
      %v287 = vld [vmem:[%s250] sm:$0xff]
      %v288 = vld [vmem:[%s258] sm:$0xff]
      %v289 = vpack.c.bf16 %v286, %v286
      %v290 = vpack.c.bf16 %v287, %v287
      %v291 = vpack.c.bf16 %v288, %v288
      %vm292 = vcmask 64512
      %v294 = vsel %vm292, %v289, 0
      %v297 = vsel %vm292, %v290, 0
      %299 = vmatpush.bf16.xpose.msra.mxu0 0
      %300 = vmatpush.bf16.xpose.msra.mxu0 0
      %301 = vmatpush.bf16.xpose.msra.mxu0 0
      %302 = vmatpush.bf16.xpose.msra.mxu0 0
      %303 = vmatpush.bf16.xpose.msra.mxu0 0
      %304 = vmatpush.bf16.xpose.msra.mxu0 0
      %305 = vmatpush.bf16.xpose.msra.mxu0 0
      %306 = vmatpush.bf16.xpose.msra.mxu0 %v297
      %307 = vmatmul.bf16.gmra.mxu0 %v294
      %v308 = vpop.f32.mrf.mxu0
      %v309 = vadd.f32 0.0, %v308
      %v310 = vpop.f32.mrf.mxu0
      %311 = vdwg.mxu0
      %v312 = vld [vmem:[#allocation2] sm:$0xff]
      %v313 = vsel %vm292, %v309, -inf
      %314 = vmax.xlane.f32.xlu0 %v313
      %v315 = vpop.xlane.xlu0 %314
      %v316 = vmax.f32 %v312, %v315
      %v317 = vsub.f32 %v312, %v316
      %v318 = vmul.f32 %v317, 1.442695
      %v319 = vpow.pop %v318
      %321 = vset.pattern.permute.xlu0 0
      %322 = vperm.xlu0 %321, %v316
      %v323 = vpop.permute.xlu0 %322
      %v325 = vsub.f32 %v309, %v323
      %v326 = vmul.f32 %v325, 1.442695
      %v327 = vpow.pop %v326
      %v328 = vld [vmem:[#allocation3] sm:$0xff]
      %v329 = vmul.f32 %v319, %v328
      %v330 = vsel %vm292, %v327, 0.0
      %331 = vadd.xlane.f32.xlu0 %v330
      %v332 = vpop.xlane.xlu0 %331
      %v333 = vadd.f32 %v329, %v332
      %vm334 = vcmask 7168
      %335 = vst.msk [vmem:[#allocation3] sm:$0xff] %vm334, %v333
      %v336 = vld [vmem:[#allocation4] sm:$0xff]
      %338 = vset.pattern.permute.xlu0 0
      %339 = vperm.xlu0 %338, %v319
      %v340 = vpop.permute.xlu0 %339
      %v342 = vmul.f32 %v340, %v336
      %v343 = vpack.c.bf16 %v327, %v327
      %v345 = vsel %vm292, %v343, 0
      %vm347 = vcmask 1043456
      %v349 = vsel %vm347, %v291, 0
      %351 = vmatpush.bf16.msra.mxu0 0
      %352 = vmatpush.bf16.msra.mxu0 0
      %353 = vmatpush.bf16.msra.mxu0 0
      %354 = vmatpush.bf16.msra.mxu0 0
      %355 = vmatpush.bf16.msra.mxu0 0
      %356 = vmatpush.bf16.msra.mxu0 0
      %357 = vmatpush.bf16.msra.mxu0 0
      %358 = vmatpush.bf16.msra.mxu0 %v349
      %359 = vmatmul.bf16.gmra.mxu0 %v345
      %v360 = vpop.f32.mrf.mxu0
      %v361 = vadd.f32 0.0, %v360
      %v362 = vpop.f32.mrf.mxu0
      %363 = vdwg.mxu0
      %v364 = vadd.f32 %v342, %v361
      %365 = vst.msk [vmem:[#allocation4] sm:$0xff] %vm292, %v364
      %366 = vst.msk [vmem:[#allocation2] sm:$0xff] %vm334, %v316
      %368 = vrot.lane.b32.xlu0 %v289, 120
      %v369 = vpop.permute.xlu0 %368
      %371 = vrot.lane.b32.xlu0 %v290, 120
      %v372 = vpop.permute.xlu0 %371
      %v374 = vsel %vm292, %v369, 0
      %v377 = vsel %vm292, %v372, 0
      %379 = vmatpush.bf16.xpose.msra.mxu0 0
      %380 = vmatpush.bf16.xpose.msra.mxu0 0
      %381 = vmatpush.bf16.xpose.msra.mxu0 0
      %382 = vmatpush.bf16.xpose.msra.mxu0 0
      %383 = vmatpush.bf16.xpose.msra.mxu0 0
      %384 = vmatpush.bf16.xpose.msra.mxu0 0
      %385 = vmatpush.bf16.xpose.msra.mxu0 0
      %386 = vmatpush.bf16.xpose.msra.mxu0 %v377
      %387 = vmatmul.bf16.gmra.mxu0 %v374
      %v388 = vpop.f32.mrf.mxu0
      %v389 = vadd.f32 0.0, %v388
      %v390 = vpop.f32.mrf.mxu0
      %391 = vdwg.mxu0
      %s392 = scalar_lea.vmem [#allocation2], 8
      %v393 = vld [vmem:[%s392] sm:$0xff]
      %v394 = vsel %vm292, %v389, -inf
      %395 = vmax.xlane.f32.xlu0 %v394
      %v396 = vpop.xlane.xlu0 %395
      %v397 = vmax.f32 %v393, %v396
      %v398 = vsub.f32 %v393, %v397
      %v399 = vmul.f32 %v398, 1.442695
      %v400 = vpow.pop %v399
      %402 = vset.pattern.permute.xlu0 0
      %403 = vperm.xlu0 %402, %v397
      %v404 = vpop.permute.xlu0 %403
      %v406 = vsub.f32 %v389, %v404
      %v407 = vmul.f32 %v406, 1.442695
      %v408 = vpow.pop %v407
      %s409 = scalar_lea.vmem [#allocation3], 8
      %v410 = vld [vmem:[%s409] sm:$0xff]
      %v411 = vmul.f32 %v400, %v410
      %v412 = vsel %vm292, %v408, 0.0
      %413 = vadd.xlane.f32.xlu0 %v412
      %v414 = vpop.xlane.xlu0 %413
      %v415 = vadd.f32 %v411, %v414
      %416 = vst.msk [vmem:[%s409] sm:$0xff] %vm334, %v415
      %s417 = scalar_lea.vmem [#allocation4], 8
      %v418 = vld [vmem:[%s417] sm:$0xff]
      %420 = vset.pattern.permute.xlu0 0
      %421 = vperm.xlu0 %420, %v400
      %v422 = vpop.permute.xlu0 %421
      %v424 = vmul.f32 %v422, %v418
      %v425 = vpack.c.bf16 %v408, %v408
      %427 = vrot.lane.b32.xlu0 %v291, 120
      %v428 = vpop.permute.xlu0 %427
      %v430 = vsel %vm292, %v425, 0
      %v433 = vsel %vm347, %v428, 0
      %435 = vmatpush.bf16.msra.mxu0 0
      %436 = vmatpush.bf16.msra.mxu0 0
      %437 = vmatpush.bf16.msra.mxu0 0
      %438 = vmatpush.bf16.msra.mxu0 0
      %439 = vmatpush.bf16.msra.mxu0 0
      %440 = vmatpush.bf16.msra.mxu0 0
      %441 = vmatpush.bf16.msra.mxu0 0
      %442 = vmatpush.bf16.msra.mxu0 %v433
      %443 = vmatmul.bf16.gmra.mxu0 %v430
      %v444 = vpop.f32.mrf.mxu0
      %v445 = vadd.f32 0.0, %v444
      %v446 = vpop.f32.mrf.mxu0
      %447 = vdwg.mxu0
      %v448 = vadd.f32 %v424, %v445
      %449 = vst.msk [vmem:[%s417] sm:$0xff] %vm292, %v448
      %450 = vst.msk [vmem:[%s392] sm:$0xff] %vm334, %v397
      %451 = vrot.lane.b32.xlu0 %v289, 112
      %v452 = vpop.permute.xlu0 %451
      %453 = vrot.lane.b32.xlu0 %v290, 112
      %v454 = vpop.permute.xlu0 %453
      %v456 = vsel %vm292, %v452, 0
      %v459 = vsel %vm292, %v454, 0
      %461 = vmatpush.bf16.xpose.msra.mxu0 0
      %462 = vmatpush.bf16.xpose.msra.mxu0 0
      %463 = vmatpush.bf16.xpose.msra.mxu0 0
      %464 = vmatpush.bf16.xpose.msra.mxu0 0
      %465 = vmatpush.bf16.xpose.msra.mxu0 0
      %466 = vmatpush.bf16.xpose.msra.mxu0 0
      %467 = vmatpush.bf16.xpose.msra.mxu0 0
      %468 = vmatpush.bf16.xpose.msra.mxu0 %v459
      %469 = vmatmul.bf16.gmra.mxu0 %v456
      %v470 = vpop.f32.mrf.mxu0
      %v471 = vadd.f32 0.0, %v470
      %v472 = vpop.f32.mrf.mxu0
      %473 = vdwg.mxu0
      %s474 = scalar_lea.vmem [#allocation2], 16
      %v475 = vld [vmem:[%s474] sm:$0xff]
      %v476 = vsel %vm292, %v471, -inf
      %477 = vmax.xlane.f32.xlu0 %v476
      %v478 = vpop.xlane.xlu0 %477
      %v479 = vmax.f32 %v475, %v478
      %v480 = vsub.f32 %v475, %v479
      %v481 = vmul.f32 %v480, 1.442695
      %v482 = vpow.pop %v481
      %484 = vset.pattern.permute.xlu0 0
      %485 = vperm.xlu0 %484, %v479
      %v486 = vpop.permute.xlu0 %485
      %v488 = vsub.f32 %v471, %v486
      %v489 = vmul.f32 %v488, 1.442695
      %v490 = vpow.pop %v489
      %s491 = scalar_lea.vmem [#allocation3], 16
      %v492 = vld [vmem:[%s491] sm:$0xff]
      %v493 = vmul.f32 %v482, %v492
      %v494 = vsel %vm292, %v490, 0.0
      %495 = vadd.xlane.f32.xlu0 %v494
      %v496 = vpop.xlane.xlu0 %495
      %v497 = vadd.f32 %v493, %v496
      %498 = vst.msk [vmem:[%s491] sm:$0xff] %vm334, %v497
      %s499 = scalar_lea.vmem [#allocation4], 16
      %v500 = vld [vmem:[%s499] sm:$0xff]
      %502 = vset.pattern.permute.xlu0 0
      %503 = vperm.xlu0 %502, %v482
      %v504 = vpop.permute.xlu0 %503
      %v506 = vmul.f32 %v504, %v500
      %v507 = vpack.c.bf16 %v490, %v490
      %508 = vrot.lane.b32.xlu0 %v291, 112
      %v509 = vpop.permute.xlu0 %508
      %v511 = vsel %vm292, %v507, 0
      %v514 = vsel %vm347, %v509, 0
      %516 = vmatpush.bf16.msra.mxu0 0
      %517 = vmatpush.bf16.msra.mxu0 0
      %518 = vmatpush.bf16.msra.mxu0 0
      %519 = vmatpush.bf16.msra.mxu0 0
      %520 = vmatpush.bf16.msra.mxu0 0
      %521 = vmatpush.bf16.msra.mxu0 0
      %522 = vmatpush.bf16.msra.mxu0 0
      %523 = vmatpush.bf16.msra.mxu0 %v514
      %524 = vmatmul.bf16.gmra.mxu0 %v511
      %v525 = vpop.f32.mrf.mxu0
      %v526 = vadd.f32 0.0, %v525
      %v527 = vpop.f32.mrf.mxu0
      %528 = vdwg.mxu0
      %v529 = vadd.f32 %v506, %v526
      %530 = vst.msk [vmem:[%s499] sm:$0xff] %vm292, %v529
      %531 = vst.msk [vmem:[%s474] sm:$0xff] %vm334, %v479
      %532 = vrot.lane.b32.xlu0 %v289, 104
      %v533 = vpop.permute.xlu0 %532
      %534 = vrot.lane.b32.xlu0 %v290, 104
      %v535 = vpop.permute.xlu0 %534
      %v537 = vsel %vm292, %v533, 0
      %v540 = vsel %vm292, %v535, 0
      %542 = vmatpush.bf16.xpose.msra.mxu0 0
      %543 = vmatpush.bf16.xpose.msra.mxu0 0
      %544 = vmatpush.bf16.xpose.msra.mxu0 0
      %545 = vmatpush.bf16.xpose.msra.mxu0 0
      %546 = vmatpush.bf16.xpose.msra.mxu0 0
      %547 = vmatpush.bf16.xpose.msra.mxu0 0
      %548 = vmatpush.bf16.xpose.msra.mxu0 0
      %549 = vmatpush.bf16.xpose.msra.mxu0 %v540
      %550 = vmatmul.bf16.gmra.mxu0 %v537
      %v551 = vpop.f32.mrf.mxu0
      %v552 = vadd.f32 0.0, %v551
      %v553 = vpop.f32.mrf.mxu0
      %554 = vdwg.mxu0
      %s555 = scalar_lea.vmem [#allocation2], 24
      %v556 = vld [vmem:[%s555] sm:$0xff]
      %v557 = vsel %vm292, %v552, -inf
      %558 = vmax.xlane.f32.xlu0 %v557
      %v559 = vpop.xlane.xlu0 %558
      %v560 = vmax.f32 %v556, %v559
      %v561 = vsub.f32 %v556, %v560
      %v562 = vmul.f32 %v561, 1.442695
      %v563 = vpow.pop %v562
      %565 = vset.pattern.permute.xlu0 0
      %566 = vperm.xlu0 %565, %v560
      %v567 = vpop.permute.xlu0 %566
      %v569 = vsub.f32 %v552, %v567
      %v570 = vmul.f32 %v569, 1.442695
      %v571 = vpow.pop %v570
      %s572 = scalar_lea.vmem [#allocation3], 24
      %v573 = vld [vmem:[%s572] sm:$0xff]
      %v574 = vmul.f32 %v563, %v573
      %v575 = vsel %vm292, %v571, 0.0
      %576 = vadd.xlane.f32.xlu0 %v575
      %v577 = vpop.xlane.xlu0 %576
      %v578 = vadd.f32 %v574, %v577
      %579 = vst.msk [vmem:[%s572] sm:$0xff] %vm334, %v578
      %s580 = scalar_lea.vmem [#allocation4], 24
      %v581 = vld [vmem:[%s580] sm:$0xff]
      %583 = vset.pattern.permute.xlu0 0
      %584 = vperm.xlu0 %583, %v563
      %v585 = vpop.permute.xlu0 %584
      %v587 = vmul.f32 %v585, %v581
      %v588 = vpack.c.bf16 %v571, %v571
      %589 = vrot.lane.b32.xlu0 %v291, 104
      %v590 = vpop.permute.xlu0 %589
      %v592 = vsel %vm292, %v588, 0
      %v595 = vsel %vm347, %v590, 0
      %597 = vmatpush.bf16.msra.mxu0 0
      %598 = vmatpush.bf16.msra.mxu0 0
      %599 = vmatpush.bf16.msra.mxu0 0
      %600 = vmatpush.bf16.msra.mxu0 0
      %601 = vmatpush.bf16.msra.mxu0 0
      %602 = vmatpush.bf16.msra.mxu0 0
      %603 = vmatpush.bf16.msra.mxu0 0
      %604 = vmatpush.bf16.msra.mxu0 %v595
      %605 = vmatmul.bf16.gmra.mxu0 %v592
      %v606 = vpop.f32.mrf.mxu0
      %v607 = vadd.f32 0.0, %v606
      %v608 = vpop.f32.mrf.mxu0
      %609 = vdwg.mxu0
      %v610 = vadd.f32 %v587, %v607
      %611 = vst.msk [vmem:[%s580] sm:$0xff] %vm292, %v610
      %612 = vst.msk [vmem:[%s555] sm:$0xff] %vm334, %v560
      // Predicated region
      $region37: #{decoder_only_transformer.26} parent=31 // pred_check
        %p613 = pneg %p268
      $region38: #{decoder_only_transformer.26} parent=31 // pred_check_branch
        %615 = sbr.rel (%p613) target = $region40
      $region39: #{decoder_only_transformer.26} parent=31 // pred_region
        %v616 = vld [vmem:[#allocation3] sm:$0xff]
        %v617 = vrcp.pop %v616
        %v618 = vld [vmem:[#allocation4] sm:$0xff]
        %620 = vset.pattern.permute.xlu0 0
        %621 = vperm.xlu0 %620, %v617
        %v622 = vpop.permute.xlu0 %621
        %v624 = vmul.f32 %v618, %v622
        %v625 = vld [vmem:[%s409] sm:$0xff]
        %v626 = vrcp.pop %v625
        %v627 = vld [vmem:[%s417] sm:$0xff]
        %629 = vset.pattern.permute.xlu0 0
        %630 = vperm.xlu0 %629, %v626
        %v631 = vpop.permute.xlu0 %630
        %v633 = vmul.f32 %v627, %v631
        %v634 = vld [vmem:[%s491] sm:$0xff]
        %v635 = vrcp.pop %v634
        %v636 = vld [vmem:[%s499] sm:$0xff]
        %638 = vset.pattern.permute.xlu0 0
        %639 = vperm.xlu0 %638, %v635
        %v640 = vpop.permute.xlu0 %639
        %v642 = vmul.f32 %v636, %v640
        %v643 = vld [vmem:[%s572] sm:$0xff]
        %v644 = vrcp.pop %v643
        %v645 = vld [vmem:[%s580] sm:$0xff]
        %647 = vset.pattern.permute.xlu0 0
        %648 = vperm.xlu0 %647, %v644
        %v649 = vpop.permute.xlu0 %648
        %v651 = vmul.f32 %v645, %v649
        %653 = vrot.lane.b32.xlu0 %v633, 8
        %v654 = vpop.permute.xlu0 %653
        %657 = vrot.lane.b32.xlu0 %v642, 16
        %v658 = vpop.permute.xlu0 %657
        %661 = vrot.lane.b32.xlu0 %v651, 24
        %v662 = vpop.permute.xlu0 %661
        %v664 = vsel %vm292, %v624, %v654
        %vm665 = vcmask 130048
        %v666 = vsel %vm665, %v664, %v658
        %vm667 = vcmask 195584
        %v668 = vsel %vm667, %v666, %v662
        %vm669 = vcmask 261120
        %670 = vst.msk [vmem:[%s266] sm:$0xff] %vm669, %v668
      $region40: #{decoder_only_transformer.26} parent=31 // pred_fallthru
        _
      %p671 = scmp.lt.s32.totalorder %s19, 1
      %s672 = scalar_select %p671, %s19, 1
      %p673 = scmp.lt.s32.totalorder %s20, 0
      %s674 = scalar_select %p673, %s20, 0
      %s675 = sadd.s32 %s674, %s672
      %s676 = smul.addr %s675, 8
      %s677 = scalar_lea.vmem %s3, %s676
      // Predicated region
      $region41: #{decoder_only_transformer.26} parent=31 // pred_check
        %p678 = pneg %p139
      $region42: #{decoder_only_transformer.26} parent=31 // pred_check_branch
        %680 = sbr.rel (%p678) target = $region44
      $region43: #{decoder_only_transformer.26} parent=31 // pred_region
        _
      $region44: #{decoder_only_transformer.26} parent=31 // pred_fallthru
        _
    $region32: #{decoder_only_transformer.26} parent=5 // pred_fallthru
      _
    %p681 = scmp.le.s32.totalorder 2, %s9
    // Predicated region
    $region45: #{decoder_only_transformer.26} parent=5 // pred_check
      %p682 = pneg %p681
    $region46: #{decoder_only_transformer.26} parent=5 // pred_check_branch
      %684 = sbr.rel (%p682) target = $region48
    $region47: #{decoder_only_transformer.26} parent=5 // pred_region
      %s685 = ssub.s32 %s9, 2
      // Predicated region
      $region49: #{decoder_only_transformer.26} parent=47 // pred_check
        %p686 = pneg %p145
      $region50: #{decoder_only_transformer.26} parent=47 // pred_check_branch
        %688 = sbr.rel (%p686) target = $region52
      $region51: #{decoder_only_transformer.26} parent=47 // pred_region
        %p689 = scmp.lt.s32.totalorder %s22, 1
        %s690 = scalar_select %p689, %s22, 1
        %p691 = scmp.lt.s32.totalorder %s23, 0
        %s692 = scalar_select %p691, %s23, 0
        %s693 = sadd.s32 %s692, %s690
        %s694 = smul.addr %s693, 8
        %s695 = scalar_lea.vmem %s3, %s694
      $region52: #{decoder_only_transformer.26} parent=47 // pred_fallthru
        _
    $region48: #{decoder_only_transformer.26} parent=5 // pred_fallthru
      _
  $region6: #{decoder_only_transformer.26} parent=0 // loop_footer
    %s13 = sadd.s32 1, %s9
  $region7: #{decoder_only_transformer.26} parent=0 // loop_footer_branch
    %8 = sbr.rel target = $region3
  $region8: #{decoder_only_transformer.26} parent=0 // loop_exit
    _

// kernel: decoder_only_transformer.29
$region0: #{decoder_only_transformer.29}
  #allocation0 [shape = 'u32[]', space=smem, size = 0x4, offset = 0x4, fixed_abs, tag = 'smem constant byte address 0x4 - core index']
  #allocation1 [shape = 'u32[72,128]{1,0:T(1,128)}', space=vmem, size = 0x9000, scoped, tag = 'internal scratch']
  #allocation2 [shape = 'f32[16,32]{1,0:T(8,128)}', space=vmem, size = 0x2000, scoped, tag = 'scratch operand']
  %s0 = inlined_call_operand.vmem [shape: f32[16,2048], index: 0, kind: input, shape index: {}]
  %s1 = inlined_call_operand.vmem [shape: bf16[2048,32], index: 1, kind: input, shape index: {}]
  %s2 = inlined_call_operand.vmem [shape: f32[1,32], index: 2, kind: input, shape index: {}]
  %s3 = inlined_call_operand.vmem [shape: f32[16,32], index: 3, kind: input, shape index: {}]
  %s4 = inlined_call_operand.vmem [shape: f32[1,32], index: 4, kind: input, shape index: {}]
  %s5 = inlined_call_operand.vmem [shape: f32[1,32], index: 5, kind: input, shape index: {}]
  %s6 = inlined_call_operand.vmem [shape: f32[16,32], index: 6, kind: output, shape index: {}]
  %s7 = sld [smem:[#allocation0]]
  $region88: #{decoder_only_transformer.29} parent=0
    _
  %s9 = ssub.s32 1, %s7
  %s10 = scalar_select 0, %s9, %s7
  $region1: #{decoder_only_transformer.29} parent=0
    #allocation3 [shape = 'u8[131072]{0}', space=vmem, size = 0x20000, scoped, tag = 'input window, operand 0']
    loop: start=0, step=1, limit=4
    $region2: #{decoder_only_transformer.29} parent=1 // loop_pre_header
      _
    $region3: #{decoder_only_transformer.29} parent=1 // loop_header
      %s12 = sphi 0, %s16
      %p13 = scmp.ge.s32.totalorder %s12, 4
      %s19 = sphi 0, %s31
      %s20 = sphi 0, %s27
      %s21 = sphi 0, %s19
      %s22 = sphi 0, %s20
      %s23 = sphi 0, %s21
      %s24 = sphi 0, %s22
      %s36 = sphi 0, %s38
      %s39 = sphi 0, %s36
      %s40 = sphi 0, %s39
      %s56 = sphi 0, %s40
      %s62 = sphi 0, %s64
      %s65 = sphi 0, %s62
      %s66 = sphi 0, %s65
      %s82 = sphi 0, %s66
      %s86 = sphi 0, %s86
      %s88 = sphi 0, %s86
      %s89 = sphi 0, %s88
      %s103 = sphi 0, %s89
      %s109 = sphi 0, %s111
      %s112 = sphi 0, %s109
      %s113 = sphi 0, %s112
      %s129 = sphi 0, %s113
      %s133 = sphi 0, %s133
      %s135 = sphi 0, %s133
      %s136 = sphi 0, %s135
      %s150 = sphi 0, %s136
      %s154 = sphi 0, %s154
      %s156 = sphi 0, %s154
      %s157 = sphi 0, %s156
      %s171 = sphi 0, %s157
      %s177 = sphi 0, %s179
      %s180 = sphi 0, %s177
      %s181 = sphi 0, %s180
      %s197 = sphi 0, %s181
    $region4: #{decoder_only_transformer.29} parent=1 // loop_header_branch
      %15 = sbr.rel (%p13) target = $region8
    $region5: #{decoder_only_transformer.29} parent=1 // loop_body
      %s17 = ssub.s32 %s12, 1
      %s18 = ssub.s32 %s12, 2
      %s25 = sadd.s32 1, %s20
      %p26 = scmp.ge.s32.totalorder %s25, 2
      %s27 = scalar_select %p26, 0, %s25
      %s28 = sadd.s32 1, %s19
      %s29 = scalar_select %p26, %s28, %s19
      %p30 = scmp.ge.s32.totalorder %s29, 1
      %s31 = scalar_select %p30, 0, %s29
      %s32 = ssub.s32 %s19, %s31
      %s33 = ssub.s32 %s20, %s27
      %s34 = sor.u32 %s32, %s33
      %p35 = scmp.eq.s32.totalorder %s34, 0
      %s37 = sadd.s32 %s36, 1
      %s38 = scalar_select %p35, %s36, %s37
      %p41 = pneg %p35
      %p42 = scmp.eq.s32.totalorder %s12, 1
      %p43 = por %p41, %p42
      %p44 = scmp.ne.s32.totalorder %s36, %s39
      %p45 = scmp.eq.s32.totalorder %s12, 0
      %p46 = por %p44, %p45
      %p47 = scmp.ne.s32.totalorder %s36, %s39
      %p48 = scmp.eq.s32.totalorder %s17, 1
      %p49 = por %p47, %p48
      %p50 = scmp.ne.s32.totalorder %s39, %s40
      %p51 = scmp.eq.s32.totalorder %s17, 0
      %p52 = por %p50, %p51
      %p53 = scmp.ne.s32.totalorder %s39, %s40
      %p54 = scmp.eq.s32.totalorder %s18, 1
      %p55 = por %p53, %p54
      %p57 = scmp.ne.s32.totalorder %s40, %s56
      %p58 = scmp.eq.s32.totalorder %s18, 0
      %p59 = por %p57, %p58
      %s60 = ssub.s32 %s20, %s27
      %p61 = scmp.eq.s32.totalorder %s60, 0
      %s63 = sadd.s32 %s62, 1
      %s64 = scalar_select %p61, %s62, %s63
      %p67 = pneg %p61
      %p68 = scmp.eq.s32.totalorder %s12, 1
      %p69 = por %p67, %p68
      %p70 = scmp.ne.s32.totalorder %s62, %s65
      %p71 = scmp.eq.s32.totalorder %s12, 0
      %p72 = por %p70, %p71
      %p73 = scmp.ne.s32.totalorder %s62, %s65
      %p74 = scmp.eq.s32.totalorder %s17, 1
      %p75 = por %p73, %p74
      %p76 = scmp.ne.s32.totalorder %s65, %s66
      %p77 = scmp.eq.s32.totalorder %s17, 0
      %p78 = por %p76, %p77
      %p79 = scmp.ne.s32.totalorder %s65, %s66
      %p80 = scmp.eq.s32.totalorder %s18, 1
      %p81 = por %p79, %p80
      %p83 = scmp.ne.s32.totalorder %s66, %s82
      %p84 = scmp.eq.s32.totalorder %s18, 0
      %p85 = por %p83, %p84
      %s87 = sadd.s32 %s86, 1
      %p90 = scmp.eq.s32.totalorder %s12, 1
      %p91 = scmp.ne.s32.totalorder %s86, %s88
      %p92 = scmp.eq.s32.totalorder %s12, 0
      %p93 = por %p91, %p92
      %p94 = scmp.ne.s32.totalorder %s86, %s88
      %p95 = scmp.eq.s32.totalorder %s17, 1
      %p96 = por %p94, %p95
      %p97 = scmp.ne.s32.totalorder %s88, %s89
      %p98 = scmp.eq.s32.totalorder %s17, 0
      %p99 = por %p97, %p98
      %p100 = scmp.ne.s32.totalorder %s88, %s89
      %p101 = scmp.eq.s32.totalorder %s18, 1
      %p102 = por %p100, %p101
      %p104 = scmp.ne.s32.totalorder %s89, %s103
      %p105 = scmp.eq.s32.totalorder %s18, 0
      %p106 = por %p104, %p105
      %s107 = ssub.s32 %s19, %s31
      %p108 = scmp.eq.s32.totalorder %s107, 0
      %s110 = sadd.s32 %s109, 1
      %s111 = scalar_select %p108, %s109, %s110
      %p114 = pneg %p108
      %p115 = scmp.eq.s32.totalorder %s12, 1
      %p116 = por %p114, %p115
      %p117 = scmp.ne.s32.totalorder %s109, %s112
      %p118 = scmp.eq.s32.totalorder %s12, 0
      %p119 = por %p117, %p118
      %p120 = scmp.ne.s32.totalorder %s109, %s112
      %p121 = scmp.eq.s32.totalorder %s17, 1
      %p122 = por %p120, %p121
      %p123 = scmp.ne.s32.totalorder %s112, %s113
      %p124 = scmp.eq.s32.totalorder %s17, 0
      %p125 = por %p123, %p124
      %p126 = scmp.ne.s32.totalorder %s112, %s113
      %p127 = scmp.eq.s32.totalorder %s18, 1
      %p128 = por %p126, %p127
      %p130 = scmp.ne.s32.totalorder %s113, %s129
      %p131 = scmp.eq.s32.totalorder %s18, 0
      %p132 = por %p130, %p131
      %s134 = sadd.s32 %s133, 1
      %p137 = scmp.eq.s32.totalorder %s12, 1
      %p138 = scmp.ne.s32.totalorder %s133, %s135
      %p139 = scmp.eq.s32.totalorder %s12, 0
      %p140 = por %p138, %p139
      %p141 = scmp.ne.s32.totalorder %s133, %s135
      %p142 = scmp.eq.s32.totalorder %s17, 1
      %p143 = por %p141, %p142
      %p144 = scmp.ne.s32.totalorder %s135, %s136
      %p145 = scmp.eq.s32.totalorder %s17, 0
      %p146 = por %p144, %p145
      %p147 = scmp.ne.s32.totalorder %s135, %s136
      %p148 = scmp.eq.s32.totalorder %s18, 1
      %p149 = por %p147, %p148
      %p151 = scmp.ne.s32.totalorder %s136, %s150
      %p152 = scmp.eq.s32.totalorder %s18, 0
      %p153 = por %p151, %p152
      %s155 = sadd.s32 %s154, 1
      %p158 = scmp.eq.s32.totalorder %s12, 1
      %p159 = scmp.ne.s32.totalorder %s154, %s156
      %p160 = scmp.eq.s32.totalorder %s12, 0
      %p161 = por %p159, %p160
      %p162 = scmp.ne.s32.totalorder %s154, %s156
      %p163 = scmp.eq.s32.totalorder %s17, 1
      %p164 = por %p162, %p163
      %p165 = scmp.ne.s32.totalorder %s156, %s157
      %p166 = scmp.eq.s32.totalorder %s17, 0
      %p167 = por %p165, %p166
      %p168 = scmp.ne.s32.totalorder %s156, %s157
      %p169 = scmp.eq.s32.totalorder %s18, 1
      %p170 = por %p168, %p169
      %p172 = scmp.ne.s32.totalorder %s157, %s171
      %p173 = scmp.eq.s32.totalorder %s18, 0
      %p174 = por %p172, %p173
      %s175 = ssub.s32 %s19, %s31
      %p176 = scmp.eq.s32.totalorder %s175, 0
      %s178 = sadd.s32 %s177, 1
      %s179 = scalar_select %p176, %s177, %s178
      %p182 = pneg %p176
      %p183 = scmp.eq.s32.totalorder %s12, 1
      %p184 = por %p182, %p183
      %p185 = scmp.ne.s32.totalorder %s177, %s180
      %p186 = scmp.eq.s32.totalorder %s12, 0
      %p187 = por %p185, %p186
      %p188 = scmp.ne.s32.totalorder %s177, %s180
      %p189 = scmp.eq.s32.totalorder %s17, 1
      %p190 = por %p188, %p189
      %p191 = scmp.ne.s32.totalorder %s180, %s181
      %p192 = scmp.eq.s32.totalorder %s17, 0
      %p193 = por %p191, %p192
      %p194 = scmp.ne.s32.totalorder %s180, %s181
      %p195 = scmp.eq.s32.totalorder %s18, 1
      %p196 = por %p194, %p195
      %p198 = scmp.ne.s32.totalorder %s181, %s197
      %p199 = scmp.eq.s32.totalorder %s18, 0
      %p200 = por %p198, %p199
      %p201 = scmp.le.s32.totalorder 1, %s12
      %p202 = scmp.lt.s32.totalorder %s12, 3
      %p203 = pnand %p201, %p202
      %p204 = pneg %p203
      // Predicated region
      $region9: #{decoder_only_transformer.29} parent=5 // pred_check
        _
      $region10: #{decoder_only_transformer.29} parent=5 // pred_check_branch
        %206 = sbr.rel (%p203) target = $region12
      $region11: #{decoder_only_transformer.29} parent=5 // pred_region
        %s207 = ssub.s32 %s12, 1
        // Predicated region
        $region13: #{decoder_only_transformer.29} parent=11 // pred_check
          %p208 = pneg %p99
        $region14: #{decoder_only_transformer.29} parent=11 // pred_check_branch
          %210 = sbr.rel (%p208) target = $region16
        $region15: #{decoder_only_transformer.29} parent=11 // pred_region
          _
        $region16: #{decoder_only_transformer.29} parent=11 // pred_fallthru
          _
        // Predicated region
        $region17: #{decoder_only_transformer.29} parent=11 // pred_check
          %p211 = pneg %p125
        $region18: #{decoder_only_transformer.29} parent=11 // pred_check_branch
          %213 = sbr.rel (%p211) target = $region20
        $region19: #{decoder_only_transformer.29} parent=11 // pred_region
          %s214 = smul.u32 2, %s21
          %p215 = scmp.lt.s32.totalorder %s214, 1
          %s216 = scalar_select %p215, %s214, 1
          %s217 = smul.addr %s216, 8
          %s218 = scalar_lea.vmem %s3, %s217
          %s219 = smul.u32 2, %s21
        $region20: #{decoder_only_transformer.29} parent=11 // pred_fallthru
          _
        // Predicated region
        $region21: #{decoder_only_transformer.29} parent=11 // pred_check
          %p220 = pneg %p146
        $region22: #{decoder_only_transformer.29} parent=11 // pred_check_branch
          %222 = sbr.rel (%p220) target = $region24
        $region23: #{decoder_only_transformer.29} parent=11 // pred_region
          _
        $region24: #{decoder_only_transformer.29} parent=11 // pred_fallthru
          _
        // Predicated region
        $region25: #{decoder_only_transformer.29} parent=11 // pred_check
          %p223 = pneg %p167
        $region26: #{decoder_only_transformer.29} parent=11 // pred_check_branch
          %225 = sbr.rel (%p223) target = $region28
        $region27: #{decoder_only_transformer.29} parent=11 // pred_region
          _
        $region28: #{decoder_only_transformer.29} parent=11 // pred_fallthru
          _
      $region12: #{decoder_only_transformer.29} parent=5 // pred_fallthru
        _
      %p226 = scmp.lt.s32.totalorder %s12, 2
      // Predicated region
      $region29: #{decoder_only_transformer.29} parent=5 // pred_check
        %p227 = pneg %p226
      $region30: #{decoder_only_transformer.29} parent=5 // pred_check_branch
        %229 = sbr.rel (%p227) target = $region32
      $region31: #{decoder_only_transformer.29} parent=5 // pred_region
        // Predicated region
        $region33: #{decoder_only_transformer.29} parent=31 // pred_check
          %p230 = pneg %p46
        $region34: #{decoder_only_transformer.29} parent=31 // pred_check_branch
          %232 = sbr.rel (%p230) target = $region36
        $region35: #{decoder_only_transformer.29} parent=31 // pred_region
          %s233 = sand.u32 %s36, 1
          %s234 = sand.u32 %s36, 1
          %s235 = smul.addr %s234, 128
          %s236 = scalar_lea.vmem [#allocation3], %s235
          %s237 = smul.u32 2, %s19
          %s238 = smul.u32 8, %s20
          %s239 = smul.addr %s237, 16
          %s240 = sadd.s32 %s238, %s239
          %s241 = smul.addr %s240, 8
          %s242 = scalar_lea.vmem %s0, %s241
          // Predicated region
          $region37: #{decoder_only_transformer.29} parent=35 // pred_check
            _
          $region38: #{decoder_only_transformer.29} parent=35 // pred_check_branch
            %244 = sbr.rel (0) target = $region40
          $region39: #{decoder_only_transformer.29} parent=35 // pred_region
            // Predicated region
            $region41: #{decoder_only_transformer.29} parent=39 // pred_check
              _
            $region42: #{decoder_only_transformer.29} parent=39 // pred_check_branch
              %246 = sbr.rel (0) target = $region44
            $region43: #{decoder_only_transformer.29} parent=39 // pred_region
              loop: start=0, step=1, limit=1
              $region45: #{decoder_only_transformer.29} parent=43 // loop_pre_header
                _
              $region46: #{decoder_only_transformer.29} parent=43 // loop_header
                %s248 = sphi 0, %s252
                %p249 = scmp.ge.s32.totalorder %s248, 1
                %s253 = sphi %s242, %s242
                %s254 = sphi %s236, %s236
              $region47: #{decoder_only_transformer.29} parent=43 // loop_header_branch
                %251 = sbr.rel (%p249) target = $region51
              $region48: #{decoder_only_transformer.29} parent=43 // loop_body
                %v255 = vld [vmem:[%s253] sm:$0xff]
                %256 = vst [vmem:[%s254] sm:$0xff] %v255
                %v257 = vld [vmem:[%s253 + $0x8] sm:$0xff]
                %258 = vst [vmem:[%s254 + $0x8] sm:$0xff] %v257
                %v259 = vld [vmem:[%s253 + $0x10] sm:$0xff]
                %260 = vst [vmem:[%s254 + $0x10] sm:$0xff] %v259
                %v261 = vld [vmem:[%s253 + $0x18] sm:$0xff]
                %262 = vst [vmem:[%s254 + $0x18] sm:$0xff] %v261
                %v263 = vld [vmem:[%s253 + $0x20] sm:$0xff]
                %264 = vst [vmem:[%s254 + $0x20] sm:$0xff] %v263
                %v265 = vld [vmem:[%s253 + $0x28] sm:$0xff]
                %266 = vst [vmem:[%s254 + $0x28] sm:$0xff] %v265
                %v267 = vld [vmem:[%s253 + $0x30] sm:$0xff]
                %268 = vst [vmem:[%s254 + $0x30] sm:$0xff] %v267
                %v269 = vld [vmem:[%s253 + $0x38] sm:$0xff]
                %270 = vst [vmem:[%s254 + $0x38] sm:$0xff] %v269
                %v271 = vld [vmem:[%s253 + $0x80] sm:$0xff]
                %272 = vst [vmem:[%s254 + $0x40] sm:$0xff] %v271
                %v273 = vld [vmem:[%s253 + $0x88] sm:$0xff]
                %274 = vst [vmem:[%s254 + $0x48] sm:$0xff] %v273
                %v275 = vld [vmem:[%s253 + $0x90] sm:$0xff]
                %276 = vst [vmem:[%s254 + $0x50] sm:$0xff] %v275
                %v277 = vld [vmem:[%s253 + $0x98] sm:$0xff]
                %278 = vst [vmem:[%s254 + $0x58] sm:$0xff] %v277
                %v279 = vld [vmem:[%s253 + $0xa0] sm:$0xff]
                %280 = vst [vmem:[%s254 + $0x60] sm:$0xff] %v279
                %v281 = vld [vmem:[%s253 + $0xa8] sm:$0xff]
                %282 = vst [vmem:[%s254 + $0x68] sm:$0xff] %v281
                %v283 = vld [vmem:[%s253 + $0xb0] sm:$0xff]
                %284 = vst [vmem:[%s254 + $0x70] sm:$0xff] %v283
                %v285 = vld [vmem:[%s253 + $0xb8] sm:$0xff]
                %286 = vst [vmem:[%s254 + $0x78] sm:$0xff] %v285
              $region49: #{decoder_only_transformer.29} parent=43 // loop_footer
                %s252 = sadd.s32 1, %s248
              $region50: #{decoder_only_transformer.29} parent=43 // loop_footer_branch
                %247 = sbr.rel target = $region46
              $region51: #{decoder_only_transformer.29} parent=43 // loop_exit
                _
            $region44: #{decoder_only_transformer.29} parent=39 // pred_fallthru
              _
            // Predicated region
            $region52: #{decoder_only_transformer.29} parent=39 // pred_check
              _
            $region53: #{decoder_only_transformer.29} parent=39 // pred_check_branch
              %288 = sbr.rel target = $region55
            $region54: #{decoder_only_transformer.29} parent=39 // pred_region
              _
            $region55: #{decoder_only_transformer.29} parent=39 // pred_fallthru
              _
          $region40: #{decoder_only_transformer.29} parent=35 // pred_fallthru
            _
          %289 = vnop
        $region36: #{decoder_only_transformer.29} parent=31 // pred_fallthru
          _
        // Predicated region
        $region56: #{decoder_only_transformer.29} parent=31 // pred_check
          %p290 = pneg %p72
        $region57: #{decoder_only_transformer.29} parent=31 // pred_check_branch
          %292 = sbr.rel (%p290) target = $region59
        $region58: #{decoder_only_transformer.29} parent=31 // pred_region
          %s293 = smul.u32 128, %s20
          %p294 = scmp.lt.s32.totalorder %s293, 255
          %s295 = scalar_select %p294, %s293, 255
          %s296 = smul.addr %s295, 4
          %s297 = scalar_lea.vmem %s1, %s296
          %s298 = smul.u32 128, %s20
        $region59: #{decoder_only_transformer.29} parent=31 // pred_fallthru
          _
      $region32: #{decoder_only_transformer.29} parent=5 // pred_fallthru
        _
      %p299 = scmp.le.s32.totalorder 1, %s12
      %p300 = scmp.lt.s32.totalorder %s12, 3
      %p301 = pnand %p299, %p300
      %p302 = pneg %p301
      // Predicated region
      $region60: #{decoder_only_transformer.29} parent=5 // pred_check
        _
      $region61: #{decoder_only_transformer.29} parent=5 // pred_check_branch
        %304 = sbr.rel (%p301) target = $region63
      $region62: #{decoder_only_transformer.29} parent=5 // pred_region
        %s305 = ssub.s32 %s12, 1
        %s306 = sand.u32 %s39, 1
        %s307 = sand.u32 %s39, 1
        %s308 = smul.addr %s307, 128
        %s309 = scalar_lea.vmem [#allocation3], %s308
        // Predicated region
        $region64: #{decoder_only_transformer.29} parent=62 // pred_check
          %p310 = pneg %p52
        $region65: #{decoder_only_transformer.29} parent=62 // pred_check_branch
          %312 = sbr.rel (%p310) target = $region67
        $region66: #{decoder_only_transformer.29} parent=62 // pred_region
          _
        $region67: #{decoder_only_transformer.29} parent=62 // pred_fallthru
          _
        %s313 = sand.u32 %s39, 1
        %s314 = sand.u32 %s39, 1
        %s315 = smul.addr %s314, 128
        %s316 = scalar_lea.vmem [#allocation3], %s315
        %p317 = pneg %p52
        %p318 = pneg %p49
        %s319 = smul.u32 128, %s22
        %p320 = scmp.lt.s32.totalorder %s319, 255
        %s321 = scalar_select %p320, %s319, 255
        %s322 = smul.addr %s321, 4
        %s323 = scalar_lea.vmem %s1, %s322
        %p324 = pneg %p78
        %p325 = pneg %p75
        %p326 = pneg %p99
        %p327 = pneg %p96
        %s328 = smul.u32 2, %s21
        %p329 = scmp.lt.s32.totalorder %s328, 1
        %s330 = scalar_select %p329, %s328, 1
        %s331 = smul.addr %s330, 8
        %s332 = scalar_lea.vmem %s3, %s331
        %p333 = pneg %p125
        %p334 = pneg %p122
        %p335 = pneg %p146
        %p336 = pneg %p143
        %p337 = pneg %p167
        %p338 = pneg %p164
        %p339 = pneg %p193
        %p340 = pneg %p190
        %s341 = smul.u32 2, %s21
        %p342 = scmp.lt.s32.totalorder %s341, 1
        %s343 = scalar_select %p342, %s341, 1
        %s344 = smul.addr %s343, 8
        %s345 = scalar_lea.vmem %s6, %s344
        %s346 = smul.u32 2, %s21
        %s347 = smul.u32 8, %s22
        %s348 = smul.u32 128, %s22
        %p349 = scmp.lt.s32.totalorder %s348, 255
        %s350 = scalar_select %p349, %s348, 255
        %s351 = smul.addr %s350, 4
        %s352 = scalar_lea.vmem %s1, %s351
        %s353 = smul.u32 128, %s22
        %s354 = smul.u32 2, %s21
        %p355 = scmp.lt.s32.totalorder %s354, 1
        %s356 = scalar_select %p355, %s354, 1
        %s357 = smul.addr %s356, 8
        %s358 = scalar_lea.vmem %s3, %s357
        %s359 = smul.u32 2, %s21
        %s360 = smul.u32 2, %s21
        %p361 = scmp.lt.s32.totalorder %s360, 1
        %s362 = scalar_select %p361, %s360, 1
        %s363 = smul.addr %s362, 8
        %s364 = scalar_lea.vmem %s6, %s363
        %s365 = smul.u32 2, %s21
        %p366 = scmp.eq.s32.totalorder %s22, 0
        // Predicated region
        $region68: #{decoder_only_transformer.29} parent=62 // pred_check
          %p367 = pneg %p366
        $region69: #{decoder_only_transformer.29} parent=62 // pred_check_branch
          %369 = sbr.rel (%p367) target = $region71
        $region70: #{decoder_only_transformer.29} parent=62 // pred_region
          %vm370 = vcmask 261120
          %371 = vst.msk [vmem:[#allocation2] sm:$0xff] %vm370, 0.0
          %372 = vst.msk [vmem:[#allocation2 + $0x8] sm:$0xff] %vm370, 0.0
        $region71: #{decoder_only_transformer.29} parent=62 // pred_fallthru
          _
        %v373 = vld [vmem:[#allocation2] sm:$0xff]
        %v374 = vld [vmem:[#allocation2 + $0x8] sm:$0xff]
        %v375 = vld [vmem:[%s309] sm:$0xff]
        %v376 = vld [vmem:[%s309 + $0x8] sm:$0xff]
        %v377 = vld [vmem:[%s309 + $0x10] sm:$0xff]
        %v378 = vld [vmem:[%s309 + $0x18] sm:$0xff]
        %v379 = vld [vmem:[%s309 + $0x20] sm:$0xff]
        %v380 = vld [vmem:[%s309 + $0x28] sm:$0xff]
        %v381 = vld [vmem:[%s309 + $0x30] sm:$0xff]
        %v382 = vld [vmem:[%s309 + $0x38] sm:$0xff]
        %v383 = vld [vmem:[%s309 + $0x40] sm:$0xff]
        %v384 = vld [vmem:[%s309 + $0x48] sm:$0xff]
        %v385 = vld [vmem:[%s309 + $0x50] sm:$0xff]
        %v386 = vld [vmem:[%s309 + $0x58] sm:$0xff]
        %v387 = vld [vmem:[%s309 + $0x60] sm:$0xff]
        %v388 = vld [vmem:[%s309 + $0x68] sm:$0xff]
        %v389 = vld [vmem:[%s309 + $0x70] sm:$0xff]
        %v390 = vld [vmem:[%s309 + $0x78] sm:$0xff]
        %v391 = vpack.c.bf16 %v383, %v375
        %v392 = vpack.c.bf16 %v384, %v376
        %v393 = vpack.c.bf16 %v385, %v377
        %v394 = vpack.c.bf16 %v386, %v378
        %v395 = vpack.c.bf16 %v387, %v379
        %v396 = vpack.c.bf16 %v388, %v380
        %v397 = vpack.c.bf16 %v389, %v381
        %v398 = vpack.c.bf16 %v390, %v382
        %v399 = vld [vmem:[%s352] sm:$0xf]
        %v400 = vld [vmem:[%s352 + $0x4] sm:$0xf]
        %v401 = vld [vmem:[%s352 + $0x8] sm:$0xf]
        %v402 = vld [vmem:[%s352 + $0xc] sm:$0xf]
        %v403 = vld [vmem:[%s352 + $0x10] sm:$0xf]
        %v404 = vld [vmem:[%s352 + $0x14] sm:$0xf]
        %v405 = vld [vmem:[%s352 + $0x18] sm:$0xf]
        %v406 = vld [vmem:[%s352 + $0x1c] sm:$0xf]
        %v407 = vld [vmem:[%s352 + $0x20] sm:$0xf]
        %v408 = vld [vmem:[%s352 + $0x24] sm:$0xf]
        %v409 = vld [vmem:[%s352 + $0x28] sm:$0xf]
        %v410 = vld [vmem:[%s352 + $0x2c] sm:$0xf]
        %v411 = vld [vmem:[%s352 + $0x30] sm:$0xf]
        %v412 = vld [vmem:[%s352 + $0x34] sm:$0xf]
        %v413 = vld [vmem:[%s352 + $0x38] sm:$0xf]
        %v414 = vld [vmem:[%s352 + $0x3c] sm:$0xf]
        %v415 = vld [vmem:[%s352 + $0x40] sm:$0xf]
        %v416 = vld [vmem:[%s352 + $0x44] sm:$0xf]
        %v417 = vld [vmem:[%s352 + $0x48] sm:$0xf]
        %v418 = vld [vmem:[%s352 + $0x4c] sm:$0xf]
        %v419 = vld [vmem:[%s352 + $0x50] sm:$0xf]
        %v420 = vld [vmem:[%s352 + $0x54] sm:$0xf]
        %v421 = vld [vmem:[%s352 + $0x58] sm:$0xf]
        %v422 = vld [vmem:[%s352 + $0x5c] sm:$0xf]
        %v423 = vld [vmem:[%s352 + $0x60] sm:$0xf]
        %v424 = vld [vmem:[%s352 + $0x64] sm:$0xf]
        %v425 = vld [vmem:[%s352 + $0x68] sm:$0xf]
        %v426 = vld [vmem:[%s352 + $0x6c] sm:$0xf]
        %v427 = vld [vmem:[%s352 + $0x70] sm:$0xf]
        %v428 = vld [vmem:[%s352 + $0x74] sm:$0xf]
        %v429 = vld [vmem:[%s352 + $0x78] sm:$0xf]
        %v430 = vld [vmem:[%s352 + $0x7c] sm:$0xf]
        %v431 = vld [vmem:[%s352 + $0x80] sm:$0xf]
        %v432 = vld [vmem:[%s352 + $0x84] sm:$0xf]
        %v433 = vld [vmem:[%s352 + $0x88] sm:$0xf]
        %v434 = vld [vmem:[%s352 + $0x8c] sm:$0xf]
        %v435 = vld [vmem:[%s352 + $0x90] sm:$0xf]
        %v436 = vld [vmem:[%s352 + $0x94] sm:$0xf]
        %v437 = vld [vmem:[%s352 + $0x98] sm:$0xf]
        %v438 = vld [vmem:[%s352 + $0x9c] sm:$0xf]
        %v439 = vld [vmem:[%s352 + $0xa0] sm:$0xf]
        %v440 = vld [vmem:[%s352 + $0xa4] sm:$0xf]
        %v441 = vld [vmem:[%s352 + $0xa8] sm:$0xf]
        %v442 = vld [vmem:[%s352 + $0xac] sm:$0xf]
        %v443 = vld [vmem:[%s352 + $0xb0] sm:$0xf]
        %v444 = vld [vmem:[%s352 + $0xb4] sm:$0xf]
        %v445 = vld [vmem:[%s352 + $0xb8] sm:$0xf]
        %v446 = vld [vmem:[%s352 + $0xbc] sm:$0xf]
        %v447 = vld [vmem:[%s352 + $0xc0] sm:$0xf]
        %v448 = vld [vmem:[%s352 + $0xc4] sm:$0xf]
        %v449 = vld [vmem:[%s352 + $0xc8] sm:$0xf]
        %v450 = vld [vmem:[%s352 + $0xcc] sm:$0xf]
        %v451 = vld [vmem:[%s352 + $0xd0] sm:$0xf]
        %v452 = vld [vmem:[%s352 + $0xd4] sm:$0xf]
        %v453 = vld [vmem:[%s352 + $0xd8] sm:$0xf]
        %v454 = vld [vmem:[%s352 + $0xdc] sm:$0xf]
        %v455 = vld [vmem:[%s352 + $0xe0] sm:$0xf]
        %v456 = vld [vmem:[%s352 + $0xe4] sm:$0xf]
        %v457 = vld [vmem:[%s352 + $0xe8] sm:$0xf]
        %v458 = vld [vmem:[%s352 + $0xec] sm:$0xf]
        %v459 = vld [vmem:[%s352 + $0xf0] sm:$0xf]
        %v460 = vld [vmem:[%s352 + $0xf4] sm:$0xf]
        %v461 = vld [vmem:[%s352 + $0xf8] sm:$0xf]
        %v462 = vld [vmem:[%s352 + $0xfc] sm:$0xf]
        %v463 = vld [vmem:[%s352 + $0x100] sm:$0xf]
        %v464 = vld [vmem:[%s352 + $0x104] sm:$0xf]
        %v465 = vld [vmem:[%s352 + $0x108] sm:$0xf]
        %v466 = vld [vmem:[%s352 + $0x10c] sm:$0xf]
        %v467 = vld [vmem:[%s352 + $0x110] sm:$0xf]
        %v468 = vld [vmem:[%s352 + $0x114] sm:$0xf]
        %v469 = vld [vmem:[%s352 + $0x118] sm:$0xf]
        %v470 = vld [vmem:[%s352 + $0x11c] sm:$0xf]
        %v471 = vld [vmem:[%s352 + $0x120] sm:$0xf]
        %v472 = vld [vmem:[%s352 + $0x124] sm:$0xf]
        %v473 = vld [vmem:[%s352 + $0x128] sm:$0xf]
        %v474 = vld [vmem:[%s352 + $0x12c] sm:$0xf]
        %v475 = vld [vmem:[%s352 + $0x130] sm:$0xf]
        %v476 = vld [vmem:[%s352 + $0x134] sm:$0xf]
        %v477 = vld [vmem:[%s352 + $0x138] sm:$0xf]
        %v478 = vld [vmem:[%s352 + $0x13c] sm:$0xf]
        %v479 = vld [vmem:[%s352 + $0x140] sm:$0xf]
        %v480 = vld [vmem:[%s352 + $0x144] sm:$0xf]
        %v481 = vld [vmem:[%s352 + $0x148] sm:$0xf]
        %v482 = vld [vmem:[%s352 + $0x14c] sm:$0xf]
        %v483 = vld [vmem:[%s352 + $0x150] sm:$0xf]
        %v484 = vld [vmem:[%s352 + $0x154] sm:$0xf]
        %v485 = vld [vmem:[%s352 + $0x158] sm:$0xf]
        %v486 = vld [vmem:[%s352 + $0x15c] sm:$0xf]
        %v487 = vld [vmem:[%s352 + $0x160] sm:$0xf]
        %v488 = vld [vmem:[%s352 + $0x164] sm:$0xf]
        %v489 = vld [vmem:[%s352 + $0x168] sm:$0xf]
        %v490 = vld [vmem:[%s352 + $0x16c] sm:$0xf]
        %v491 = vld [vmem:[%s352 + $0x170] sm:$0xf]
        %v492 = vld [vmem:[%s352 + $0x174] sm:$0xf]
        %v493 = vld [vmem:[%s352 + $0x178] sm:$0xf]
        %v494 = vld [vmem:[%s352 + $0x17c] sm:$0xf]
        %v495 = vld [vmem:[%s352 + $0x180] sm:$0xf]
        %v496 = vld [vmem:[%s352 + $0x184] sm:$0xf]
        %v497 = vld [vmem:[%s352 + $0x188] sm:$0xf]
        %v498 = vld [vmem:[%s352 + $0x18c] sm:$0xf]
        %v499 = vld [vmem:[%s352 + $0x190] sm:$0xf]
        %v500 = vld [vmem:[%s352 + $0x194] sm:$0xf]
        %v501 = vld [vmem:[%s352 + $0x198] sm:$0xf]
        %v502 = vld [vmem:[%s352 + $0x19c] sm:$0xf]
        %v503 = vld [vmem:[%s352 + $0x1a0] sm:$0xf]
        %v504 = vld [vmem:[%s352 + $0x1a4] sm:$0xf]
        %v505 = vld [vmem:[%s352 + $0x1a8] sm:$0xf]
        %v506 = vld [vmem:[%s352 + $0x1ac] sm:$0xf]
        %v507 = vld [vmem:[%s352 + $0x1b0] sm:$0xf]
        %v508 = vld [vmem:[%s352 + $0x1b4] sm:$0xf]
        %v509 = vld [vmem:[%s352 + $0x1b8] sm:$0xf]
        %v510 = vld [vmem:[%s352 + $0x1bc] sm:$0xf]
        %v511 = vld [vmem:[%s352 + $0x1c0] sm:$0xf]
        %v512 = vld [vmem:[%s352 + $0x1c4] sm:$0xf]
        %v513 = vld [vmem:[%s352 + $0x1c8] sm:$0xf]
        %v514 = vld [vmem:[%s352 + $0x1cc] sm:$0xf]
        %v515 = vld [vmem:[%s352 + $0x1d0] sm:$0xf]
        %v516 = vld [vmem:[%s352 + $0x1d4] sm:$0xf]
        %v517 = vld [vmem:[%s352 + $0x1d8] sm:$0xf]
        %v518 = vld [vmem:[%s352 + $0x1dc] sm:$0xf]
        %v519 = vld [vmem:[%s352 + $0x1e0] sm:$0xf]
        %v520 = vld [vmem:[%s352 + $0x1e4] sm:$0xf]
        %v521 = vld [vmem:[%s352 + $0x1e8] sm:$0xf]
        %v522 = vld [vmem:[%s352 + $0x1ec] sm:$0xf]
        %v523 = vld [vmem:[%s352 + $0x1f0] sm:$0xf]
        %v524 = vld [vmem:[%s352 + $0x1f4] sm:$0xf]
        %v525 = vld [vmem:[%s352 + $0x1f8] sm:$0xf]
        %v526 = vld [vmem:[%s352 + $0x1fc] sm:$0xf]
        %v655 = vunpack.c.l.b16 %v399
        %v656 = vunpack.c.l.b16 %v400
        %v657 = vunpack.c.l.b16 %v401
        %v658 = vunpack.c.l.b16 %v402
        %v659 = vunpack.c.l.b16 %v403
        %v660 = vunpack.c.l.b16 %v404
        %v661 = vunpack.c.l.b16 %v405
        %v662 = vunpack.c.l.b16 %v406
        %v663 = vunpack.c.l.b16 %v407
        %v664 = vunpack.c.l.b16 %v408
        %v665 = vunpack.c.l.b16 %v409
        %v666 = vunpack.c.l.b16 %v410
        %v667 = vunpack.c.l.b16 %v411
        %v668 = vunpack.c.l.b16 %v412
        %v669 = vunpack.c.l.b16 %v413
        %v670 = vunpack.c.l.b16 %v414
        %v671 = vunpack.c.l.b16 %v415
        %v672 = vunpack.c.l.b16 %v416
        %v673 = vunpack.c.l.b16 %v417
        %v674 = vunpack.c.l.b16 %v418
        %v675 = vunpack.c.l.b16 %v419
        %v676 = vunpack.c.l.b16 %v420
        %v677 = vunpack.c.l.b16 %v421
        %v678 = vunpack.c.l.b16 %v422
        %v679 = vunpack.c.l.b16 %v423
        %v680 = vunpack.c.l.b16 %v424
        %v681 = vunpack.c.l.b16 %v425
        %v682 = vunpack.c.l.b16 %v426
        %v683 = vunpack.c.l.b16 %v427
        %v684 = vunpack.c.l.b16 %v428
        %v685 = vunpack.c.l.b16 %v429
        %v686 = vunpack.c.l.b16 %v430
        %v687 = vunpack.c.l.b16 %v431
        %v688 = vunpack.c.l.b16 %v432
        %v689 = vunpack.c.l.b16 %v433
        %v690 = vunpack.c.l.b16 %v434
        %v691 = vunpack.c.l.b16 %v435
        %v692 = vunpack.c.l.b16 %v436
        %v693 = vunpack.c.l.b16 %v437
        %v694 = vunpack.c.l.b16 %v438
        %v695 = vunpack.c.l.b16 %v439
        %v696 = vunpack.c.l.b16 %v440
        %v697 = vunpack.c.l.b16 %v441
        %v698 = vunpack.c.l.b16 %v442
        %v699 = vunpack.c.l.b16 %v443
        %v700 = vunpack.c.l.b16 %v444
        %v701 = vunpack.c.l.b16 %v445
        %v702 = vunpack.c.l.b16 %v446
        %v703 = vunpack.c.l.b16 %v447
        %v704 = vunpack.c.l.b16 %v448
        %v705 = vunpack.c.l.b16 %v449
        %v706 = vunpack.c.l.b16 %v450
        %v707 = vunpack.c.l.b16 %v451
        %v708 = vunpack.c.l.b16 %v452
        %v709 = vunpack.c.l.b16 %v453
        %v710 = vunpack.c.l.b16 %v454
        %v711 = vunpack.c.l.b16 %v455
        %v712 = vunpack.c.l.b16 %v456
        %v713 = vunpack.c.l.b16 %v457
        %v714 = vunpack.c.l.b16 %v458
        %v715 = vunpack.c.l.b16 %v459
        %v716 = vunpack.c.l.b16 %v460
        %v717 = vunpack.c.l.b16 %v461
        %v718 = vunpack.c.l.b16 %v462
        %v719 = vunpack.c.l.b16 %v463
        %v720 = vunpack.c.l.b16 %v464
        %v721 = vunpack.c.l.b16 %v465
        %v722 = vunpack.c.l.b16 %v466
        %v723 = vunpack.c.l.b16 %v467
        %v724 = vunpack.c.l.b16 %v468
        %v725 = vunpack.c.l.b16 %v469
        %v726 = vunpack.c.l.b16 %v470
        %v727 = vunpack.c.l.b16 %v471
        %v728 = vunpack.c.l.b16 %v472
        %v729 = vunpack.c.l.b16 %v473
        %v730 = vunpack.c.l.b16 %v474
        %v731 = vunpack.c.l.b16 %v475
        %v732 = vunpack.c.l.b16 %v476
        %v733 = vunpack.c.l.b16 %v477
        %v734 = vunpack.c.l.b16 %v478
        %v735 = vunpack.c.l.b16 %v479
        %v736 = vunpack.c.l.b16 %v480
        %v737 = vunpack.c.l.b16 %v481
        %v738 = vunpack.c.l.b16 %v482
        %v739 = vunpack.c.l.b16 %v483
        %v740 = vunpack.c.l.b16 %v484
        %v741 = vunpack.c.l.b16 %v485
        %v742 = vunpack.c.l.b16 %v486
        %v743 = vunpack.c.l.b16 %v487
        %v744 = vunpack.c.l.b16 %v488
        %v745 = vunpack.c.l.b16 %v489
        %v746 = vunpack.c.l.b16 %v490
        %v747 = vunpack.c.l.b16 %v491
        %v748 = vunpack.c.l.b16 %v492
        %v749 = vunpack.c.l.b16 %v493
        %v750 = vunpack.c.l.b16 %v494
        %v751 = vunpack.c.l.b16 %v495
        %v752 = vunpack.c.l.b16 %v496
        %v753 = vunpack.c.l.b16 %v497
        %v754 = vunpack.c.l.b16 %v498
        %v755 = vunpack.c.l.b16 %v499
        %v756 = vunpack.c.l.b16 %v500
        %v757 = vunpack.c.l.b16 %v501
        %v758 = vunpack.c.l.b16 %v502
        %v759 = vunpack.c.l.b16 %v503
        %v760 = vunpack.c.l.b16 %v504
        %v761 = vunpack.c.l.b16 %v505
        %v762 = vunpack.c.l.b16 %v506
        %v763 = vunpack.c.l.b16 %v507
        %v764 = vunpack.c.l.b16 %v508
        %v765 = vunpack.c.l.b16 %v509
        %v766 = vunpack.c.l.b16 %v510
        %v767 = vunpack.c.l.b16 %v511
        %v768 = vunpack.c.l.b16 %v512
        %v769 = vunpack.c.l.b16 %v513
        %v770 = vunpack.c.l.b16 %v514
        %v771 = vunpack.c.l.b16 %v515
        %v772 = vunpack.c.l.b16 %v516
        %v773 = vunpack.c.l.b16 %v517
        %v774 = vunpack.c.l.b16 %v518
        %v775 = vunpack.c.l.b16 %v519
        %v776 = vunpack.c.l.b16 %v520
        %v777 = vunpack.c.l.b16 %v521
        %v778 = vunpack.c.l.b16 %v522
        %v779 = vunpack.c.l.b16 %v523
        %v780 = vunpack.c.l.b16 %v524
        %v781 = vunpack.c.l.b16 %v525
        %v782 = vunpack.c.l.b16 %v526
        %v783 = vpack.c.b16 %v656, %v655
        %v784 = vpack.c.b16 %v658, %v657
        %v785 = vpack.c.b16 %v660, %v659
        %v786 = vpack.c.b16 %v662, %v661
        %v787 = vpack.c.b16 %v664, %v663
        %v788 = vpack.c.b16 %v666, %v665
        %v789 = vpack.c.b16 %v668, %v667
        %v790 = vpack.c.b16 %v670, %v669
        %v791 = vpack.c.b16 %v672, %v671
        %v792 = vpack.c.b16 %v674, %v673
        %v793 = vpack.c.b16 %v676, %v675
        %v794 = vpack.c.b16 %v678, %v677
        %v795 = vpack.c.b16 %v680, %v679
        %v796 = vpack.c.b16 %v682, %v681
        %v797 = vpack.c.b16 %v684, %v683
        %v798 = vpack.c.b16 %v686, %v685
        %v799 = vpack.c.b16 %v688, %v687
        %v800 = vpack.c.b16 %v690, %v689
        %v801 = vpack.c.b16 %v692, %v691
        %v802 = vpack.c.b16 %v694, %v693
        %v803 = vpack.c.b16 %v696, %v695
        %v804 = vpack.c.b16 %v698, %v697
        %v805 = vpack.c.b16 %v700, %v699
        %v806 = vpack.c.b16 %v702, %v701
        %v807 = vpack.c.b16 %v704, %v703
        %v808 = vpack.c.b16 %v706, %v705
        %v809 = vpack.c.b16 %v708, %v707
        %v810 = vpack.c.b16 %v710, %v709
        %v811 = vpack.c.b16 %v712, %v711
        %v812 = vpack.c.b16 %v714, %v713
        %v813 = vpack.c.b16 %v716, %v715
        %v814 = vpack.c.b16 %v718, %v717
        %v815 = vpack.c.b16 %v720, %v719
        %v816 = vpack.c.b16 %v722, %v721
        %v817 = vpack.c.b16 %v724, %v723
        %v818 = vpack.c.b16 %v726, %v725
        %v819 = vpack.c.b16 %v728, %v727
        %v820 = vpack.c.b16 %v730, %v729
        %v821 = vpack.c.b16 %v732, %v731
        %v822 = vpack.c.b16 %v734, %v733
        %v823 = vpack.c.b16 %v736, %v735
        %v824 = vpack.c.b16 %v738, %v737
        %v825 = vpack.c.b16 %v740, %v739
        %v826 = vpack.c.b16 %v742, %v741
        %v827 = vpack.c.b16 %v744, %v743
        %v828 = vpack.c.b16 %v746, %v745
        %v829 = vpack.c.b16 %v748, %v747
        %v830 = vpack.c.b16 %v750, %v749
        %v831 = vpack.c.b16 %v752, %v751
        %v832 = vpack.c.b16 %v754, %v753
        %v833 = vpack.c.b16 %v756, %v755
        %v834 = vpack.c.b16 %v758, %v757
        %v835 = vpack.c.b16 %v760, %v759
        %v836 = vpack.c.b16 %v762, %v761
        %v837 = vpack.c.b16 %v764, %v763
        %v838 = vpack.c.b16 %v766, %v765
        %v839 = vpack.c.b16 %v768, %v767
        %v840 = vpack.c.b16 %v770, %v769
        %v841 = vpack.c.b16 %v772, %v771
        %v842 = vpack.c.b16 %v774, %v773
        %v843 = vpack.c.b16 %v776, %v775
        %v844 = vpack.c.b16 %v778, %v777
        %v845 = vpack.c.b16 %v780, %v779
        %v846 = vpack.c.b16 %v782, %v781
        %911 = vmatpush.bf16.msra.mxu0 %v790
        %912 = vmatpush.bf16.msra.mxu0 %v789
        %913 = vmatpush.bf16.msra.mxu0 %v788
        %914 = vmatpush.bf16.msra.mxu0 %v787
        %915 = vmatpush.bf16.msra.mxu0 %v786
        %916 = vmatpush.bf16.msra.mxu0 %v785
        %917 = vmatpush.bf16.msra.mxu0 %v784
        %918 = vmatpush.bf16.msra.mxu0 %v783
        %919 = vmatmul.bf16.gmra.mxu0 %v391
        %v920 = vpop.f32.mrf.mxu0
        %v921 = vadd.f32 0.0, %v920
        %v922 = vpop.f32.mrf.mxu0
        %v923 = vadd.f32 0.0, %v922
        %924 = vdwg.mxu0
        %925 = vmatpush.bf16.msra.mxu0 %v798
        %926 = vmatpush.bf16.msra.mxu0 %v797
        %927 = vmatpush.bf16.msra.mxu0 %v796
        %928 = vmatpush.bf16.msra.mxu0 %v795
        %929 = vmatpush.bf16.msra.mxu0 %v794
        %930 = vmatpush.bf16.msra.mxu0 %v793
        %931 = vmatpush.bf16.msra.mxu0 %v792
        %932 = vmatpush.bf16.msra.mxu0 %v791
        %933 = vmatmul.bf16.gmra.mxu0 %v392
        %v934 = vpop.f32.mrf.mxu0
        %v935 = vadd.f32 %v921, %v934
        %v936 = vpop.f32.mrf.mxu0
        %v937 = vadd.f32 %v923, %v936
        %938 = vdwg.mxu0
        %939 = vmatpush.bf16.msra.mxu0 %v806
        %940 = vmatpush.bf16.msra.mxu0 %v805
        %941 = vmatpush.bf16.msra.mxu0 %v804
        %942 = vmatpush.bf16.msra.mxu0 %v803
        %943 = vmatpush.bf16.msra.mxu0 %v802
        %944 = vmatpush.bf16.msra.mxu0 %v801
        %945 = vmatpush.bf16.msra.mxu0 %v800
        %946 = vmatpush.bf16.msra.mxu0 %v799
        %947 = vmatmul.bf16.gmra.mxu0 %v393
        %v948 = vpop.f32.mrf.mxu0
        %v949 = vadd.f32 %v935, %v948
        %v950 = vpop.f32.mrf.mxu0
        %v951 = vadd.f32 %v937, %v950
        %952 = vdwg.mxu0
        %953 = vmatpush.bf16.msra.mxu0 %v814
        %954 = vmatpush.bf16.msra.mxu0 %v813
        %955 = vmatpush.bf16.msra.mxu0 %v812
        %956 = vmatpush.bf16.msra.mxu0 %v811
        %957 = vmatpush.bf16.msra.mxu0 %v810
        %958 = vmatpush.bf16.msra.mxu0 %v809
        %959 = vmatpush.bf16.msra.mxu0 %v808
        %960 = vmatpush.bf16.msra.mxu0 %v807
        %961 = vmatmul.bf16.gmra.mxu0 %v394
        %v962 = vpop.f32.mrf.mxu0
        %v963 = vadd.f32 %v949, %v962
        %v964 = vpop.f32.mrf.mxu0
        %v965 = vadd.f32 %v951, %v964
        %966 = vdwg.mxu0
        %967 = vmatpush.bf16.msra.mxu0 %v822
        %968 = vmatpush.bf16.msra.mxu0 %v821
        %969 = vmatpush.bf16.msra.mxu0 %v820
        %970 = vmatpush.bf16.msra.mxu0 %v819
        %971 = vmatpush.bf16.msra.mxu0 %v818
        %972 = vmatpush.bf16.msra.mxu0 %v817
        %973 = vmatpush.bf16.msra.mxu0 %v816
        %974 = vmatpush.bf16.msra.mxu0 %v815
        %975 = vmatmul.bf16.gmra.mxu0 %v395
        %v976 = vpop.f32.mrf.mxu0
        %v977 = vadd.f32 %v963, %v976
        %v978 = vpop.f32.mrf.mxu0
        %v979 = vadd.f32 %v965, %v978
        %980 = vdwg.mxu0
        %981 = vmatpush.bf16.msra.mxu0 %v830
        %982 = vmatpush.bf16.msra.mxu0 %v829
        %983 = vmatpush.bf16.msra.mxu0 %v828
        %984 = vmatpush.bf16.msra.mxu0 %v827
        %985 = vmatpush.bf16.msra.mxu0 %v826
        %986 = vmatpush.bf16.msra.mxu0 %v825
        %987 = vmatpush.bf16.msra.mxu0 %v824
        %988 = vmatpush.bf16.msra.mxu0 %v823
        %989 = vmatmul.bf16.gmra.mxu0 %v396
        %v990 = vpop.f32.mrf.mxu0
        %v991 = vadd.f32 %v977, %v990
        %v992 = vpop.f32.mrf.mxu0
        %v993 = vadd.f32 %v979, %v992
        %994 = vdwg.mxu0
        %995 = vmatpush.bf16.msra.mxu0 %v838
        %996 = vmatpush.bf16.msra.mxu0 %v837
        %997 = vmatpush.bf16.msra.mxu0 %v836
        %998 = vmatpush.bf16.msra.mxu0 %v835
        %999 = vmatpush.bf16.msra.mxu0 %v834
        %1000 = vmatpush.bf16.msra.mxu0 %v833
        %1001 = vmatpush.bf16.msra.mxu0 %v832
        %1002 = vmatpush.bf16.msra.mxu0 %v831
        %1003 = vmatmul.bf16.gmra.mxu0 %v397
        %v1004 = vpop.f32.mrf.mxu0
        %v1005 = vadd.f32 %v991, %v1004
        %v1006 = vpop.f32.mrf.mxu0
        %v1007 = vadd.f32 %v993, %v1006
        %1008 = vdwg.mxu0
        %1009 = vmatpush.bf16.msra.mxu0 %v846
        %1010 = vmatpush.bf16.msra.mxu0 %v845
        %1011 = vmatpush.bf16.msra.mxu0 %v844
        %1012 = vmatpush.bf16.msra.mxu0 %v843
        %1013 = vmatpush.bf16.msra.mxu0 %v842
        %1014 = vmatpush.bf16.msra.mxu0 %v841
        %1015 = vmatpush.bf16.msra.mxu0 %v840
        %1016 = vmatpush.bf16.msra.mxu0 %v839
        %1017 = vmatmul.bf16.gmra.mxu0 %v398
        %v1018 = vpop.f32.mrf.mxu0
        %v1019 = vadd.f32 %v1005, %v1018
        %v1020 = vpop.f32.mrf.mxu0
        %v1021 = vadd.f32 %v1007, %v1020
        %1022 = vdwg.mxu0
        %v1023 = vadd.f32 %v373, %v1019
        %v1024 = vadd.f32 %v374, %v1021
        %vm1025 = vcmask 261120
        %1026 = vst.msk [vmem:[#allocation2] sm:$0xff] %vm1025, %v1023
        %1027 = vst.msk [vmem:[#allocation2 + $0x8] sm:$0xff] %vm1025, %v1024
        %p1028 = scmp.eq.s32.totalorder %s22, 1
        // Predicated region
        $region72: #{decoder_only_transformer.29} parent=62 // pred_check
          %p1029 = pneg %p1028
        $region73: #{decoder_only_transformer.29} parent=62 // pred_check_branch
          %1031 = sbr.rel (%p1029) target = $region75
        $region74: #{decoder_only_transformer.29} parent=62 // pred_region
          %v1032 = vld [vmem:[#allocation2] sm:$0xff]
          %v1033 = vld [vmem:[#allocation2 + $0x8] sm:$0xff]
          %v1034 = vld [vmem:[%s2] sm:$0x1]
          %v1036 = vperm.slane %v1034, 0
          %v1038 = vadd.f32 %v1032, %v1036
          %v1039 = vadd.f32 %v1033, %v1036
          %v1040 = vld [vmem:[%s358] sm:$0xff]
          %v1041 = vld [vmem:[%s358 + $0x8] sm:$0xff]
          %v1042 = vadd.f32 %v1038, %v1040
          %v1043 = vadd.f32 %v1039, %v1041
          %v1044 = vsel %vm1025, %v1042, 0.0
          %1045 = vadd.xlane.f32.xlu0 %v1044
          %v1046 = vpop.xlane.xlu0 %1045
          %v1047 = vsel %vm1025, %v1043, 0.0
          %1048 = vadd.xlane.f32.xlu0 %v1047
          %v1049 = vpop.xlane.xlu0 %1048
          %v1050 = vrcp.pop 32.0
          %v1051 = vmul.f32 32.0, %v1050
          %v1052 = vsub.f32 1.0, %v1051
          %v1053 = vmul.f32 %v1050, %v1052
          %v1054 = vadd.f32 %v1050, %v1053
          %vm1055 = vweird.f32 %v1050
          %v1056 = vsel %vm1055, %v1050, %v1054
          %v1057 = vmul.f32 %v1046, %v1056
          %v1058 = vmul.f32 %v1049, %v1056
          %v1059 = vsub.f32 %v1042, %v1057
          %v1060 = vsub.f32 %v1043, %v1058
          %v1061 = vmul.f32 %v1059, %v1059
          %v1062 = vmul.f32 %v1060, %v1060
          %v1063 = vsel %vm1025, %v1061, 0.0
          %1064 = vadd.xlane.f32.xlu0 %v1063
          %v1065 = vpop.xlane.xlu0 %1064
          %v1066 = vsel %vm1025, %v1062, 0.0
          %1067 = vadd.xlane.f32.xlu0 %v1066
          %v1068 = vpop.xlane.xlu0 %1067
          %v1069 = vmul.f32 %v1065, %v1056
          %v1070 = vmul.f32 %v1068, %v1056
          %v1071 = vadd.f32 %v1069, 1e-05
          %v1072 = vadd.f32 %v1070, 1e-05
          %v1073 = vrsqrt.pop %v1071
          %v1074 = vmul.f32 %v1073, %v1071
          %v1075 = vmul.f32 %v1074, %v1073
          %v1076 = vmul.f32 0.5, %v1075
          %v1077 = vsub.f32 1.5, %v1076
          %v1078 = vmul.f32 %v1073, %v1077
          %vm1079 = vweird.f32 %v1071
          %vm1080 = vweird.f32 %v1073
          %vm1081 = vmor %vm1079, %vm1080
          %v1082 = vsel %vm1081, %v1073, %v1078
          %v1083 = vrsqrt.pop %v1072
          %v1084 = vmul.f32 %v1083, %v1072
          %v1085 = vmul.f32 %v1084, %v1083
          %v1086 = vmul.f32 0.5, %v1085
          %v1087 = vsub.f32 1.5, %v1086
          %v1088 = vmul.f32 %v1083, %v1087
          %vm1089 = vweird.f32 %v1072
          %vm1090 = vweird.f32 %v1083
          %vm1091 = vmor %vm1089, %vm1090
          %v1092 = vsel %vm1091, %v1083, %v1088
          %v1093 = vmul.f32 %v1059, %v1082
          %v1094 = vmul.f32 %v1060, %v1092
          %v1095 = vld [vmem:[%s4] sm:$0x1]
          %v1097 = vperm.slane %v1095, 0
          %v1099 = vmul.f32 %v1093, %v1097
          %v1100 = vmul.f32 %v1094, %v1097
          %v1101 = vld [vmem:[%s5] sm:$0x1]
          %v1103 = vperm.slane %v1101, 0
          %v1105 = vadd.f32 %v1099, %v1103
          %v1106 = vadd.f32 %v1100, %v1103
          %1107 = vst.msk [vmem:[%s364] sm:$0xff] %vm1025, %v1105
          %1108 = vst.msk [vmem:[%s364 + $0x8] sm:$0xff] %vm1025, %v1106
        $region75: #{decoder_only_transformer.29} parent=62 // pred_fallthru
          _
        %s1109 = smul.u32 2, %s21
        %p1110 = scmp.lt.s32.totalorder %s1109, 1
        %s1111 = scalar_select %p1110, %s1109, 1
        %s1112 = smul.addr %s1111, 8
        %s1113 = scalar_lea.vmem %s6, %s1112
        // Predicated region
        $region76: #{decoder_only_transformer.29} parent=62 // pred_check
          %p1114 = pneg %p190
        $region77: #{decoder_only_transformer.29} parent=62 // pred_check_branch
          %1116 = sbr.rel (%p1114) target = $region79
        $region78: #{decoder_only_transformer.29} parent=62 // pred_region
          %s1117 = smul.u32 2, %s21
        $region79: #{decoder_only_transformer.29} parent=62 // pred_fallthru
          _
        // Predicated region
        $region80: #{decoder_only_transformer.29} parent=62 // pred_check
          %p1118 = pneg %p190
        $region81: #{decoder_only_transformer.29} parent=62 // pred_check_branch
          %1120 = sbr.rel (%p1118) target = $region83
        $region82: #{decoder_only_transformer.29} parent=62 // pred_region
          %s1121 = smul.u32 2, %s21
          %p1122 = scmp.lt.s32.totalorder %s1121, 1
          %s1123 = scalar_select %p1122, %s1121, 1
          %s1124 = smul.addr %s1123, 8
          %s1125 = scalar_lea.vmem %s6, %s1124
        $region83: #{decoder_only_transformer.29} parent=62 // pred_fallthru
          _
      $region63: #{decoder_only_transformer.29} parent=5 // pred_fallthru
        _
      %p1126 = scmp.le.s32.totalorder 2, %s12
      // Predicated region
      $region84: #{decoder_only_transformer.29} parent=5 // pred_check
        %p1127 = pneg %p1126
      $region85: #{decoder_only_transformer.29} parent=5 // pred_check_branch
        %1129 = sbr.rel (%p1127) target = $region87
      $region86: #{decoder_only_transformer.29} parent=5 // pred_region
        %s1130 = ssub.s32 %s12, 2
      $region87: #{decoder_only_transformer.29} parent=5 // pred_fallthru
        _
    $region6: #{decoder_only_transformer.29} parent=1 // loop_footer
      %s16 = sadd.s32 1, %s12
    $region7: #{decoder_only_transformer.29} parent=1 // loop_footer_branch
      %11 = sbr.rel target = $region3
    $region8: #{decoder_only_transformer.29} parent=1 // loop_exit
      _

// kernel: decoder_only_transformer.39
$region0: #{decoder_only_transformer.39}
  #allocation0 [shape = 'u32[]', space=smem, size = 0x4, offset = 0x4, fixed_abs, tag = 'smem constant byte address 0x4 - core index']
  #allocation1 [shape = 'u32[72,128]{1,0:T(1,128)}', space=vmem, size = 0x9000, scoped, tag = 'internal scratch']
  #allocation2 [shape = 'f32[16,128]{1,0:T(8,128)}', space=vmem, size = 0x2000, scoped, tag = 'scratch operand']
  %s0 = inlined_call_operand.vmem [shape: f32[16,32], index: 0, kind: input, shape index: {}]
  %s1 = inlined_call_operand.vmem [shape: bf16[32,128], index: 1, kind: input, shape index: {}]
  %s2 = inlined_call_operand.vmem [shape: f32[1,128], index: 2, kind: input, shape index: {}]
  %s3 = inlined_call_operand.hbm [shape: f32[16,128], index: 3, kind: output, shape index: {}]
  %s4 = sld [smem:[#allocation0]]
  $region30: #{decoder_only_transformer.39} parent=0
    _
  %s6 = ssub.s32 1, %s4
  %s7 = scalar_select 0, %s6, %s4
  $region1: #{decoder_only_transformer.39} parent=0
    #allocation3 [shape = 'u8[8192]{0}', space=vmem, size = 0x2000, scoped, tag = 'output window, operand 0, single buffered']
    #allocation4 [shape = 's32[1]{0}', space=sflag, size = 0x4, scoped, tag = 'scoped memory for decoder_only_transformer.39']
    %8 = vsyncpa [#allocation4], 0
    // Predicated region
    $region2: #{decoder_only_transformer.39} parent=1 // pred_check
      _
    $region3: #{decoder_only_transformer.39} parent=1 // pred_check_branch
      %10 = sbr.rel (0) target = $region5
    $region4: #{decoder_only_transformer.39} parent=1 // pred_region
      _
    $region5: #{decoder_only_transformer.39} parent=1 // pred_fallthru
      _
    // Predicated region
    $region6: #{decoder_only_transformer.39} parent=1 // pred_check
      _
    $region7: #{decoder_only_transformer.39} parent=1 // pred_check_branch
      %12 = sbr.rel (0) target = $region9
    $region8: #{decoder_only_transformer.39} parent=1 // pred_region
      _
    $region9: #{decoder_only_transformer.39} parent=1 // pred_fallthru
      _
    // Predicated region
    $region10: #{decoder_only_transformer.39} parent=1 // pred_check
      _
    $region11: #{decoder_only_transformer.39} parent=1 // pred_check_branch
      %14 = sbr.rel (0) target = $region13
    $region12: #{decoder_only_transformer.39} parent=1 // pred_region
      _
    $region13: #{decoder_only_transformer.39} parent=1 // pred_fallthru
      _
    %p16 = scmp.eq.s32.totalorder 0, 0
    // Predicated region
    $region14: #{decoder_only_transformer.39} parent=1 // pred_check
      %p17 = pneg %p16
    $region15: #{decoder_only_transformer.39} parent=1 // pred_check_branch
      %19 = sbr.rel (%p17) target = $region17
    $region16: #{decoder_only_transformer.39} parent=1 // pred_region
      %20 = vst [vmem:[#allocation2] sm:$0xff] 0.0
      %21 = vst [vmem:[#allocation2 + $0x8] sm:$0xff] 0.0
    $region17: #{decoder_only_transformer.39} parent=1 // pred_fallthru
      _
    %v22 = vld [vmem:[#allocation2] sm:$0xff]
    %v23 = vld [vmem:[#allocation2 + $0x8] sm:$0xff]
    %v24 = vld [vmem:[%s0] sm:$0xff]
    %v25 = vld [vmem:[%s0 + $0x8] sm:$0xff]
    %v26 = vpack.c.bf16 %v25, %v24
    %v27 = vld [vmem:[%s1] sm:$0xf]
    %v28 = vld [vmem:[%s1 + $0x4] sm:$0xf]
    %v29 = vld [vmem:[%s1 + $0x8] sm:$0xf]
    %v30 = vld [vmem:[%s1 + $0xc] sm:$0xf]
    %v35 = vunpack.c.l.b16 %v27
    %v36 = vunpack.c.l.b16 %v28
    %v37 = vunpack.c.l.b16 %v29
    %v38 = vunpack.c.l.b16 %v30
    %v39 = vpack.c.b16 %v36, %v35
    %v40 = vpack.c.b16 %v38, %v37
    %vm43 = vcmask 261120
    %v45 = vsel %vm43, %v26, 0
    %47 = vmatpush.bf16.msra.mxu0 0
    %48 = vmatpush.bf16.msra.mxu0 0
    %49 = vmatpush.bf16.msra.mxu0 0
    %50 = vmatpush.bf16.msra.mxu0 0
    %51 = vmatpush.bf16.msra.mxu0 0
    %52 = vmatpush.bf16.msra.mxu0 0
    %53 = vmatpush.bf16.msra.mxu0 %v40
    %54 = vmatpush.bf16.msra.mxu0 %v39
    %55 = vmatmul.bf16.gmra.mxu0 %v45
    %v56 = vpop.f32.mrf.mxu0
    %v57 = vadd.f32 0.0, %v56
    %v58 = vpop.f32.mrf.mxu0
    %v59 = vadd.f32 0.0, %v58
    %60 = vdwg.mxu0
    %v61 = vadd.f32 %v22, %v57
    %v62 = vadd.f32 %v23, %v59
    %63 = vst [vmem:[#allocation2] sm:$0xff] %v61
    %64 = vst [vmem:[#allocation2 + $0x8] sm:$0xff] %v62
    // Predicated region
    $region18: #{decoder_only_transformer.39} parent=1 // pred_check
      %p65 = pneg %p16
    $region19: #{decoder_only_transformer.39} parent=1 // pred_check_branch
      %67 = sbr.rel (%p65) target = $region21
    $region20: #{decoder_only_transformer.39} parent=1 // pred_region
      %v68 = vld [vmem:[#allocation2] sm:$0xff]
      %v69 = vld [vmem:[#allocation2 + $0x8] sm:$0xff]
      %v70 = vld [vmem:[%s2] sm:$0x1]
      %v72 = vperm.slane %v70, 0
      %v74 = vadd.f32 %v68, %v72
      %v75 = vadd.f32 %v69, %v72
      %76 = vst [vmem:[#allocation3] sm:$0xff] %v74
      %77 = vst [vmem:[#allocation3 + $0x8] sm:$0xff] %v75
    $region21: #{decoder_only_transformer.39} parent=1 // pred_fallthru
      _
    // Predicated region
    $region22: #{decoder_only_transformer.39} parent=1 // pred_check
      _
    $region23: #{decoder_only_transformer.39} parent=1 // pred_check_branch
      %79 = sbr.rel (0) target = $region25
    $region24: #{decoder_only_transformer.39} parent=1 // pred_region
      %81 = vsyncadd [#allocation4], 0
      %s82 = sshll.u32 [#allocation3], 4
      %s83 = int_to_ptr.vmem [resolvable:$true] %s82
      %s84 = sshll.u32 %s3, 4
      %s85 = int_to_ptr.hbm [resolvable:$true] %s84
      %90 = dma.vmem_to_hbm [thread:$0]  %s83, 256, %s85, [#allocation4], 128, 128, 8
    $region25: #{decoder_only_transformer.39} parent=1 // pred_fallthru
      _
    // Predicated region
    $region26: #{decoder_only_transformer.39} parent=1 // pred_check
      _
    $region27: #{decoder_only_transformer.39} parent=1 // pred_check_branch
      %92 = sbr.rel (0) target = $region29
    $region28: #{decoder_only_transformer.39} parent=1 // pred_region
      %94 = dma.done [#allocation4], 256
    $region29: #{decoder_only_transformer.39} parent=1 // pred_fallthru
      _
    %95 = vsyncpa [#allocation4], 1

</llo_original>
